<compile_context>
chip_gen: v6e
topology: v6e:2x2x1
jax: 0.10.0
libtpu: 0.0.40
codegen_flags: <defaults>
</compile_context>

<pallas_src>
import math

import jax
import jax.numpy as jnp
from jax import lax
from jax.experimental import pallas as pl
from jax.experimental.pallas import tpu as pltpu

_LN_EPS = 1e-6


def _round_up(x, n):
    return (x + n - 1) // n * n


def _vmem_cap_bytes():
    """Chip-aware VMEM ceiling (feedback: don't exceed v7x's 64 MiB / leave headroom)."""
    try:
        return int(0.9 * pltpu.get_tpu_info().vmem_capacity_bytes)
    except Exception:
        return int(0.9 * (64 << 20))   # conservative (v7x per-TC) fallback


def _layernorm_f32(x, g, b):
    """torch-style LayerNorm: a_2 * (x - mean) / (std + eps) + b_2, unbiased std."""
    d = x.shape[-1]
    mean = jnp.mean(x, axis=-1, keepdims=True)
    xm = x - mean
    var = jnp.sum(xm * xm, axis=-1, keepdims=True) * (1.0 / (d - 1))
    inv = pl.reciprocal(jnp.sqrt(var) + _LN_EPS, approx=True)   # EUP reciprocal-multiply
    return g.astype(jnp.float32) * (xm * inv) + b.astype(jnp.float32)


# --------------------------------------------------------------------------------------
# Kernels (row-tiled, resident weights)
# --------------------------------------------------------------------------------------

def _ln_qkv_kernel(x_ref, g_ref, b_ref, wqkv_ref, bqkv_ref, o_ref):
    # o = LN1(x) @ Wqkv + bqkv   -- MXU fed in the weight dtype, f32 accumulate/epilogue.
    x = x_ref[...].astype(jnp.float32)
    xn = _layernorm_f32(x, g_ref[...], b_ref[...])
    qkv = jnp.dot(xn.astype(wqkv_ref.dtype), wqkv_ref[...],
                  preferred_element_type=jnp.float32)
    qkv = qkv + bqkv_ref[...].astype(jnp.float32)
    o_ref[...] = qkv.astype(o_ref.dtype)


def _attn_out_residual_kernel(ctx_ref, x_ref, wo_ref, bo_ref, o_ref):
    # o = x + concat(heads) @ Wo + bo   (ctx already in concat-head layout, native dtype).
    y = jnp.dot(ctx_ref[...].astype(wo_ref.dtype), wo_ref[...],
                preferred_element_type=jnp.float32)
    y = y + bo_ref[...].astype(jnp.float32) + x_ref[...].astype(jnp.float32)
    o_ref[...] = y.astype(o_ref.dtype)


def _sublayer_ffn_kernel(x_ref, g_ref, b_ref, w1_ref, b1_ref, w2_ref, b2_ref, o_ref):
    # o = x + FFN(LN2(x));  FFN(z) = relu(z @ W1 + b1) @ W2 + b2.
    x = x_ref[...].astype(jnp.float32)
    xn = _layernorm_f32(x, g_ref[...], b_ref[...])
    h = jnp.dot(xn.astype(w1_ref.dtype), w1_ref[...],
                preferred_element_type=jnp.float32)
    h = jnp.maximum(h + b1_ref[...].astype(jnp.float32), 0.0)
    y = jnp.dot(h.astype(w2_ref.dtype), w2_ref[...],
                preferred_element_type=jnp.float32)
    y = y + b2_ref[...].astype(jnp.float32) + x
    o_ref[...] = y.astype(o_ref.dtype)


# --------------------------------------------------------------------------------------
# pallas_call wrappers
# --------------------------------------------------------------------------------------

def _row_call(kernel, row_inputs, resident_inputs, out_cols, out_dtype, tm_eff, flops,
              extra_vmem_bytes=0, transcendentals=0):
    """Row-tiled call over already-padded [m_pad, cols] row inputs; resident inputs stay
    whole in VMEM (constant index map => fetched once)."""
    m_pad = row_inputs[0].shape[0]
    assert m_pad % tm_eff == 0
    grid = (m_pad // tm_eff,)

    in_specs = (
        [pl.BlockSpec((tm_eff, a.shape[1]), lambda i: (i, 0)) for a in row_inputs]
        + [pl.BlockSpec(a.shape, lambda i: (0, 0)) for a in resident_inputs]
    )
    out_specs = pl.BlockSpec((tm_eff, out_cols), lambda i: (i, 0))

    out_itemsize = jnp.dtype(out_dtype).itemsize
    tile_bytes = sum(2 * tm_eff * a.shape[1] * a.dtype.itemsize for a in row_inputs)
    tile_bytes += 2 * tm_eff * out_cols * out_itemsize
    resident_bytes = sum(2 * a.size * a.dtype.itemsize for a in resident_inputs)
    vmem_limit = int(min(max(tile_bytes + resident_bytes + extra_vmem_bytes + (2 << 20),
                             16 << 20),
                         _vmem_cap_bytes()))

    bytes_accessed = int(
        sum(a.size * a.dtype.itemsize for a in row_inputs)
        + sum(a.size * a.dtype.itemsize for a in resident_inputs)
        + m_pad * out_cols * out_itemsize
    )

    return pl.pallas_call(
        kernel,
        out_shape=jax.ShapeDtypeStruct((m_pad, out_cols), out_dtype),
        grid_spec=pltpu.PrefetchScalarGridSpec(
            num_scalar_prefetch=0,
            grid=grid,
            in_specs=in_specs,
            out_specs=out_specs,
        ),
        compiler_params=pltpu.CompilerParams(
            dimension_semantics=("parallel",),
            vmem_limit_bytes=vmem_limit,
        ),
        cost_estimate=pl.CostEstimate(flops=int(flops),
                                      transcendentals=int(transcendentals),
                                      bytes_accessed=bytes_accessed),
    )(*row_inputs, *resident_inputs)


def _attention_core(qkv, mask, *, B, S, H, dk, m_pad, p_dtype):
    """Multi-head scaled-dot-product attention directly on the fused qkv buffer.

    qkv: (m_pad, 3D) in compute dtype, rows are (batch, pos) flattened; mask: (B, S).
    Returns ctx (m_pad, D) in concat-head layout (compute dtype) and p (B, H, S, S)."""
    D = H * dk
    # Pack heads so the lane dim of each Q/K/V block is a multiple of 128 (feedback: avoid
    # half-empty vregs with dk=64 and amortize per-step grid overhead).
    hpb = 1
    if dk < 128 and 128 % dk == 0 and H % (128 // dk) == 0:
        hpb = 128 // dk
    hbw = hpb * dk
    assert hbw % 128 == 0, "head width (heads_per_block * d_k) must tile to 128 lanes"
    assert S % 8 == 0, "sequence length must be a multiple of 8 (sublane)"
    G = H // hpb
    k_off = D // hbw
    v_off = 2 * D // hbw
    inv_sqrt_dk = 1.0 / math.sqrt(dk)

    mask3 = mask.reshape(B, 1, S).astype(jnp.float32)

    def kernel(q_ref, k_ref, v_ref, m_ref, ctx_ref, p_ref):
        msk = m_ref[0]                                     # (1, S) -> broadcast over query rows
        for h in range(hpb):                               # unrolled at trace time
            lo = h * dk
            q = q_ref[:, lo:lo + dk]                       # native dtype into the MXU
            k = k_ref[:, lo:lo + dk]
            v = v_ref[:, lo:lo + dk]
            # q @ k^T without materializing a transpose; f32 accumulate, scale in f32.
            s = lax.dot_general(q, k, (((1,), (1,)), ((), ())),
                                preferred_element_type=jnp.float32) * inv_sqrt_dk
            s = jnp.where(msk == 0.0, -1e9, s)             # masked_fill(mask == 0, -1e9)
            smax = jnp.max(s, axis=-1, keepdims=True)
            e = jnp.exp(s - smax)
            p = e * pl.reciprocal(jnp.sum(e, axis=-1, keepdims=True), approx=True)
            ctx = jnp.dot(p.astype(v.dtype), v, preferred_element_type=jnp.float32)
            ctx_ref[:, lo:lo + dk] = ctx.astype(ctx_ref.dtype)   # concat-head, lane-dense block
            p_ref[0, h] = p.astype(p_ref.dtype)

    # VMEM budget derived from S (feedback: don't use a fixed 16 MiB).
    blk_bytes = S * hbw * qkv.dtype.itemsize
    p_bytes = hpb * S * S * jnp.dtype(p_dtype).itemsize
    vmem_needed = 2 * (4 * blk_bytes + p_bytes) + 6 * hpb * S * S * 4 + (2 << 20)
    vmem_limit = int(min(max(vmem_needed, 8 << 20), _vmem_cap_bytes()))
    # TODO(synk): for very long S, add a kv grid axis (flash-style online softmax) so the
    # (S, S) scores block stays bounded; not needed at these shapes.

    flops = 4 * B * H * S * S * dk
    bytes_accessed = int(4 * B * S * D * qkv.dtype.itemsize + B * S * 4
                         + B * H * S * S * jnp.dtype(p_dtype).itemsize)

    ctx, p = pl.pallas_call(
        kernel,
        out_shape=(jax.ShapeDtypeStruct((m_pad, D), qkv.dtype),
                   jax.ShapeDtypeStruct((B, H, S, S), p_dtype)),
        grid_spec=pltpu.PrefetchScalarGridSpec(
            num_scalar_prefetch=0,
            grid=(B, G),
            in_specs=[
                pl.BlockSpec((S, hbw), lambda b, g: (b, g)),           # Q columns
                pl.BlockSpec((S, hbw), lambda b, g: (b, g + k_off)),   # K columns
                pl.BlockSpec((S, hbw), lambda b, g: (b, g + v_off)),   # V columns
                pl.BlockSpec((1, 1, S), lambda b, g: (b, 0, 0)),       # mask row b
            ],
            out_specs=[
                pl.BlockSpec((S, hbw), lambda b, g: (b, g)),           # ctx (concat-head layout)
                pl.BlockSpec((1, hpb, S, S), lambda b, g: (b, g, 0, 0)),
            ],
        ),
        compiler_params=pltpu.CompilerParams(
            dimension_semantics=("parallel", "parallel"),
            vmem_limit_bytes=vmem_limit,
        ),
        cost_estimate=pl.CostEstimate(flops=int(flops),
                                      transcendentals=int(B * H * S * S),
                                      bytes_accessed=bytes_accessed),
    )(qkv, qkv, qkv, mask3)
    return ctx, p


# --------------------------------------------------------------------------------------
# Parameter prep (done once, outside the per-call forward) + forward
# --------------------------------------------------------------------------------------

def prepare_params(params, *, weight_dtype=jnp.bfloat16):
    """Concatenate Wq/Wk/Wv once and cast the heavy matrices to the MXU compute dtype
    (feedback: bf16 weights -> ~3-8x MXU throughput, half the resident VMEM)."""
    D = params["wq"].shape[0]
    dff = params["w1"].shape[1]
    wqkv = jnp.concatenate([params["wq"], params["wk"], params["wv"]], axis=1)
    bqkv = jnp.concatenate([params["bq"], params["bk"], params["bv"]]).reshape(1, 3 * D)
    f32 = jnp.float32
    return dict(
        ln1_g=params["ln1_g"].reshape(1, D).astype(f32),
        ln1_b=params["ln1_b"].reshape(1, D).astype(f32),
        wqkv=wqkv.astype(weight_dtype), bqkv=bqkv.astype(f32),
        wo=params["wo"].astype(weight_dtype), bo=params["bo"].reshape(1, D).astype(f32),
        ln2_g=params["ln2_g"].reshape(1, D).astype(f32),
        ln2_b=params["ln2_b"].reshape(1, D).astype(f32),
        w1=params["w1"].astype(weight_dtype), b1=params["b1"].reshape(1, dff).astype(f32),
        w2=params["w2"].astype(weight_dtype), b2=params["b2"].reshape(1, D).astype(f32),
    )


def encoder_layer_forward(x, mask, prepared, *, num_heads, tm=512):
    """EncoderLayer forward (eval mode). x: (B, S, D); mask: (B, S) with 1=keep, 0=mask.
    Returns (ret (B, S, D), attention_score (B, H, S, S))."""
    B, S, D = x.shape
    H = num_heads
    assert D % H == 0
    dk = D // H
    dff = prepared["w1"].shape[1]
    cd = prepared["wqkv"].dtype            # compute dtype for MXU inputs / intermediates

    # Row tiling: multiple of 8, capped at ceil(m/2) so the parallel axis has >= 2 tiles.
    m = B * S
    tm_req = max(8, (tm // 8) * 8)
    tm_eff = min(tm_req, _round_up(pl.cdiv(m, 2), 8))
    m_pad = _round_up(m, tm_eff)
    x2d = x.reshape(m, D)
    if m_pad != m:                          # single pad at layer entry (no per-call pads)
        x2d = jnp.pad(x2d, ((0, m_pad - m), (0, 0)))

    # ---- attention sublayer: x + MHA(LN1(x), mask) ------------------------------------
    qkv = _row_call(
        _ln_qkv_kernel,
        row_inputs=[x2d],
        resident_inputs=[prepared["ln1_g"], prepared["ln1_b"],
                         prepared["wqkv"], prepared["bqkv"]],
        out_cols=3 * D, out_dtype=cd, tm_eff=tm_eff,
        flops=2 * m_pad * D * (3 * D),
        extra_vmem_bytes=tm_eff * 3 * D * 4,
        transcendentals=m_pad,
    )

    ctx, attention_score = _attention_core(qkv, mask, B=B, S=S, H=H, dk=dk,
                                           m_pad=m_pad, p_dtype=x.dtype)

    x1 = _row_call(
        _attn_out_residual_kernel,
        row_inputs=[ctx, x2d],
        resident_inputs=[prepared["wo"], prepared["bo"]],
        out_cols=D, out_dtype=x.dtype, tm_eff=tm_eff,
        flops=2 * m_pad * D * D,
    )

    # ---- feed-forward sublayer: x1 + FFN(LN2(x1)) --------------------------------------
    ret2d = _row_call(
        _sublayer_ffn_kernel,
        row_inputs=[x1],
        resident_inputs=[prepared["ln2_g"], prepared["ln2_b"],
                         prepared["w1"], prepared["b1"],
                         prepared["w2"], prepared["b2"]],
        out_cols=D, out_dtype=x.dtype, tm_eff=tm_eff,
        flops=4 * m_pad * D * dff,
        extra_vmem_bytes=tm_eff * dff * 6,
        transcendentals=m_pad,
    )
    return ret2d[:m].reshape(B, S, D), attention_score


# --------------------------------------------------------------------------------------
# Pure-JAX reference + test
# --------------------------------------------------------------------------------------

def _reference(x, mask, params, num_heads):
    B, S, D = x.shape
    H = num_heads
    dk = D // H

    def ln(t, g, b):
        mean = t.mean(-1, keepdims=True)
        std = jnp.sqrt(((t - mean) ** 2).sum(-1, keepdims=True) / (D - 1))
        return g * (t - mean) / (std + _LN_EPS) + b

    xn = ln(x, params["ln1_g"], params["ln1_b"])
    q = xn @ params["wq"] + params["bq"]
    k = xn @ params["wk"] + params["bk"]
    v = xn @ params["wv"] + params["bv"]

    def heads(t):
        return t.reshape(B, S, H, dk).transpose(0, 2, 1, 3)

    qh, kh, vh = heads(q), heads(k), heads(v)
    scores = jnp.einsum("bhqd,bhkd->bhqk", qh, kh) / math.sqrt(dk)
    scores = jnp.where(mask.reshape(B, 1, 1, S) == 0, -1e9, scores)
    p = jax.nn.softmax(scores, axis=-1)
    ctx = jnp.einsum("bhqk,bhkd->bhqd", p, vh).transpose(0, 2, 1, 3).reshape(B, S, D)
    x1 = x + (ctx @ params["wo"] + params["bo"])
    x1n = ln(x1, params["ln2_g"], params["ln2_b"])
    ffn = jnp.maximum(x1n @ params["w1"] + params["b1"], 0.0) @ params["w2"] + params["b2"]
    return x1 + ffn, p


if __name__ == "__main__":
    # Small lane-friendly shapes (d_model multiple of 128; dk=64 -> 2 heads per 128-lane block).
    B, S, D, H, DFF = 2, 8, 256, 4, 1024

    key = jax.random.PRNGKey(0)
    keys = jax.random.split(key, 18)

    def uni(k, shape, fan_in):
        lim = 1.0 / math.sqrt(fan_in)
        return jax.random.uniform(k, shape, jnp.float32, -lim, lim)

    params = dict(
        ln1_g=1.0 + 0.1 * jax.random.normal(keys[0], (D,), jnp.float32),
        ln1_b=0.1 * jax.random.normal(keys[1], (D,), jnp.float32),
        wq=uni(keys[2], (D, D), D), bq=uni(keys[3], (D,), D),
        wk=uni(keys[4], (D, D), D), bk=uni(keys[5], (D,), D),
        wv=uni(keys[6], (D, D), D), bv=uni(keys[7], (D,), D),
        wo=uni(keys[8], (D, D), D), bo=uni(keys[9], (D,), D),
        ln2_g=1.0 + 0.1 * jax.random.normal(keys[10], (D,), jnp.float32),
        ln2_b=0.1 * jax.random.normal(keys[11], (D,), jnp.float32),
        w1=uni(keys[12], (D, DFF), D), b1=uni(keys[13], (DFF,), D),
        w2=uni(keys[14], (DFF, D), DFF), b2=uni(keys[15], (D,), DFF),
    )

    # Heavy weights go to bf16 for the MXU; concat/cast happens once, outside the jitted fwd.
    prepared = prepare_params(params, weight_dtype=jnp.bfloat16)
    # Reference uses the same bf16-quantized weights (in f32 math) so the check measures the
    # kernel path (layout / mask / fusion), not weight quantization.
    heavy = {"wq", "wk", "wv", "wo", "w1", "w2"}
    params_q = {k: (v.astype(jnp.bfloat16).astype(jnp.float32) if k in heavy else v)
                for k, v in params.items()}

    x = jax.random.normal(keys[16], (B, S, D), dtype=jnp.float32)
    mask = jnp.ones((B, S), dtype=jnp.float32).at[1, -2:].set(0.0)   # pad out 2 keys of batch 1

    fwd = jax.jit(lambda xx, mm: encoder_layer_forward(xx, mm, prepared, num_heads=H, tm=512))
    y, attn = fwd(x, mask)
    jax.block_until_ready((y, attn))

    y_ref, attn_ref = _reference(x, mask, params_q, H)

    assert y.shape == (B, S, D)
    assert attn.shape == (B, H, S, S)
    # Tolerances account for bf16 activations/intermediates on the MXU (f32 accumulate).
    assert jnp.allclose(y, y_ref, atol=5e-2, rtol=5e-2), "output mismatch"
    assert jnp.allclose(attn.astype(jnp.float32), attn_ref, atol=2e-2, rtol=2e-2), "attn mismatch"

    print("KERNEL_OK")
</pallas_src>

<mosaic_0001>
module attributes {stable_mosaic.version = 11 : i64} {
  func.func @_ln_qkv_kernel(%arg0: i32, %arg1: memref<8x256xf32, #tpu.memory_space<vmem>>, %arg2: memref<1x256xf32, #tpu.memory_space<vmem>>, %arg3: memref<1x256xf32, #tpu.memory_space<vmem>>, %arg4: memref<256x768xbf16, #tpu.memory_space<vmem>>, %arg5: memref<1x768xf32, #tpu.memory_space<vmem>>, %arg6: memref<8x768xbf16, #tpu.memory_space<vmem>>) attributes {dimension_semantics = [#tpu.dimension_semantics<parallel>], iteration_bounds = array<i64: 2>, scalar_prefetch = 0 : i64, scratch_operands = 0 : i64, tpu.core_type = #tpu.core_type<tc>, window_params = [{transform_indices = @transform_0, window_bounds = array<i64: 8, 256>}, {pipeline_mode = #tpu.pipeline_mode<synchronous>, transform_indices = @transform_1, window_bounds = array<i64: 1, 256>}, {pipeline_mode = #tpu.pipeline_mode<synchronous>, transform_indices = @transform_2, window_bounds = array<i64: 1, 256>}, {pipeline_mode = #tpu.pipeline_mode<synchronous>, transform_indices = @transform_3, window_bounds = array<i64: 256, 768>}, {pipeline_mode = #tpu.pipeline_mode<synchronous>, transform_indices = @transform_4, window_bounds = array<i64: 1, 768>}, {transform_indices = @transform_5, window_bounds = array<i64: 8, 768>}]} {
    %c0 = arith.constant 0 : index
    %c0_0 = arith.constant 0 : index
    %0 = vector.load %arg1[%c0, %c0_0] : memref<8x256xf32, #tpu.memory_space<vmem>>, vector<8x256xf32>
    %c0_1 = arith.constant 0 : index
    %c0_2 = arith.constant 0 : index
    %1 = vector.load %arg2[%c0_1, %c0_2] : memref<1x256xf32, #tpu.memory_space<vmem>>, vector<1x256xf32>
    %c0_3 = arith.constant 0 : index
    %c0_4 = arith.constant 0 : index
    %2 = vector.load %arg3[%c0_3, %c0_4] : memref<1x256xf32, #tpu.memory_space<vmem>>, vector<1x256xf32>
    %cst = arith.constant dense<0.000000e+00> : vector<8xf32>
    %3 = vector.multi_reduction <add>, %0, %cst [1] : vector<8x256xf32> to vector<8xf32>
    %4 = vector.shape_cast %3 : vector<8xf32> to vector<8x1xf32>
    %cst_5 = arith.constant 2.560000e+02 : f32
    %5 = vector.broadcast %cst_5 : f32 to vector<8x1xf32>
    %6 = arith.divf %4, %5 : vector<8x1xf32>
    %7 = vector.broadcast %6 : vector<8x1xf32> to vector<8x256xf32>
    %8 = arith.subf %0, %7 : vector<8x256xf32>
    %9 = arith.mulf %8, %8 : vector<8x256xf32>
    %cst_6 = arith.constant dense<0.000000e+00> : vector<8xf32>
    %10 = vector.multi_reduction <add>, %9, %cst_6 [1] : vector<8x256xf32> to vector<8xf32>
    %11 = vector.shape_cast %10 : vector<8xf32> to vector<8x1xf32>
    %cst_7 = arith.constant 0.00392156886 : f32
    %12 = vector.broadcast %cst_7 : f32 to vector<8x1xf32>
    %13 = arith.mulf %11, %12 : vector<8x1xf32>
    %14 = math.sqrt %13 : vector<8x1xf32>
    %cst_8 = arith.constant 9.99999997E-7 : f32
    %15 = vector.broadcast %cst_8 : f32 to vector<8x1xf32>
    %16 = arith.addf %14, %15 : vector<8x1xf32>
    %17 = tpu.reciprocal %16 {approx = true} : vector<8x1xf32> -> vector<8x1xf32>
    %18 = vector.broadcast %17 : vector<8x1xf32> to vector<8x256xf32>
    %19 = arith.mulf %8, %18 : vector<8x256xf32>
    %20 = vector.broadcast %1 : vector<1x256xf32> to vector<8x256xf32>
    %21 = arith.mulf %20, %19 : vector<8x256xf32>
    %22 = vector.broadcast %2 : vector<1x256xf32> to vector<8x256xf32>
    %23 = arith.addf %21, %22 : vector<8x256xf32>
    %24 = arith.truncf %23 : vector<8x256xf32> to vector<8x256xbf16>
    %c0_9 = arith.constant 0 : index
    %c0_10 = arith.constant 0 : index
    %25 = vector.load %arg4[%c0_9, %c0_10] : memref<256x768xbf16, #tpu.memory_space<vmem>>, vector<256x768xbf16>
    %cst_11 = arith.constant dense<0.000000e+00> : vector<8x768xf32>
    %26 = tpu.matmul %24, %25, %cst_11 {dimension_numbers = #tpu.dot_dimension_numbers<[1], [0], [0], [1], [0, 0, 1, 1], [], []>} : vector<8x256xbf16>, vector<256x768xbf16>, vector<8x768xf32> -> vector<8x768xf32>
    %c0_12 = arith.constant 0 : index
    %c0_13 = arith.constant 0 : index
    %27 = vector.load %arg5[%c0_12, %c0_13] : memref<1x768xf32, #tpu.memory_space<vmem>>, vector<1x768xf32>
    %28 = vector.broadcast %27 : vector<1x768xf32> to vector<8x768xf32>
    %29 = arith.addf %26, %28 : vector<8x768xf32>
    %30 = arith.truncf %29 : vector<8x768xf32> to vector<8x768xbf16>
    %c0_14 = arith.constant 0 : index
    %c0_15 = arith.constant 0 : index
    %31 = vector.load %arg6[%c0_14, %c0_15] : memref<8x768xbf16, #tpu.memory_space<vmem>>, vector<8x768xbf16>
    tpu.vector_store %arg6[%c0_14, %c0_15], %30 {strides = array<i32>} : memref<8x768xbf16, #tpu.memory_space<vmem>>, vector<8x768xbf16>,
    return
  }
  func.func @transform_0(%arg0: i32) -> (i32, i32) {
    %c0_i32 = arith.constant 0 : i32
    %c0_i32_0 = arith.constant 0 : i32
    return %arg0, %c0_i32 : i32, i32
  }
  func.func @transform_1(%arg0: i32) -> (i32, i32) {
    %c0_i32 = arith.constant 0 : i32
    %c0_i32_0 = arith.constant 0 : i32
    %c0_i32_1 = arith.constant 0 : i32
    return %c0_i32, %c0_i32_0 : i32, i32
  }
  func.func @transform_2(%arg0: i32) -> (i32, i32) {
    %c0_i32 = arith.constant 0 : i32
    %c0_i32_0 = arith.constant 0 : i32
    %c0_i32_1 = arith.constant 0 : i32
    return %c0_i32, %c0_i32_0 : i32, i32
  }
  func.func @transform_3(%arg0: i32) -> (i32, i32) {
    %c0_i32 = arith.constant 0 : i32
    %c0_i32_0 = arith.constant 0 : i32
    %c0_i32_1 = arith.constant 0 : i32
    return %c0_i32, %c0_i32_0 : i32, i32
  }
  func.func @transform_4(%arg0: i32) -> (i32, i32) {
    %c0_i32 = arith.constant 0 : i32
    %c0_i32_0 = arith.constant 0 : i32
    %c0_i32_1 = arith.constant 0 : i32
    return %c0_i32, %c0_i32_0 : i32, i32
  }
  func.func @transform_5(%arg0: i32) -> (i32, i32) {
    %c0_i32 = arith.constant 0 : i32
    %c0_i32_0 = arith.constant 0 : i32
    return %arg0, %c0_i32 : i32, i32
  }
}

module attributes {stable_mosaic.version = 11 : i64} {
  func.func @kernel(%arg0: i32, %arg1: i32, %arg2: memref<8x128xbf16, #tpu.memory_space<vmem>>, %arg3: memref<8x128xbf16, #tpu.memory_space<vmem>>, %arg4: memref<8x128xbf16, #tpu.memory_space<vmem>>, %arg5: memref<1x1x8xf32, #tpu.memory_space<vmem>>, %arg6: memref<8x128xbf16, #tpu.memory_space<vmem>>, %arg7: memref<1x2x8x8xf32, #tpu.memory_space<vmem>>) attributes {dimension_semantics = [#tpu.dimension_semantics<parallel>, #tpu.dimension_semantics<parallel>], iteration_bounds = array<i64: 2, 2>, scalar_prefetch = 0 : i64, scratch_operands = 0 : i64, tpu.core_type = #tpu.core_type<tc>, window_params = [{transform_indices = @transform_0, window_bounds = array<i64: 8, 128>}, {transform_indices = @transform_1, window_bounds = array<i64: 8, 128>}, {transform_indices = @transform_2, window_bounds = array<i64: 8, 128>}, {transform_indices = @transform_3, window_bounds = array<i64: 1, 1, 8>}, {transform_indices = @transform_4, window_bounds = array<i64: 8, 128>}, {transform_indices = @transform_5, window_bounds = array<i64: 1, 2, 8, 8>}]} {
    %c0 = arith.constant 0 : index
    %c0_0 = arith.constant 0 : index
    %c0_1 = arith.constant 0 : index
    %0 = vector.load %arg5[%c0, %c0_0, %c0_1] : memref<1x1x8xf32, #tpu.memory_space<vmem>>, vector<1x1x8xf32>
    %1 = vector.shape_cast %0 : vector<1x1x8xf32> to vector<1x8xf32>
    %c0_2 = arith.constant 0 : index
    %c0_3 = arith.constant 0 : index
    %2 = vector.load %arg2[%c0_2, %c0_3] : memref<8x128xbf16, #tpu.memory_space<vmem>>, vector<8x64xbf16>
    %c0_4 = arith.constant 0 : index
    %c0_5 = arith.constant 0 : index
    %3 = vector.load %arg3[%c0_4, %c0_5] : memref<8x128xbf16, #tpu.memory_space<vmem>>, vector<8x64xbf16>
    %c0_6 = arith.constant 0 : index
    %c0_7 = arith.constant 0 : index
    %4 = vector.load %arg4[%c0_6, %c0_7] : memref<8x128xbf16, #tpu.memory_space<vmem>>, vector<8x64xbf16>
    %cst = arith.constant dense<0.000000e+00> : vector<8x8xf32>
    %5 = tpu.matmul %2, %3, %cst {dimension_numbers = #tpu.dot_dimension_numbers<[1], [1], [0], [0], [0, 0, 1, 0], [], []>} : vector<8x64xbf16>, vector<8x64xbf16>, vector<8x8xf32> -> vector<8x8xf32>
    %cst_8 = arith.constant 1.250000e-01 : f32
    %6 = vector.broadcast %cst_8 : f32 to vector<8x8xf32>
    %7 = arith.mulf %5, %6 : vector<8x8xf32>
    %cst_9 = arith.constant 0.000000e+00 : f32
    %8 = vector.broadcast %cst_9 : f32 to vector<1x8xf32>
    %9 = arith.cmpf oeq, %1, %8 : vector<1x8xf32>
    %cst_10 = arith.constant -1.000000e+09 : f32
    %10 = vector.shape_cast %9 : vector<1x8xi1> to vector<1x8xi1>
    %11 = vector.broadcast %10 : vector<1x8xi1> to vector<8x8xi1>
    %12 = vector.broadcast %cst_10 : f32 to vector<8x8xf32>
    %13 = arith.select %11, %12, %7 : vector<8x8xi1>, vector<8x8xf32>
    %cst_11 = arith.constant dense<0xFF800000> : vector<8xf32>
    %14 = vector.multi_reduction <maximumf>, %13, %cst_11 [1] : vector<8x8xf32> to vector<8xf32>
    %15 = vector.shape_cast %14 : vector<8xf32> to vector<8x1xf32>
    %16 = vector.broadcast %15 : vector<8x1xf32> to vector<8x8xf32>
    %17 = arith.subf %13, %16 : vector<8x8xf32>
    %18 = math.exp %17 : vector<8x8xf32>
    %cst_12 = arith.constant dense<0.000000e+00> : vector<8xf32>
    %19 = vector.multi_reduction <add>, %18, %cst_12 [1] : vector<8x8xf32> to vector<8xf32>
    %20 = vector.shape_cast %19 : vector<8xf32> to vector<8x1xf32>
    %21 = tpu.reciprocal %20 {approx = true} : vector<8x1xf32> -> vector<8x1xf32>
    %22 = vector.broadcast %21 : vector<8x1xf32> to vector<8x8xf32>
    %23 = arith.mulf %18, %22 : vector<8x8xf32>
    %24 = arith.truncf %23 : vector<8x8xf32> to vector<8x8xbf16>
    %cst_13 = arith.constant dense<0.000000e+00> : vector<8x64xf32>
    %25 = tpu.matmul %24, %4, %cst_13 {dimension_numbers = #tpu.dot_dimension_numbers<[1], [0], [0], [1], [0, 0, 1, 1], [], []>} : vector<8x8xbf16>, vector<8x64xbf16>, vector<8x64xf32> -> vector<8x64xf32>
    %26 = arith.truncf %25 : vector<8x64xf32> to vector<8x64xbf16>
    %c0_14 = arith.constant 0 : index
    %c0_15 = arith.constant 0 : index
    %27 = vector.load %arg6[%c0_14, %c0_15] : memref<8x128xbf16, #tpu.memory_space<vmem>>, vector<8x64xbf16>
    tpu.vector_store %arg6[%c0_14, %c0_15], %26 {strides = array<i32>} : memref<8x128xbf16, #tpu.memory_space<vmem>>, vector<8x64xbf16>,
    %c0_16 = arith.constant 0 : index
    %c0_17 = arith.constant 0 : index
    %c0_18 = arith.constant 0 : index
    %c0_19 = arith.constant 0 : index
    %28 = vector.load %arg7[%c0_16, %c0_17, %c0_18, %c0_19] : memref<1x2x8x8xf32, #tpu.memory_space<vmem>>, vector<1x1x8x8xf32>
    %29 = vector.shape_cast %28 : vector<1x1x8x8xf32> to vector<8x8xf32>
    %30 = vector.shape_cast %23 : vector<8x8xf32> to vector<1x1x8x8xf32>
    tpu.vector_store %arg7[%c0_16, %c0_17, %c0_18, %c0_19], %30 {strides = array<i32>} : memref<1x2x8x8xf32, #tpu.memory_space<vmem>>, vector<1x1x8x8xf32>,
    %c0_20 = arith.constant 0 : index
    %c64 = arith.constant 64 : index
    %31 = vector.load %arg2[%c0_20, %c64] : memref<8x128xbf16, #tpu.memory_space<vmem>>, vector<8x64xbf16>
    %c0_21 = arith.constant 0 : index
    %c64_22 = arith.constant 64 : index
    %32 = vector.load %arg3[%c0_21, %c64_22] : memref<8x128xbf16, #tpu.memory_space<vmem>>, vector<8x64xbf16>
    %c0_23 = arith.constant 0 : index
    %c64_24 = arith.constant 64 : index
    %33 = vector.load %arg4[%c0_23, %c64_24] : memref<8x128xbf16, #tpu.memory_space<vmem>>, vector<8x64xbf16>
    %cst_25 = arith.constant dense<0.000000e+00> : vector<8x8xf32>
    %34 = tpu.matmul %31, %32, %cst_25 {dimension_numbers = #tpu.dot_dimension_numbers<[1], [1], [0], [0], [0, 0, 1, 0], [], []>} : vector<8x64xbf16>, vector<8x64xbf16>, vector<8x8xf32> -> vector<8x8xf32>
    %cst_26 = arith.constant 1.250000e-01 : f32
    %35 = vector.broadcast %cst_26 : f32 to vector<8x8xf32>
    %36 = arith.mulf %34, %35 : vector<8x8xf32>
    %cst_27 = arith.constant 0.000000e+00 : f32
    %37 = vector.broadcast %cst_27 : f32 to vector<1x8xf32>
    %38 = arith.cmpf oeq, %1, %37 : vector<1x8xf32>
    %cst_28 = arith.constant -1.000000e+09 : f32
    %39 = vector.shape_cast %38 : vector<1x8xi1> to vector<1x8xi1>
    %40 = vector.broadcast %39 : vector<1x8xi1> to vector<8x8xi1>
    %41 = vector.broadcast %cst_28 : f32 to vector<8x8xf32>
    %42 = arith.select %40, %41, %36 : vector<8x8xi1>, vector<8x8xf32>
    %cst_29 = arith.constant dense<0xFF800000> : vector<8xf32>
    %43 = vector.multi_reduction <maximumf>, %42, %cst_29 [1] : vector<8x8xf32> to vector<8xf32>
    %44 = vector.shape_cast %43 : vector<8xf32> to vector<8x1xf32>
    %45 = vector.broadcast %44 : vector<8x1xf32> to vector<8x8xf32>
    %46 = arith.subf %42, %45 : vector<8x8xf32>
    %47 = math.exp %46 : vector<8x8xf32>
    %cst_30 = arith.constant dense<0.000000e+00> : vector<8xf32>
    %48 = vector.multi_reduction <add>, %47, %cst_30 [1] : vector<8x8xf32> to vector<8xf32>
    %49 = vector.shape_cast %48 : vector<8xf32> to vector<8x1xf32>
    %50 = tpu.reciprocal %49 {approx = true} : vector<8x1xf32> -> vector<8x1xf32>
    %51 = vector.broadcast %50 : vector<8x1xf32> to vector<8x8xf32>
    %52 = arith.mulf %47, %51 : vector<8x8xf32>
    %53 = arith.truncf %52 : vector<8x8xf32> to vector<8x8xbf16>
    %cst_31 = arith.constant dense<0.000000e+00> : vector<8x64xf32>
    %54 = tpu.matmul %53, %33, %cst_31 {dimension_numbers = #tpu.dot_dimension_numbers<[1], [0], [0], [1], [0, 0, 1, 1], [], []>} : vector<8x8xbf16>, vector<8x64xbf16>, vector<8x64xf32> -> vector<8x64xf32>
    %55 = arith.truncf %54 : vector<8x64xf32> to vector<8x64xbf16>
    %c0_32 = arith.constant 0 : index
    %c64_33 = arith.constant 64 : index
    %56 = vector.load %arg6[%c0_32, %c64_33] : memref<8x128xbf16, #tpu.memory_space<vmem>>, vector<8x64xbf16>
    tpu.vector_store %arg6[%c0_32, %c64_33], %55 {strides = array<i32>} : memref<8x128xbf16, #tpu.memory_space<vmem>>, vector<8x64xbf16>,
    %c0_34 = arith.constant 0 : index
    %c1 = arith.constant 1 : index
    %c0_35 = arith.constant 0 : index
    %c0_36 = arith.constant 0 : index
    %57 = vector.load %arg7[%c0_34, %c1, %c0_35, %c0_36] : memref<1x2x8x8xf32, #tpu.memory_space<vmem>>, vector<1x1x8x8xf32>
    %58 = vector.shape_cast %57 : vector<1x1x8x8xf32> to vector<8x8xf32>
    %59 = vector.shape_cast %52 : vector<8x8xf32> to vector<1x1x8x8xf32>
    tpu.vector_store %arg7[%c0_34, %c1, %c0_35, %c0_36], %59 {strides = array<i32>} : memref<1x2x8x8xf32, #tpu.memory_space<vmem>>, vector<1x1x8x8xf32>,
    return
  }
  func.func @transform_0(%arg0: i32, %arg1: i32) -> (i32, i32) {
    %c0_i32 = arith.constant 0 : i32
    return %arg0, %arg1 : i32, i32
  }
  func.func @transform_1(%arg0: i32, %arg1: i32) -> (i32, i32) {
    %c2_i32 = arith.constant 2 : i32
    %0 = arith.addi %arg1, %c2_i32 : i32
    %c0_i32 = arith.constant 0 : i32
    return %arg0, %0 : i32, i32
  }
  func.func @transform_2(%arg0: i32, %arg1: i32) -> (i32, i32) {
    %c4_i32 = arith.constant 4 : i32
    %0 = arith.addi %arg1, %c4_i32 : i32
    %c0_i32 = arith.constant 0 : i32
    return %arg0, %0 : i32, i32
  }
  func.func @transform_3(%arg0: i32, %arg1: i32) -> (i32, i32, i32) {
    %c0_i32 = arith.constant 0 : i32
    %c0_i32_0 = arith.constant 0 : i32
    %c0_i32_1 = arith.constant 0 : i32
    return %arg0, %c0_i32, %c0_i32_0 : i32, i32, i32
  }
  func.func @transform_4(%arg0: i32, %arg1: i32) -> (i32, i32) {
    %c0_i32 = arith.constant 0 : i32
    return %arg0, %arg1 : i32, i32
  }
  func.func @transform_5(%arg0: i32, %arg1: i32) -> (i32, i32, i32, i32) {
    %c0_i32 = arith.constant 0 : i32
    %c0_i32_0 = arith.constant 0 : i32
    %c0_i32_1 = arith.constant 0 : i32
    return %arg0, %arg1, %c0_i32, %c0_i32_0 : i32, i32, i32, i32
  }
}

module attributes {stable_mosaic.version = 11 : i64} {
  func.func @_sublayer_ffn_kernel(%arg0: i32, %arg1: memref<8x256xf32, #tpu.memory_space<vmem>>, %arg2: memref<1x256xf32, #tpu.memory_space<vmem>>, %arg3: memref<1x256xf32, #tpu.memory_space<vmem>>, %arg4: memref<256x1024xbf16, #tpu.memory_space<vmem>>, %arg5: memref<1x1024xf32, #tpu.memory_space<vmem>>, %arg6: memref<1024x256xbf16, #tpu.memory_space<vmem>>, %arg7: memref<1x256xf32, #tpu.memory_space<vmem>>, %arg8: memref<8x256xf32, #tpu.memory_space<vmem>>) attributes {dimension_semantics = [#tpu.dimension_semantics<parallel>], iteration_bounds = array<i64: 2>, scalar_prefetch = 0 : i64, scratch_operands = 0 : i64, tpu.core_type = #tpu.core_type<tc>, window_params = [{transform_indices = @transform_0, window_bounds = array<i64: 8, 256>}, {pipeline_mode = #tpu.pipeline_mode<synchronous>, transform_indices = @transform_1, window_bounds = array<i64: 1, 256>}, {pipeline_mode = #tpu.pipeline_mode<synchronous>, transform_indices = @transform_2, window_bounds = array<i64: 1, 256>}, {pipeline_mode = #tpu.pipeline_mode<synchronous>, transform_indices = @transform_3, window_bounds = array<i64: 256, 1024>}, {pipeline_mode = #tpu.pipeline_mode<synchronous>, transform_indices = @transform_4, window_bounds = array<i64: 1, 1024>}, {pipeline_mode = #tpu.pipeline_mode<synchronous>, transform_indices = @transform_5, window_bounds = array<i64: 1024, 256>}, {pipeline_mode = #tpu.pipeline_mode<synchronous>, transform_indices = @transform_6, window_bounds = array<i64: 1, 256>}, {transform_indices = @transform_7, window_bounds = array<i64: 8, 256>}]} {
    %c0 = arith.constant 0 : index
    %c0_0 = arith.constant 0 : index
    %0 = vector.load %arg1[%c0, %c0_0] : memref<8x256xf32, #tpu.memory_space<vmem>>, vector<8x256xf32>
    %c0_1 = arith.constant 0 : index
    %c0_2 = arith.constant 0 : index
    %1 = vector.load %arg2[%c0_1, %c0_2] : memref<1x256xf32, #tpu.memory_space<vmem>>, vector<1x256xf32>
    %c0_3 = arith.constant 0 : index
    %c0_4 = arith.constant 0 : index
    %2 = vector.load %arg3[%c0_3, %c0_4] : memref<1x256xf32, #tpu.memory_space<vmem>>, vector<1x256xf32>
    %cst = arith.constant dense<0.000000e+00> : vector<8xf32>
    %3 = vector.multi_reduction <add>, %0, %cst [1] : vector<8x256xf32> to vector<8xf32>
    %4 = vector.shape_cast %3 : vector<8xf32> to vector<8x1xf32>
    %cst_5 = arith.constant 2.560000e+02 : f32
    %5 = vector.broadcast %cst_5 : f32 to vector<8x1xf32>
    %6 = arith.divf %4, %5 : vector<8x1xf32>
    %7 = vector.broadcast %6 : vector<8x1xf32> to vector<8x256xf32>
    %8 = arith.subf %0, %7 : vector<8x256xf32>
    %9 = arith.mulf %8, %8 : vector<8x256xf32>
    %cst_6 = arith.constant dense<0.000000e+00> : vector<8xf32>
    %10 = vector.multi_reduction <add>, %9, %cst_6 [1] : vector<8x256xf32> to vector<8xf32>
    %11 = vector.shape_cast %10 : vector<8xf32> to vector<8x1xf32>
    %cst_7 = arith.constant 0.00392156886 : f32
    %12 = vector.broadcast %cst_7 : f32 to vector<8x1xf32>
    %13 = arith.mulf %11, %12 : vector<8x1xf32>
    %14 = math.sqrt %13 : vector<8x1xf32>
    %cst_8 = arith.constant 9.99999997E-7 : f32
    %15 = vector.broadcast %cst_8 : f32 to vector<8x1xf32>
    %16 = arith.addf %14, %15 : vector<8x1xf32>
    %17 = tpu.reciprocal %16 {approx = true} : vector<8x1xf32> -> vector<8x1xf32>
    %18 = vector.broadcast %17 : vector<8x1xf32> to vector<8x256xf32>
    %19 = arith.mulf %8, %18 : vector<8x256xf32>
    %20 = vector.broadcast %1 : vector<1x256xf32> to vector<8x256xf32>
    %21 = arith.mulf %20, %19 : vector<8x256xf32>
    %22 = vector.broadcast %2 : vector<1x256xf32> to vector<8x256xf32>
    %23 = arith.addf %21, %22 : vector<8x256xf32>
    %24 = arith.truncf %23 : vector<8x256xf32> to vector<8x256xbf16>
    %c0_9 = arith.constant 0 : index
    %c0_10 = arith.constant 0 : index
    %25 = vector.load %arg4[%c0_9, %c0_10] : memref<256x1024xbf16, #tpu.memory_space<vmem>>, vector<256x1024xbf16>
    %cst_11 = arith.constant dense<0.000000e+00> : vector<8x1024xf32>
    %26 = tpu.matmul %24, %25, %cst_11 {dimension_numbers = #tpu.dot_dimension_numbers<[1], [0], [0], [1], [0, 0, 1, 1], [], []>} : vector<8x256xbf16>, vector<256x1024xbf16>, vector<8x1024xf32> -> vector<8x1024xf32>
    %c0_12 = arith.constant 0 : index
    %c0_13 = arith.constant 0 : index
    %27 = vector.load %arg5[%c0_12, %c0_13] : memref<1x1024xf32, #tpu.memory_space<vmem>>, vector<1x1024xf32>
    %28 = vector.broadcast %27 : vector<1x1024xf32> to vector<8x1024xf32>
    %29 = arith.addf %26, %28 : vector<8x1024xf32>
    %cst_14 = arith.constant 0.000000e+00 : f32
    %30 = vector.broadcast %cst_14 : f32 to vector<8x1024xf32>
    %31 = arith.maximumf %29, %30 : vector<8x1024xf32>
    %32 = arith.truncf %31 : vector<8x1024xf32> to vector<8x1024xbf16>
    %c0_15 = arith.constant 0 : index
    %c0_16 = arith.constant 0 : index
    %33 = vector.load %arg6[%c0_15, %c0_16] : memref<1024x256xbf16, #tpu.memory_space<vmem>>, vector<1024x256xbf16>
    %cst_17 = arith.constant dense<0.000000e+00> : vector<8x256xf32>
    %34 = tpu.matmul %32, %33, %cst_17 {dimension_numbers = #tpu.dot_dimension_numbers<[1], [0], [0], [1], [0, 0, 1, 1], [], []>} : vector<8x1024xbf16>, vector<1024x256xbf16>, vector<8x256xf32> -> vector<8x256xf32>
    %c0_18 = arith.constant 0 : index
    %c0_19 = arith.constant 0 : index
    %35 = vector.load %arg7[%c0_18, %c0_19] : memref<1x256xf32, #tpu.memory_space<vmem>>, vector<1x256xf32>
    %36 = vector.broadcast %35 : vector<1x256xf32> to vector<8x256xf32>
    %37 = arith.addf %34, %36 : vector<8x256xf32>
    %38 = arith.addf %37, %0 : vector<8x256xf32>
    %c0_20 = arith.constant 0 : index
    %c0_21 = arith.constant 0 : index
    %39 = vector.load %arg8[%c0_20, %c0_21] : memref<8x256xf32, #tpu.memory_space<vmem>>, vector<8x256xf32>
    tpu.vector_store %arg8[%c0_20, %c0_21], %38 {strides = array<i32>} : memref<8x256xf32, #tpu.memory_space<vmem>>, vector<8x256xf32>,
    return
  }
  func.func @transform_0(%arg0: i32) -> (i32, i32) {
    %c0_i32 = arith.constant 0 : i32
    %c0_i32_0 = arith.constant 0 : i32
    return %arg0, %c0_i32 : i32, i32
  }
  func.func @transform_1(%arg0: i32) -> (i32, i32) {
    %c0_i32 = arith.constant 0 : i32
    %c0_i32_0 = arith.constant 0 : i32
    %c0_i32_1 = arith.constant 0 : i32
    return %c0_i32, %c0_i32_0 : i32, i32
  }
  func.func @transform_2(%arg0: i32) -> (i32, i32) {
    %c0_i32 = arith.constant 0 : i32
    %c0_i32_0 = arith.constant 0 : i32
    %c0_i32_1 = arith.constant 0 : i32
    return %c0_i32, %c0_i32_0 : i32, i32
  }
  func.func @transform_3(%arg0: i32) -> (i32, i32) {
    %c0_i32 = arith.constant 0 : i32
    %c0_i32_0 = arith.constant 0 : i32
    %c0_i32_1 = arith.constant 0 : i32
    return %c0_i32, %c0_i32_0 : i32, i32
  }
  func.func @transform_4(%arg0: i32) -> (i32, i32) {
    %c0_i32 = arith.constant 0 : i32
    %c0_i32_0 = arith.constant 0 : i32
    %c0_i32_1 = arith.constant 0 : i32
    return %c0_i32, %c0_i32_0 : i32, i32
  }
  func.func @transform_5(%arg0: i32) -> (i32, i32) {
    %c0_i32 = arith.constant 0 : i32
    %c0_i32_0 = arith.constant 0 : i32
    %c0_i32_1 = arith.constant 0 : i32
    return %c0_i32, %c0_i32_0 : i32, i32
  }
  func.func @transform_6(%arg0: i32) -> (i32, i32) {
    %c0_i32 = arith.constant 0 : i32
    %c0_i32_0 = arith.constant 0 : i32
    %c0_i32_1 = arith.constant 0 : i32
    return %c0_i32, %c0_i32_0 : i32, i32
  }
  func.func @transform_7(%arg0: i32) -> (i32, i32) {
    %c0_i32 = arith.constant 0 : i32
    %c0_i32_0 = arith.constant 0 : i32
    return %arg0, %c0_i32 : i32, i32
  }
}

module attributes {stable_mosaic.version = 11 : i64} {
  func.func @_attn_out_residual_kernel(%arg0: i32, %arg1: memref<8x256xbf16, #tpu.memory_space<vmem>>, %arg2: memref<8x256xf32, #tpu.memory_space<vmem>>, %arg3: memref<256x256xbf16, #tpu.memory_space<vmem>>, %arg4: memref<1x256xf32, #tpu.memory_space<vmem>>, %arg5: memref<8x256xf32, #tpu.memory_space<vmem>>) attributes {dimension_semantics = [#tpu.dimension_semantics<parallel>], iteration_bounds = array<i64: 2>, scalar_prefetch = 0 : i64, scratch_operands = 0 : i64, tpu.core_type = #tpu.core_type<tc>, window_params = [{transform_indices = @transform_0, window_bounds = array<i64: 8, 256>}, {transform_indices = @transform_1, window_bounds = array<i64: 8, 256>}, {pipeline_mode = #tpu.pipeline_mode<synchronous>, transform_indices = @transform_2, window_bounds = array<i64: 256, 256>}, {pipeline_mode = #tpu.pipeline_mode<synchronous>, transform_indices = @transform_3, window_bounds = array<i64: 1, 256>}, {transform_indices = @transform_4, window_bounds = array<i64: 8, 256>}]} {
    %c0 = arith.constant 0 : index
    %c0_0 = arith.constant 0 : index
    %0 = vector.load %arg1[%c0, %c0_0] : memref<8x256xbf16, #tpu.memory_space<vmem>>, vector<8x256xbf16>
    %c0_1 = arith.constant 0 : index
    %c0_2 = arith.constant 0 : index
    %1 = vector.load %arg3[%c0_1, %c0_2] : memref<256x256xbf16, #tpu.memory_space<vmem>>, vector<256x256xbf16>
    %cst = arith.constant dense<0.000000e+00> : vector<8x256xf32>
    %2 = tpu.matmul %0, %1, %cst {dimension_numbers = #tpu.dot_dimension_numbers<[1], [0], [0], [1], [0, 0, 1, 1], [], []>} : vector<8x256xbf16>, vector<256x256xbf16>, vector<8x256xf32> -> vector<8x256xf32>
    %c0_3 = arith.constant 0 : index
    %c0_4 = arith.constant 0 : index
    %3 = vector.load %arg4[%c0_3, %c0_4] : memref<1x256xf32, #tpu.memory_space<vmem>>, vector<1x256xf32>
    %4 = vector.broadcast %3 : vector<1x256xf32> to vector<8x256xf32>
    %5 = arith.addf %2, %4 : vector<8x256xf32>
    %c0_5 = arith.constant 0 : index
    %c0_6 = arith.constant 0 : index
    %6 = vector.load %arg2[%c0_5, %c0_6] : memref<8x256xf32, #tpu.memory_space<vmem>>, vector<8x256xf32>
    %7 = arith.addf %5, %6 : vector<8x256xf32>
    %c0_7 = arith.constant 0 : index
    %c0_8 = arith.constant 0 : index
    %8 = vector.load %arg5[%c0_7, %c0_8] : memref<8x256xf32, #tpu.memory_space<vmem>>, vector<8x256xf32>
    tpu.vector_store %arg5[%c0_7, %c0_8], %7 {strides = array<i32>} : memref<8x256xf32, #tpu.memory_space<vmem>>, vector<8x256xf32>,
    return
  }
  func.func @transform_0(%arg0: i32) -> (i32, i32) {
    %c0_i32 = arith.constant 0 : i32
    %c0_i32_0 = arith.constant 0 : i32
    return %arg0, %c0_i32 : i32, i32
  }
  func.func @transform_1(%arg0: i32) -> (i32, i32) {
    %c0_i32 = arith.constant 0 : i32
    %c0_i32_0 = arith.constant 0 : i32
    return %arg0, %c0_i32 : i32, i32
  }
  func.func @transform_2(%arg0: i32) -> (i32, i32) {
    %c0_i32 = arith.constant 0 : i32
    %c0_i32_0 = arith.constant 0 : i32
    %c0_i32_1 = arith.constant 0 : i32
    return %c0_i32, %c0_i32_0 : i32, i32
  }
  func.func @transform_3(%arg0: i32) -> (i32, i32) {
    %c0_i32 = arith.constant 0 : i32
    %c0_i32_0 = arith.constant 0 : i32
    %c0_i32_1 = arith.constant 0 : i32
    return %c0_i32, %c0_i32_0 : i32, i32
  }
  func.func @transform_4(%arg0: i32) -> (i32, i32) {
    %c0_i32 = arith.constant 0 : i32
    %c0_i32_0 = arith.constant 0 : i32
    return %arg0, %c0_i32 : i32, i32
  }
}

</mosaic_0001>

<llo_original>
// kernel: _lambda_.6
$region0: #{_lambda_.6}
  #allocation0 [shape = 'u32[]', space=smem, size = 0x4, offset = 0x4, fixed_abs, tag = 'smem constant byte address 0x4 - core index']
  #allocation1 [shape = 'u32[144,128]{1,0:T(1,128)}', space=vmem, size = 0x12000, scoped, tag = 'internal scratch']
  %s0 = inlined_call_operand.vmem [shape: bf16[16,256], index: 0, kind: input, shape index: {}]
  %s1 = inlined_call_operand.hbm [shape: f32[16,256], index: 1, kind: input, shape index: {}]
  %s2 = inlined_call_operand.hbm [shape: bf16[256,256], index: 2, kind: input, shape index: {}]
  %s3 = inlined_call_operand.hbm [shape: f32[1,256], index: 3, kind: input, shape index: {}]
  %s4 = inlined_call_operand.vmem [shape: f32[16,256], index: 4, kind: output, shape index: {}]
  %s5 = sld [smem:[#allocation0]]
  $region61: #{_lambda_.6} parent=0
    _
  %s7 = ssub.s32 1, %s5
  %s8 = scalar_select 0, %s7, %s5
  $region1: #{_lambda_.6} parent=0
    #allocation2 [shape = 'u8[16384]{0}', space=vmem, size = 0x4000, scoped, tag = 'input window, operand 1']
    #allocation3 [shape = 's32[2]{0}', space=sflag, size = 0x8, scoped, tag = 'scoped memory for _lambda_.6']
    #allocation4 [shape = 'u8[131072]{0}', space=vmem, size = 0x20000, scoped, tag = 'input window, operand 2, single buffered']
    #allocation5 [shape = 's32[1]{0}', space=sflag, size = 0x4, scoped, tag = 'scoped memory for _lambda_.6']
    #allocation6 [shape = 'u8[1024]{0}', space=vmem, size = 0x400, scoped, tag = 'input window, operand 3, single buffered']
    %9 = vsyncpa [#allocation3], 0
    %s10 = scalar_lea.sflag [#allocation3], 1
    %11 = vsyncpa %s10, 0
    %12 = vsyncpa [#allocation5], 0
    loop: start=0, step=1, limit=4
    $region2: #{_lambda_.6} parent=1 // loop_pre_header
      _
    $region3: #{_lambda_.6} parent=1 // loop_header
      %s14 = sphi 0, %s18
      %p15 = scmp.ge.s32.totalorder %s14, 4
      %s24 = sphi 0, %s26
      %s27 = sphi 0, %s24
      %s28 = sphi 0, %s27
      %s44 = sphi 0, %s28
      %s50 = sphi 0, %s52
      %s53 = sphi 0, %s50
      %s54 = sphi 0, %s53
      %s70 = sphi 0, %s54
      %s74 = sphi 0, %s74
      %s76 = sphi 0, %s74
      %s77 = sphi 0, %s76
      %s91 = sphi 0, %s77
      %s95 = sphi 0, %s95
      %s97 = sphi 0, %s95
      %s98 = sphi 0, %s97
      %s112 = sphi 0, %s98
      %s118 = sphi 0, %s120
      %s121 = sphi 0, %s118
      %s122 = sphi 0, %s121
      %s138 = sphi 0, %s122
    $region4: #{_lambda_.6} parent=1 // loop_header_branch
      %17 = sbr.rel (%p15) target = $region8
    $region5: #{_lambda_.6} parent=1 // loop_body
      %s19 = ssub.s32 %s14, 1
      %s20 = ssub.s32 %s14, 2
      %s21 = sadd.s32 %s14, 1
      %s22 = ssub.s32 %s14, %s21
      %p23 = scmp.eq.s32.totalorder %s22, 0
      %s25 = sadd.s32 %s24, 1
      %s26 = scalar_select %p23, %s24, %s25
      %p29 = pneg %p23
      %p30 = scmp.eq.s32.totalorder %s14, 1
      %p31 = por %p29, %p30
      %p32 = scmp.ne.s32.totalorder %s24, %s27
      %p33 = scmp.eq.s32.totalorder %s14, 0
      %p34 = por %p32, %p33
      %p35 = scmp.ne.s32.totalorder %s24, %s27
      %p36 = scmp.eq.s32.totalorder %s19, 1
      %p37 = por %p35, %p36
      %p38 = scmp.ne.s32.totalorder %s27, %s28
      %p39 = scmp.eq.s32.totalorder %s19, 0
      %p40 = por %p38, %p39
      %p41 = scmp.ne.s32.totalorder %s27, %s28
      %p42 = scmp.eq.s32.totalorder %s20, 1
      %p43 = por %p41, %p42
      %p45 = scmp.ne.s32.totalorder %s28, %s44
      %p46 = scmp.eq.s32.totalorder %s20, 0
      %p47 = por %p45, %p46
      %s48 = ssub.s32 %s14, %s21
      %p49 = scmp.eq.s32.totalorder %s48, 0
      %s51 = sadd.s32 %s50, 1
      %s52 = scalar_select %p49, %s50, %s51
      %p55 = pneg %p49
      %p56 = scmp.eq.s32.totalorder %s14, 1
      %p57 = por %p55, %p56
      %p58 = scmp.ne.s32.totalorder %s50, %s53
      %p59 = scmp.eq.s32.totalorder %s14, 0
      %p60 = por %p58, %p59
      %p61 = scmp.ne.s32.totalorder %s50, %s53
      %p62 = scmp.eq.s32.totalorder %s19, 1
      %p63 = por %p61, %p62
      %p64 = scmp.ne.s32.totalorder %s53, %s54
      %p65 = scmp.eq.s32.totalorder %s19, 0
      %p66 = por %p64, %p65
      %p67 = scmp.ne.s32.totalorder %s53, %s54
      %p68 = scmp.eq.s32.totalorder %s20, 1
      %p69 = por %p67, %p68
      %p71 = scmp.ne.s32.totalorder %s54, %s70
      %p72 = scmp.eq.s32.totalorder %s20, 0
      %p73 = por %p71, %p72
      %s75 = sadd.s32 %s74, 1
      %p78 = scmp.eq.s32.totalorder %s14, 1
      %p79 = scmp.ne.s32.totalorder %s74, %s76
      %p80 = scmp.eq.s32.totalorder %s14, 0
      %p81 = por %p79, %p80
      %p82 = scmp.ne.s32.totalorder %s74, %s76
      %p83 = scmp.eq.s32.totalorder %s19, 1
      %p84 = por %p82, %p83
      %p85 = scmp.ne.s32.totalorder %s76, %s77
      %p86 = scmp.eq.s32.totalorder %s19, 0
      %p87 = por %p85, %p86
      %p88 = scmp.ne.s32.totalorder %s76, %s77
      %p89 = scmp.eq.s32.totalorder %s20, 1
      %p90 = por %p88, %p89
      %p92 = scmp.ne.s32.totalorder %s77, %s91
      %p93 = scmp.eq.s32.totalorder %s20, 0
      %p94 = por %p92, %p93
      %s96 = sadd.s32 %s95, 1
      %p99 = scmp.eq.s32.totalorder %s14, 1
      %p100 = scmp.ne.s32.totalorder %s95, %s97
      %p101 = scmp.eq.s32.totalorder %s14, 0
      %p102 = por %p100, %p101
      %p103 = scmp.ne.s32.totalorder %s95, %s97
      %p104 = scmp.eq.s32.totalorder %s19, 1
      %p105 = por %p103, %p104
      %p106 = scmp.ne.s32.totalorder %s97, %s98
      %p107 = scmp.eq.s32.totalorder %s19, 0
      %p108 = por %p106, %p107
      %p109 = scmp.ne.s32.totalorder %s97, %s98
      %p110 = scmp.eq.s32.totalorder %s20, 1
      %p111 = por %p109, %p110
      %p113 = scmp.ne.s32.totalorder %s98, %s112
      %p114 = scmp.eq.s32.totalorder %s20, 0
      %p115 = por %p113, %p114
      %s116 = ssub.s32 %s14, %s21
      %p117 = scmp.eq.s32.totalorder %s116, 0
      %s119 = sadd.s32 %s118, 1
      %s120 = scalar_select %p117, %s118, %s119
      %p123 = pneg %p117
      %p124 = scmp.eq.s32.totalorder %s14, 1
      %p125 = por %p123, %p124
      %p126 = scmp.ne.s32.totalorder %s118, %s121
      %p127 = scmp.eq.s32.totalorder %s14, 0
      %p128 = por %p126, %p127
      %p129 = scmp.ne.s32.totalorder %s118, %s121
      %p130 = scmp.eq.s32.totalorder %s19, 1
      %p131 = por %p129, %p130
      %p132 = scmp.ne.s32.totalorder %s121, %s122
      %p133 = scmp.eq.s32.totalorder %s19, 0
      %p134 = por %p132, %p133
      %p135 = scmp.ne.s32.totalorder %s121, %s122
      %p136 = scmp.eq.s32.totalorder %s20, 1
      %p137 = por %p135, %p136
      %p139 = scmp.ne.s32.totalorder %s122, %s138
      %p140 = scmp.eq.s32.totalorder %s20, 0
      %p141 = por %p139, %p140
      %p142 = scmp.le.s32.totalorder 1, %s14
      %p143 = scmp.lt.s32.totalorder %s14, 3
      %p144 = pnand %p142, %p143
      %p145 = pneg %p144
      // Predicated region
      $region9: #{_lambda_.6} parent=5 // pred_check
        _
      $region10: #{_lambda_.6} parent=5 // pred_check_branch
        %147 = sbr.rel (%p144) target = $region12
      $region11: #{_lambda_.6} parent=5 // pred_region
        %s148 = ssub.s32 %s14, 1
        // Predicated region
        $region13: #{_lambda_.6} parent=11 // pred_check
          %p149 = pneg %p87
        $region14: #{_lambda_.6} parent=11 // pred_check_branch
          %151 = sbr.rel (%p149) target = $region16
        $region15: #{_lambda_.6} parent=11 // pred_region
          %s153 = ssub.s32 4096, 4096
          %154 = vsyncadd [#allocation5], %s153
          %s155 = sshll.u32 [#allocation4], 4
          %s156 = int_to_ptr.vmem [resolvable:$true] %s155
          %161 = dma.hbm_to_vmem [thread:$0]  %s2, 4096, %s156, [#allocation5], 128, 128, 8
        $region16: #{_lambda_.6} parent=11 // pred_fallthru
          _
        // Predicated region
        $region17: #{_lambda_.6} parent=11 // pred_check
          %p162 = pneg %p108
        $region18: #{_lambda_.6} parent=11 // pred_check_branch
          %164 = sbr.rel (%p162) target = $region20
        $region19: #{_lambda_.6} parent=11 // pred_region
          %s166 = ssub.s32 32, 32
          %167 = vsyncadd [#allocation5], %s166
          %s169 = sshll.u32 [#allocation6], 4
          %s170 = int_to_ptr.vmem [resolvable:$true] %s169
          %172 = dma.hbm_to_vmem [thread:$0]  %s3, 32, %s170, [#allocation5]
        $region20: #{_lambda_.6} parent=11 // pred_fallthru
          _
      $region12: #{_lambda_.6} parent=5 // pred_fallthru
        _
      %p173 = scmp.lt.s32.totalorder %s14, 2
      // Predicated region
      $region21: #{_lambda_.6} parent=5 // pred_check
        %p174 = pneg %p173
      $region22: #{_lambda_.6} parent=5 // pred_check_branch
        %176 = sbr.rel (%p174) target = $region24
      $region23: #{_lambda_.6} parent=5 // pred_region
        // Predicated region
        $region25: #{_lambda_.6} parent=23 // pred_check
          %p177 = pneg %p34
        $region26: #{_lambda_.6} parent=23 // pred_check_branch
          %179 = sbr.rel (%p177) target = $region28
        $region27: #{_lambda_.6} parent=23 // pred_region
          %p180 = scmp.lt.s32.totalorder %s14, 1
          %s181 = scalar_select %p180, %s14, 1
          %s182 = smul.addr %s181, 2
          %s183 = smul.addr %s182, 4
          %s184 = scalar_lea.vmem %s0, %s183
        $region28: #{_lambda_.6} parent=23 // pred_fallthru
          _
        // Predicated region
        $region29: #{_lambda_.6} parent=23 // pred_check
          %p185 = pneg %p60
        $region30: #{_lambda_.6} parent=23 // pred_check_branch
          %187 = sbr.rel (%p185) target = $region32
        $region31: #{_lambda_.6} parent=23 // pred_region
          %s188 = sand.u32 %s50, 1
          %s189 = scalar_lea.sflag [#allocation3], %s188
          %s190 = sand.u32 %s50, 1
          %s191 = smul.addr %s190, 16
          %s192 = scalar_lea.vmem [#allocation2], %s191
          %s194 = ssub.s32 256, 256
          %195 = vsyncadd %s189, %s194
          %s196 = smul.addr %s14, 2
          %s197 = smul.addr %s196, 128
          %s198 = scalar_lea.hbm %s1, %s197
          %s200 = sshll.u32 %s192, 4
          %s201 = int_to_ptr.vmem [resolvable:$true] %s200
          %203 = dma.hbm_to_vmem [thread:$0]  %s198, 256, %s201, %s189
        $region32: #{_lambda_.6} parent=23 // pred_fallthru
          _
      $region24: #{_lambda_.6} parent=5 // pred_fallthru
        _
      %p204 = scmp.le.s32.totalorder 1, %s14
      %p205 = scmp.lt.s32.totalorder %s14, 3
      %p206 = pnand %p204, %p205
      %p207 = pneg %p206
      // Predicated region
      $region33: #{_lambda_.6} parent=5 // pred_check
        _
      $region34: #{_lambda_.6} parent=5 // pred_check_branch
        %209 = sbr.rel (%p206) target = $region36
      $region35: #{_lambda_.6} parent=5 // pred_region
        %s210 = ssub.s32 %s14, 1
        %s211 = sand.u32 %s53, 1
        %s212 = scalar_lea.sflag [#allocation3], %s211
        %s213 = sand.u32 %s53, 1
        %s214 = smul.addr %s213, 16
        %s215 = scalar_lea.vmem [#allocation2], %s214
        // Predicated region
        $region37: #{_lambda_.6} parent=35 // pred_check
          %p216 = pneg %p66
        $region38: #{_lambda_.6} parent=35 // pred_check_branch
          %218 = sbr.rel (%p216) target = $region40
        $region39: #{_lambda_.6} parent=35 // pred_region
          %219 = dma.done %s212, 256
        $region40: #{_lambda_.6} parent=35 // pred_fallthru
          _
        // Predicated region
        $region41: #{_lambda_.6} parent=35 // pred_check
          %p220 = pneg %p87
        $region42: #{_lambda_.6} parent=35 // pred_check_branch
          %222 = sbr.rel (%p220) target = $region44
        $region43: #{_lambda_.6} parent=35 // pred_region
          %223 = dma.done [#allocation5], 4096
        $region44: #{_lambda_.6} parent=35 // pred_fallthru
          _
        // Predicated region
        $region45: #{_lambda_.6} parent=35 // pred_check
          %p224 = pneg %p108
        $region46: #{_lambda_.6} parent=35 // pred_check_branch
          %226 = sbr.rel (%p224) target = $region48
        $region47: #{_lambda_.6} parent=35 // pred_region
          %227 = dma.done [#allocation5], 32
        $region48: #{_lambda_.6} parent=35 // pred_fallthru
          _
        %p228 = scmp.lt.s32.totalorder %s19, 1
        %s229 = scalar_select %p228, %s19, 1
        %s230 = smul.addr %s229, 2
        %s231 = smul.addr %s230, 4
        %s232 = scalar_lea.vmem %s0, %s231
        %p233 = pneg %p40
        %p234 = pneg %p37
        %s235 = sand.u32 %s53, 1
        %s236 = scalar_lea.sflag [#allocation3], %s235
        %s237 = sand.u32 %s53, 1
        %s238 = smul.addr %s237, 16
        %s239 = scalar_lea.vmem [#allocation2], %s238
        %p240 = pneg %p66
        %p241 = pneg %p63
        %p242 = pneg %p87
        %p243 = pneg %p84
        %p244 = pneg %p108
        %p245 = pneg %p105
        %p246 = pneg %p134
        %p247 = pneg %p131
        %p248 = scmp.lt.s32.totalorder %s19, 1
        %s249 = scalar_select %p248, %s19, 1
        %s250 = smul.addr %s249, 2
        %s251 = smul.addr %s250, 8
        %s252 = scalar_lea.vmem %s4, %s251
        %p253 = scmp.lt.s32.totalorder %s19, 1
        %s254 = scalar_select %p253, %s19, 1
        %s255 = smul.addr %s254, 2
        %s256 = smul.addr %s255, 4
        %s257 = scalar_lea.vmem %s0, %s256
        %p258 = scmp.lt.s32.totalorder %s19, 1
        %s259 = scalar_select %p258, %s19, 1
        %s260 = smul.addr %s259, 2
        %s261 = smul.addr %s260, 8
        %s262 = scalar_lea.vmem %s4, %s261
        %v263 = vld [vmem:[%s257] sm:$0xff]
        %v264 = vld [vmem:[#allocation4] sm:$0xff]
        %v265 = vld [vmem:[#allocation4 + $0x8] sm:$0xff]
        %v266 = vld [vmem:[#allocation4 + $0x10] sm:$0xff]
        %v267 = vld [vmem:[#allocation4 + $0x18] sm:$0xff]
        %v268 = vld [vmem:[#allocation4 + $0x20] sm:$0xff]
        %v269 = vld [vmem:[#allocation4 + $0x28] sm:$0xff]
        %v270 = vld [vmem:[#allocation4 + $0x30] sm:$0xff]
        %v271 = vld [vmem:[#allocation4 + $0x38] sm:$0xff]
        %v272 = vld [vmem:[#allocation4 + $0x40] sm:$0xff]
        %v273 = vld [vmem:[#allocation4 + $0x48] sm:$0xff]
        %v274 = vld [vmem:[#allocation4 + $0x50] sm:$0xff]
        %v275 = vld [vmem:[#allocation4 + $0x58] sm:$0xff]
        %v276 = vld [vmem:[#allocation4 + $0x60] sm:$0xff]
        %v277 = vld [vmem:[#allocation4 + $0x68] sm:$0xff]
        %v278 = vld [vmem:[#allocation4 + $0x70] sm:$0xff]
        %v279 = vld [vmem:[#allocation4 + $0x78] sm:$0xff]
        %v280 = vld [vmem:[#allocation4 + $0x80] sm:$0xff]
        %v281 = vld [vmem:[#allocation4 + $0x88] sm:$0xff]
        %v282 = vld [vmem:[#allocation4 + $0x90] sm:$0xff]
        %v283 = vld [vmem:[#allocation4 + $0x98] sm:$0xff]
        %v284 = vld [vmem:[#allocation4 + $0xa0] sm:$0xff]
        %v285 = vld [vmem:[#allocation4 + $0xa8] sm:$0xff]
        %v286 = vld [vmem:[#allocation4 + $0xb0] sm:$0xff]
        %v287 = vld [vmem:[#allocation4 + $0xb8] sm:$0xff]
        %v288 = vld [vmem:[#allocation4 + $0xc0] sm:$0xff]
        %v289 = vld [vmem:[#allocation4 + $0xc8] sm:$0xff]
        %v290 = vld [vmem:[#allocation4 + $0xd0] sm:$0xff]
        %v291 = vld [vmem:[#allocation4 + $0xd8] sm:$0xff]
        %v292 = vld [vmem:[#allocation4 + $0xe0] sm:$0xff]
        %v293 = vld [vmem:[#allocation4 + $0xe8] sm:$0xff]
        %v294 = vld [vmem:[#allocation4 + $0xf0] sm:$0xff]
        %v295 = vld [vmem:[#allocation4 + $0xf8] sm:$0xff]
        %v296 = vld [vmem:[#allocation6] sm:$0x3]
        %v298 = vlaneseq
        %v299 = vshrl.u32 %v298, 7
        %v300 = vsub.s32 0, %v299
        %v301 = vrot.slane %v296, %v300
        %v302 = vlaneseq
        %v303 = vshrl.u32 %v302, 7
        %v304 = vsub.s32 1, %v303
        %v305 = vrot.slane %v296, %v304
        %v309 = vunpack.c.l.b16 %v263
        %v310 = vunpack.c.h.b16 %v263
        %v311 = vpack.c.b16 %v309, %v309
        %v312 = vpack.c.b16 %v310, %v310
        %v347 = vunpack.c.l.b16 %v264
        %v348 = vunpack.c.h.b16 %v264
        %v349 = vunpack.c.l.b16 %v265
        %v350 = vunpack.c.h.b16 %v265
        %v351 = vunpack.c.l.b16 %v266
        %v352 = vunpack.c.h.b16 %v266
        %v353 = vunpack.c.l.b16 %v267
        %v354 = vunpack.c.h.b16 %v267
        %v355 = vunpack.c.l.b16 %v268
        %v356 = vunpack.c.h.b16 %v268
        %v357 = vunpack.c.l.b16 %v269
        %v358 = vunpack.c.h.b16 %v269
        %v359 = vunpack.c.l.b16 %v270
        %v360 = vunpack.c.h.b16 %v270
        %v361 = vunpack.c.l.b16 %v271
        %v362 = vunpack.c.h.b16 %v271
        %v363 = vunpack.c.l.b16 %v272
        %v364 = vunpack.c.h.b16 %v272
        %v365 = vunpack.c.l.b16 %v273
        %v366 = vunpack.c.h.b16 %v273
        %v367 = vunpack.c.l.b16 %v274
        %v368 = vunpack.c.h.b16 %v274
        %v369 = vunpack.c.l.b16 %v275
        %v370 = vunpack.c.h.b16 %v275
        %v371 = vunpack.c.l.b16 %v276
        %v372 = vunpack.c.h.b16 %v276
        %v373 = vunpack.c.l.b16 %v277
        %v374 = vunpack.c.h.b16 %v277
        %v375 = vunpack.c.l.b16 %v278
        %v376 = vunpack.c.h.b16 %v278
        %v377 = vunpack.c.l.b16 %v279
        %v378 = vunpack.c.h.b16 %v279
        %v379 = vunpack.c.l.b16 %v280
        %v380 = vunpack.c.h.b16 %v280
        %v381 = vunpack.c.l.b16 %v281
        %v382 = vunpack.c.h.b16 %v281
        %v383 = vunpack.c.l.b16 %v282
        %v384 = vunpack.c.h.b16 %v282
        %v385 = vunpack.c.l.b16 %v283
        %v386 = vunpack.c.h.b16 %v283
        %v387 = vunpack.c.l.b16 %v284
        %v388 = vunpack.c.h.b16 %v284
        %v389 = vunpack.c.l.b16 %v285
        %v390 = vunpack.c.h.b16 %v285
        %v391 = vunpack.c.l.b16 %v286
        %v392 = vunpack.c.h.b16 %v286
        %v393 = vunpack.c.l.b16 %v287
        %v394 = vunpack.c.h.b16 %v287
        %v395 = vunpack.c.l.b16 %v288
        %v396 = vunpack.c.h.b16 %v288
        %v397 = vunpack.c.l.b16 %v289
        %v398 = vunpack.c.h.b16 %v289
        %v399 = vunpack.c.l.b16 %v290
        %v400 = vunpack.c.h.b16 %v290
        %v401 = vunpack.c.l.b16 %v291
        %v402 = vunpack.c.h.b16 %v291
        %v403 = vunpack.c.l.b16 %v292
        %v404 = vunpack.c.h.b16 %v292
        %v405 = vunpack.c.l.b16 %v293
        %v406 = vunpack.c.h.b16 %v293
        %v407 = vunpack.c.l.b16 %v294
        %v408 = vunpack.c.h.b16 %v294
        %v409 = vunpack.c.l.b16 %v295
        %v410 = vunpack.c.h.b16 %v295
        %v411 = vpack.c.b16 %v349, %v347
        %v412 = vpack.c.b16 %v350, %v348
        %v413 = vpack.c.b16 %v353, %v351
        %v414 = vpack.c.b16 %v354, %v352
        %v415 = vpack.c.b16 %v357, %v355
        %v416 = vpack.c.b16 %v358, %v356
        %v417 = vpack.c.b16 %v361, %v359
        %v418 = vpack.c.b16 %v362, %v360
        %v419 = vpack.c.b16 %v365, %v363
        %v420 = vpack.c.b16 %v366, %v364
        %v421 = vpack.c.b16 %v369, %v367
        %v422 = vpack.c.b16 %v370, %v368
        %v423 = vpack.c.b16 %v373, %v371
        %v424 = vpack.c.b16 %v374, %v372
        %v425 = vpack.c.b16 %v377, %v375
        %v426 = vpack.c.b16 %v378, %v376
        %v427 = vpack.c.b16 %v381, %v379
        %v428 = vpack.c.b16 %v382, %v380
        %v429 = vpack.c.b16 %v385, %v383
        %v430 = vpack.c.b16 %v386, %v384
        %v431 = vpack.c.b16 %v389, %v387
        %v432 = vpack.c.b16 %v390, %v388
        %v433 = vpack.c.b16 %v393, %v391
        %v434 = vpack.c.b16 %v394, %v392
        %v435 = vpack.c.b16 %v397, %v395
        %v436 = vpack.c.b16 %v398, %v396
        %v437 = vpack.c.b16 %v401, %v399
        %v438 = vpack.c.b16 %v402, %v400
        %v439 = vpack.c.b16 %v405, %v403
        %v440 = vpack.c.b16 %v406, %v404
        %v441 = vpack.c.b16 %v409, %v407
        %v442 = vpack.c.b16 %v410, %v408
        %475 = vmatprep.subr.bf16.mxu0 %v426
        %476 = vmatpush1.bf16.msra.mxu0 %v425
        %477 = vmatprep.subr.bf16.mxu0 %v424
        %478 = vmatpush1.bf16.msra.mxu0 %v423
        %479 = vmatprep.subr.bf16.mxu0 %v422
        %480 = vmatpush1.bf16.msra.mxu0 %v421
        %481 = vmatprep.subr.bf16.mxu0 %v420
        %482 = vmatpush1.bf16.msra.mxu0 %v419
        %483 = vmatprep.subr.bf16.mxu0 %v418
        %484 = vmatpush1.bf16.msra.mxu0 %v417
        %485 = vmatprep.subr.bf16.mxu0 %v416
        %486 = vmatpush1.bf16.msra.mxu0 %v415
        %487 = vmatprep.subr.bf16.mxu0 %v414
        %488 = vmatpush1.bf16.msra.mxu0 %v413
        %489 = vmatprep.subr.bf16.mxu0 %v412
        %490 = vmatpush1.bf16.msra.mxu0 %v411
        %491 = vmatprep.subr.bf16.mxu0 %v442
        %492 = vmatpush2.bf16.msra.mxu0 %v441
        %493 = vmatprep.subr.bf16.mxu0 %v440
        %494 = vmatpush2.bf16.msra.mxu0 %v439
        %495 = vmatprep.subr.bf16.mxu0 %v438
        %496 = vmatpush2.bf16.msra.mxu0 %v437
        %497 = vmatprep.subr.bf16.mxu0 %v436
        %498 = vmatpush2.bf16.msra.mxu0 %v435
        %499 = vmatprep.subr.bf16.mxu0 %v434
        %500 = vmatpush2.bf16.msra.mxu0 %v433
        %501 = vmatprep.subr.bf16.mxu0 %v432
        %502 = vmatpush2.bf16.msra.mxu0 %v431
        %503 = vmatprep.subr.bf16.mxu0 %v430
        %504 = vmatpush2.bf16.msra.mxu0 %v429
        %505 = vmatprep.subr.bf16.mxu0 %v428
        %506 = vmatpush2.bf16.msra.mxu0 %v427
        %507 = vmatprep.mubr.bf16.mxu0 %v312
        %508 = vmatmul.mubr.bf16.gmra.mxu0 %v311
        %v509 = vpop.f32.mrf.mxu0
        %v510 = vadd.f32 %v301, %v509
        %v511 = vpop.f32.mrf.mxu0
        %v512 = vadd.f32 %v305, %v511
        %v513 = vpop.f32.mrf.mxu0
        %v514 = vpop.f32.mrf.mxu0
        %515 = vdwg.mxu0
        %v516 = vld [vmem:[%s215] sm:$0xff]
        %v517 = vld [vmem:[%s215 + $0x8] sm:$0xff]
        %v518 = vadd.f32 %v510, %v516
        %v519 = vadd.f32 %v512, %v517
        %520 = vst [vmem:[%s262] sm:$0xff] %v518
        %521 = vst [vmem:[%s262 + $0x8] sm:$0xff] %v519
        %p522 = scmp.lt.s32.totalorder %s19, 1
        %s523 = scalar_select %p522, %s19, 1
        %s524 = smul.addr %s523, 2
        %s525 = smul.addr %s524, 8
        %s526 = scalar_lea.vmem %s4, %s525
        // Predicated region
        $region49: #{_lambda_.6} parent=35 // pred_check
          %p527 = pneg %p131
        $region50: #{_lambda_.6} parent=35 // pred_check_branch
          %529 = sbr.rel (%p527) target = $region52
        $region51: #{_lambda_.6} parent=35 // pred_region
          _
        $region52: #{_lambda_.6} parent=35 // pred_fallthru
          _
      $region36: #{_lambda_.6} parent=5 // pred_fallthru
        _
      %p530 = scmp.le.s32.totalorder 2, %s14
      // Predicated region
      $region53: #{_lambda_.6} parent=5 // pred_check
        %p531 = pneg %p530
      $region54: #{_lambda_.6} parent=5 // pred_check_branch
        %533 = sbr.rel (%p531) target = $region56
      $region55: #{_lambda_.6} parent=5 // pred_region
        %s534 = ssub.s32 %s14, 2
        // Predicated region
        $region57: #{_lambda_.6} parent=55 // pred_check
          %p535 = pneg %p137
        $region58: #{_lambda_.6} parent=55 // pred_check_branch
          %537 = sbr.rel (%p535) target = $region60
        $region59: #{_lambda_.6} parent=55 // pred_region
          %p538 = scmp.lt.s32.totalorder %s20, 1
          %s539 = scalar_select %p538, %s20, 1
          %s540 = smul.addr %s539, 2
          %s541 = smul.addr %s540, 8
          %s542 = scalar_lea.vmem %s4, %s541
        $region60: #{_lambda_.6} parent=55 // pred_fallthru
          _
      $region56: #{_lambda_.6} parent=5 // pred_fallthru
        _
    $region6: #{_lambda_.6} parent=1 // loop_footer
      %s18 = sadd.s32 1, %s14
    $region7: #{_lambda_.6} parent=1 // loop_footer_branch
      %13 = sbr.rel target = $region3
    $region8: #{_lambda_.6} parent=1 // loop_exit
      _
    %543 = vsyncpa [#allocation3], 1
    %s544 = scalar_lea.sflag [#allocation3], 1
    %545 = vsyncpa %s544, 1
    %546 = vsyncpa [#allocation5], 1

// kernel: _lambda_.5
$region0: #{_lambda_.5}
  #allocation0 [shape = 'u32[]', space=smem, size = 0x4, offset = 0x4, fixed_abs, tag = 'smem constant byte address 0x4 - core index']
  #allocation1 [shape = 'u32[144,128]{1,0:T(1,128)}', space=vmem, size = 0x12000, scoped, tag = 'internal scratch']
  %s0 = inlined_call_operand.vmem [shape: bf16[16,768], index: 0, kind: input, shape index: {}, may-alias: {0,1,2}]
  %s1 = inlined_call_operand.vmem [shape: bf16[16,768], index: 1, kind: input, shape index: {}, may-alias: {0,1,2}]
  %s2 = inlined_call_operand.vmem [shape: bf16[16,768], index: 2, kind: input, shape index: {}, may-alias: {0,1,2}]
  %s3 = inlined_call_operand.hbm [shape: f32[2,1,8], index: 3, kind: input, shape index: {}]
  %s4 = inlined_call_operand.vmem [shape: bf16[16,256], index: 4, kind: output, shape index: {0}]
  %s5 = inlined_call_operand.hbm [shape: f32[2,4,8,8], index: 5, kind: output, shape index: {1}]
  %6 = xla_tuple %s4, %s5
  %s7 = sld [smem:[#allocation0]]
  $region61: #{_lambda_.5} parent=0
    _
  %s9 = ssub.s32 1, %s7
  %s10 = scalar_select 0, %s9, %s7
  $region1: #{_lambda_.5} parent=0
    #allocation2 [shape = 'u8[1024]{0}', space=vmem, size = 0x400, scoped, tag = 'input window, operand 3']
    #allocation3 [shape = 's32[2]{0}', space=sflag, size = 0x8, scoped, tag = 'scoped memory for _lambda_.5']
    #allocation4 [shape = 's32[2]{0}', space=sflag, size = 0x8, scoped, tag = 'scoped memory for _lambda_.5']
    #allocation5 [shape = 'u8[16384]{0}', space=vmem, size = 0x4000, scoped, tag = 'output window, operand 1']
    %11 = vsyncpa [#allocation3], 0
    %s12 = scalar_lea.sflag [#allocation3], 1
    %13 = vsyncpa %s12, 0
    %14 = vsyncpa [#allocation4], 0
    %s15 = scalar_lea.sflag [#allocation4], 1
    %16 = vsyncpa %s15, 0
    loop: start=0, step=1, limit=6
    $region2: #{_lambda_.5} parent=1 // loop_pre_header
      _
    $region3: #{_lambda_.5} parent=1 // loop_header
      %s18 = sphi 0, %s22
      %p19 = scmp.ge.s32.totalorder %s18, 6
      %s25 = sphi 0, %s37
      %s26 = sphi 0, %s33
      %s27 = sphi 0, %s25
      %s28 = sphi 0, %s26
      %s29 = sphi 0, %s27
      %s30 = sphi 0, %s28
      %s42 = sphi 0, %s44
      %s45 = sphi 0, %s42
      %s46 = sphi 0, %s45
      %s62 = sphi 0, %s46
      %s72 = sphi 0, %s74
      %s75 = sphi 0, %s72
      %s76 = sphi 0, %s75
      %s92 = sphi 0, %s76
      %s102 = sphi 0, %s104
      %s105 = sphi 0, %s102
      %s106 = sphi 0, %s105
      %s122 = sphi 0, %s106
      %s128 = sphi 0, %s130
      %s131 = sphi 0, %s128
      %s132 = sphi 0, %s131
      %s148 = sphi 0, %s132
      %s156 = sphi 0, %s158
      %s159 = sphi 0, %s156
      %s160 = sphi 0, %s159
      %s176 = sphi 0, %s160
      %s184 = sphi 0, %s186
      %s187 = sphi 0, %s184
      %s188 = sphi 0, %s187
      %s204 = sphi 0, %s188
    $region4: #{_lambda_.5} parent=1 // loop_header_branch
      %21 = sbr.rel (%p19) target = $region8
    $region5: #{_lambda_.5} parent=1 // loop_body
      %s23 = ssub.s32 %s18, 1
      %s24 = ssub.s32 %s18, 2
      %s31 = sadd.s32 1, %s26
      %p32 = scmp.ge.s32.totalorder %s31, 2
      %s33 = scalar_select %p32, 0, %s31
      %s34 = sadd.s32 1, %s25
      %s35 = scalar_select %p32, %s34, %s25
      %p36 = scmp.ge.s32.totalorder %s35, 2
      %s37 = scalar_select %p36, 0, %s35
      %s38 = ssub.s32 %s25, %s37
      %s39 = ssub.s32 %s26, %s33
      %s40 = sor.u32 %s38, %s39
      %p41 = scmp.eq.s32.totalorder %s40, 0
      %s43 = sadd.s32 %s42, 1
      %s44 = scalar_select %p41, %s42, %s43
      %p47 = pneg %p41
      %p48 = scmp.eq.s32.totalorder %s18, 3
      %p49 = por %p47, %p48
      %p50 = scmp.ne.s32.totalorder %s42, %s45
      %p51 = scmp.eq.s32.totalorder %s18, 0
      %p52 = por %p50, %p51
      %p53 = scmp.ne.s32.totalorder %s42, %s45
      %p54 = scmp.eq.s32.totalorder %s23, 3
      %p55 = por %p53, %p54
      %p56 = scmp.ne.s32.totalorder %s45, %s46
      %p57 = scmp.eq.s32.totalorder %s23, 0
      %p58 = por %p56, %p57
      %p59 = scmp.ne.s32.totalorder %s45, %s46
      %p60 = scmp.eq.s32.totalorder %s24, 3
      %p61 = por %p59, %p60
      %p63 = scmp.ne.s32.totalorder %s46, %s62
      %p64 = scmp.eq.s32.totalorder %s24, 0
      %p65 = por %p63, %p64
      %s66 = sadd.s32 %s26, 2
      %s67 = sadd.s32 %s33, 2
      %s68 = ssub.s32 %s25, %s37
      %s69 = ssub.s32 %s66, %s67
      %s70 = sor.u32 %s68, %s69
      %p71 = scmp.eq.s32.totalorder %s70, 0
      %s73 = sadd.s32 %s72, 1
      %s74 = scalar_select %p71, %s72, %s73
      %p77 = pneg %p71
      %p78 = scmp.eq.s32.totalorder %s18, 3
      %p79 = por %p77, %p78
      %p80 = scmp.ne.s32.totalorder %s72, %s75
      %p81 = scmp.eq.s32.totalorder %s18, 0
      %p82 = por %p80, %p81
      %p83 = scmp.ne.s32.totalorder %s72, %s75
      %p84 = scmp.eq.s32.totalorder %s23, 3
      %p85 = por %p83, %p84
      %p86 = scmp.ne.s32.totalorder %s75, %s76
      %p87 = scmp.eq.s32.totalorder %s23, 0
      %p88 = por %p86, %p87
      %p89 = scmp.ne.s32.totalorder %s75, %s76
      %p90 = scmp.eq.s32.totalorder %s24, 3
      %p91 = por %p89, %p90
      %p93 = scmp.ne.s32.totalorder %s76, %s92
      %p94 = scmp.eq.s32.totalorder %s24, 0
      %p95 = por %p93, %p94
      %s96 = sadd.s32 %s26, 4
      %s97 = sadd.s32 %s33, 4
      %s98 = ssub.s32 %s25, %s37
      %s99 = ssub.s32 %s96, %s97
      %s100 = sor.u32 %s98, %s99
      %p101 = scmp.eq.s32.totalorder %s100, 0
      %s103 = sadd.s32 %s102, 1
      %s104 = scalar_select %p101, %s102, %s103
      %p107 = pneg %p101
      %p108 = scmp.eq.s32.totalorder %s18, 3
      %p109 = por %p107, %p108
      %p110 = scmp.ne.s32.totalorder %s102, %s105
      %p111 = scmp.eq.s32.totalorder %s18, 0
      %p112 = por %p110, %p111
      %p113 = scmp.ne.s32.totalorder %s102, %s105
      %p114 = scmp.eq.s32.totalorder %s23, 3
      %p115 = por %p113, %p114
      %p116 = scmp.ne.s32.totalorder %s105, %s106
      %p117 = scmp.eq.s32.totalorder %s23, 0
      %p118 = por %p116, %p117
      %p119 = scmp.ne.s32.totalorder %s105, %s106
      %p120 = scmp.eq.s32.totalorder %s24, 3
      %p121 = por %p119, %p120
      %p123 = scmp.ne.s32.totalorder %s106, %s122
      %p124 = scmp.eq.s32.totalorder %s24, 0
      %p125 = por %p123, %p124
      %s126 = ssub.s32 %s25, %s37
      %p127 = scmp.eq.s32.totalorder %s126, 0
      %s129 = sadd.s32 %s128, 1
      %s130 = scalar_select %p127, %s128, %s129
      %p133 = pneg %p127
      %p134 = scmp.eq.s32.totalorder %s18, 3
      %p135 = por %p133, %p134
      %p136 = scmp.ne.s32.totalorder %s128, %s131
      %p137 = scmp.eq.s32.totalorder %s18, 0
      %p138 = por %p136, %p137
      %p139 = scmp.ne.s32.totalorder %s128, %s131
      %p140 = scmp.eq.s32.totalorder %s23, 3
      %p141 = por %p139, %p140
      %p142 = scmp.ne.s32.totalorder %s131, %s132
      %p143 = scmp.eq.s32.totalorder %s23, 0
      %p144 = por %p142, %p143
      %p145 = scmp.ne.s32.totalorder %s131, %s132
      %p146 = scmp.eq.s32.totalorder %s24, 3
      %p147 = por %p145, %p146
      %p149 = scmp.ne.s32.totalorder %s132, %s148
      %p150 = scmp.eq.s32.totalorder %s24, 0
      %p151 = por %p149, %p150
      %s152 = ssub.s32 %s25, %s37
      %s153 = ssub.s32 %s26, %s33
      %s154 = sor.u32 %s152, %s153
      %p155 = scmp.eq.s32.totalorder %s154, 0
      %s157 = sadd.s32 %s156, 1
      %s158 = scalar_select %p155, %s156, %s157
      %p161 = pneg %p155
      %p162 = scmp.eq.s32.totalorder %s18, 3
      %p163 = por %p161, %p162
      %p164 = scmp.ne.s32.totalorder %s156, %s159
      %p165 = scmp.eq.s32.totalorder %s18, 0
      %p166 = por %p164, %p165
      %p167 = scmp.ne.s32.totalorder %s156, %s159
      %p168 = scmp.eq.s32.totalorder %s23, 3
      %p169 = por %p167, %p168
      %p170 = scmp.ne.s32.totalorder %s159, %s160
      %p171 = scmp.eq.s32.totalorder %s23, 0
      %p172 = por %p170, %p171
      %p173 = scmp.ne.s32.totalorder %s159, %s160
      %p174 = scmp.eq.s32.totalorder %s24, 3
      %p175 = por %p173, %p174
      %p177 = scmp.ne.s32.totalorder %s160, %s176
      %p178 = scmp.eq.s32.totalorder %s24, 0
      %p179 = por %p177, %p178
      %s180 = ssub.s32 %s25, %s37
      %s181 = ssub.s32 %s26, %s33
      %s182 = sor.u32 %s180, %s181
      %p183 = scmp.eq.s32.totalorder %s182, 0
      %s185 = sadd.s32 %s184, 1
      %s186 = scalar_select %p183, %s184, %s185
      %p189 = pneg %p183
      %p190 = scmp.eq.s32.totalorder %s18, 3
      %p191 = por %p189, %p190
      %p192 = scmp.ne.s32.totalorder %s184, %s187
      %p193 = scmp.eq.s32.totalorder %s18, 0
      %p194 = por %p192, %p193
      %p195 = scmp.ne.s32.totalorder %s184, %s187
      %p196 = scmp.eq.s32.totalorder %s23, 3
      %p197 = por %p195, %p196
      %p198 = scmp.ne.s32.totalorder %s187, %s188
      %p199 = scmp.eq.s32.totalorder %s23, 0
      %p200 = por %p198, %p199
      %p201 = scmp.ne.s32.totalorder %s187, %s188
      %p202 = scmp.eq.s32.totalorder %s24, 3
      %p203 = por %p201, %p202
      %p205 = scmp.ne.s32.totalorder %s188, %s204
      %p206 = scmp.eq.s32.totalorder %s24, 0
      %p207 = por %p205, %p206
      %p208 = scmp.le.s32.totalorder 1, %s18
      %p209 = scmp.lt.s32.totalorder %s18, 5
      %p210 = pnand %p208, %p209
      %p211 = pneg %p210
      // Predicated region
      $region9: #{_lambda_.5} parent=5 // pred_check
        _
      $region10: #{_lambda_.5} parent=5 // pred_check_branch
        %213 = sbr.rel (%p210) target = $region12
      $region11: #{_lambda_.5} parent=5 // pred_region
        %s214 = ssub.s32 %s18, 1
      $region12: #{_lambda_.5} parent=5 // pred_fallthru
        _
      %p215 = scmp.lt.s32.totalorder %s18, 4
      // Predicated region
      $region13: #{_lambda_.5} parent=5 // pred_check
        %p216 = pneg %p215
      $region14: #{_lambda_.5} parent=5 // pred_check_branch
        %218 = sbr.rel (%p216) target = $region16
      $region15: #{_lambda_.5} parent=5 // pred_region
        // Predicated region
        $region17: #{_lambda_.5} parent=15 // pred_check
          %p219 = pneg %p52
        $region18: #{_lambda_.5} parent=15 // pred_check_branch
          %221 = sbr.rel (%p219) target = $region20
        $region19: #{_lambda_.5} parent=15 // pred_region
          %p222 = scmp.lt.s32.totalorder %s25, 1
          %s223 = scalar_select %p222, %s25, 1
          %p224 = scmp.lt.s32.totalorder %s26, 5
          %s225 = scalar_select %p224, %s26, 5
          %s226 = smul.addr %s223, 6
          %s227 = sadd.s32 %s225, %s226
          %s228 = smul.addr %s227, 4
          %s229 = scalar_lea.vmem %s0, %s228
        $region20: #{_lambda_.5} parent=15 // pred_fallthru
          _
        // Predicated region
        $region21: #{_lambda_.5} parent=15 // pred_check
          %p230 = pneg %p82
        $region22: #{_lambda_.5} parent=15 // pred_check_branch
          %232 = sbr.rel (%p230) target = $region24
        $region23: #{_lambda_.5} parent=15 // pred_region
          %s233 = sadd.s32 %s26, 2
          %p234 = scmp.lt.s32.totalorder %s25, 1
          %s235 = scalar_select %p234, %s25, 1
          %p236 = scmp.lt.s32.totalorder %s233, 5
          %s237 = scalar_select %p236, %s233, 5
          %s238 = smul.addr %s235, 6
          %s239 = sadd.s32 %s237, %s238
          %s240 = smul.addr %s239, 4
          %s241 = scalar_lea.vmem %s1, %s240
          %s242 = sadd.s32 %s26, 2
        $region24: #{_lambda_.5} parent=15 // pred_fallthru
          _
        // Predicated region
        $region25: #{_lambda_.5} parent=15 // pred_check
          %p243 = pneg %p112
        $region26: #{_lambda_.5} parent=15 // pred_check_branch
          %245 = sbr.rel (%p243) target = $region28
        $region27: #{_lambda_.5} parent=15 // pred_region
          %s246 = sadd.s32 %s26, 4
          %p247 = scmp.lt.s32.totalorder %s25, 1
          %s248 = scalar_select %p247, %s25, 1
          %p249 = scmp.lt.s32.totalorder %s246, 5
          %s250 = scalar_select %p249, %s246, 5
          %s251 = smul.addr %s248, 6
          %s252 = sadd.s32 %s250, %s251
          %s253 = smul.addr %s252, 4
          %s254 = scalar_lea.vmem %s2, %s253
          %s255 = sadd.s32 %s26, 4
        $region28: #{_lambda_.5} parent=15 // pred_fallthru
          _
        // Predicated region
        $region29: #{_lambda_.5} parent=15 // pred_check
          %p256 = pneg %p138
        $region30: #{_lambda_.5} parent=15 // pred_check_branch
          %258 = sbr.rel (%p256) target = $region32
        $region31: #{_lambda_.5} parent=15 // pred_region
          %s259 = sand.u32 %s128, 1
          %s260 = scalar_lea.sflag [#allocation3], %s259
          %s261 = sand.u32 %s128, 1
          %s262 = scalar_lea.vmem [#allocation2], %s261
          %s264 = ssub.s32 16, 16
          %265 = vsyncadd %s260, %s264
          %s266 = smul.addr %s25, 16
          %s267 = scalar_lea.hbm %s3, %s266
          %s269 = sshll.u32 %s262, 4
          %s270 = int_to_ptr.vmem [resolvable:$true] %s269
          %272 = dma.hbm_to_vmem [thread:$0]  %s267, 16, %s270, %s260
        $region32: #{_lambda_.5} parent=15 // pred_fallthru
          _
      $region16: #{_lambda_.5} parent=5 // pred_fallthru
        _
      %p273 = scmp.le.s32.totalorder 1, %s18
      %p274 = scmp.lt.s32.totalorder %s18, 5
      %p275 = pnand %p273, %p274
      %p276 = pneg %p275
      // Predicated region
      $region33: #{_lambda_.5} parent=5 // pred_check
        _
      $region34: #{_lambda_.5} parent=5 // pred_check_branch
        %278 = sbr.rel (%p275) target = $region36
      $region35: #{_lambda_.5} parent=5 // pred_region
        %s279 = ssub.s32 %s18, 1
        %s280 = sand.u32 %s131, 1
        %s281 = scalar_lea.sflag [#allocation3], %s280
        %s282 = sand.u32 %s131, 1
        %s283 = scalar_lea.vmem [#allocation2], %s282
        // Predicated region
        $region37: #{_lambda_.5} parent=35 // pred_check
          %p284 = pneg %p144
        $region38: #{_lambda_.5} parent=35 // pred_check_branch
          %286 = sbr.rel (%p284) target = $region40
        $region39: #{_lambda_.5} parent=35 // pred_region
          %287 = dma.done %s281, 16
        $region40: #{_lambda_.5} parent=35 // pred_fallthru
          _
        %p288 = scmp.lt.s32.totalorder %s27, 1
        %s289 = scalar_select %p288, %s27, 1
        %p290 = scmp.lt.s32.totalorder %s28, 5
        %s291 = scalar_select %p290, %s28, 5
        %s292 = smul.addr %s289, 6
        %s293 = sadd.s32 %s291, %s292
        %s294 = smul.addr %s293, 4
        %s295 = scalar_lea.vmem %s0, %s294
        %p296 = pneg %p58
        %p297 = pneg %p55
        %s298 = sadd.s32 %s28, 2
        %p299 = scmp.lt.s32.totalorder %s27, 1
        %s300 = scalar_select %p299, %s27, 1
        %p301 = scmp.lt.s32.totalorder %s298, 5
        %s302 = scalar_select %p301, %s298, 5
        %s303 = smul.addr %s300, 6
        %s304 = sadd.s32 %s302, %s303
        %s305 = smul.addr %s304, 4
        %s306 = scalar_lea.vmem %s1, %s305
        %p307 = pneg %p88
        %p308 = pneg %p85
        %s309 = sadd.s32 %s28, 4
        %p310 = scmp.lt.s32.totalorder %s27, 1
        %s311 = scalar_select %p310, %s27, 1
        %p312 = scmp.lt.s32.totalorder %s309, 5
        %s313 = scalar_select %p312, %s309, 5
        %s314 = smul.addr %s311, 6
        %s315 = sadd.s32 %s313, %s314
        %s316 = smul.addr %s315, 4
        %s317 = scalar_lea.vmem %s2, %s316
        %p318 = pneg %p118
        %p319 = pneg %p115
        %s320 = sand.u32 %s131, 1
        %s321 = scalar_lea.sflag [#allocation3], %s320
        %s322 = sand.u32 %s131, 1
        %s323 = scalar_lea.vmem [#allocation2], %s322
        %p324 = pneg %p144
        %p325 = pneg %p141
        %p326 = pneg %p172
        %p327 = pneg %p169
        %p328 = scmp.lt.s32.totalorder %s27, 1
        %s329 = scalar_select %p328, %s27, 1
        %p330 = scmp.lt.s32.totalorder %s28, 1
        %s331 = scalar_select %p330, %s28, 1
        %s332 = smul.addr %s329, 2
        %s333 = sadd.s32 %s331, %s332
        %s334 = smul.addr %s333, 4
        %s335 = scalar_lea.vmem %s4, %s334
        %p336 = pneg %p200
        %p337 = pneg %p197
        %s338 = sand.u32 %s187, 1
        %s339 = scalar_lea.sflag [#allocation4], %s338
        %s340 = sand.u32 %s187, 1
        %s341 = smul.addr %s340, 16
        %s342 = scalar_lea.vmem [#allocation5], %s341
        %p343 = scmp.lt.s32.totalorder %s27, 1
        %s344 = scalar_select %p343, %s27, 1
        %p345 = scmp.lt.s32.totalorder %s28, 5
        %s346 = scalar_select %p345, %s28, 5
        %s347 = smul.addr %s344, 6
        %s348 = sadd.s32 %s346, %s347
        %s349 = smul.addr %s348, 4
        %s350 = scalar_lea.vmem %s0, %s349
        %s351 = sadd.s32 %s28, 2
        %p352 = scmp.lt.s32.totalorder %s27, 1
        %s353 = scalar_select %p352, %s27, 1
        %p354 = scmp.lt.s32.totalorder %s351, 5
        %s355 = scalar_select %p354, %s351, 5
        %s356 = smul.addr %s353, 6
        %s357 = sadd.s32 %s355, %s356
        %s358 = smul.addr %s357, 4
        %s359 = scalar_lea.vmem %s1, %s358
        %s360 = sadd.s32 %s28, 2
        %s361 = sadd.s32 %s28, 4
        %p362 = scmp.lt.s32.totalorder %s27, 1
        %s363 = scalar_select %p362, %s27, 1
        %p364 = scmp.lt.s32.totalorder %s361, 5
        %s365 = scalar_select %p364, %s361, 5
        %s366 = smul.addr %s363, 6
        %s367 = sadd.s32 %s365, %s366
        %s368 = smul.addr %s367, 4
        %s369 = scalar_lea.vmem %s2, %s368
        %s370 = sadd.s32 %s28, 4
        %p371 = scmp.lt.s32.totalorder %s27, 1
        %s372 = scalar_select %p371, %s27, 1
        %p373 = scmp.lt.s32.totalorder %s28, 1
        %s374 = scalar_select %p373, %s28, 1
        %s375 = smul.addr %s372, 2
        %s376 = sadd.s32 %s374, %s375
        %s377 = smul.addr %s376, 4
        %s378 = scalar_lea.vmem %s4, %s377
        %s379 = smul.u32 2, %s28
        %v381 = vld [vmem:[%s283] sm:$0x1]
        %v382 = vld [vmem:[%s350] sm:$0xf]
        %v383 = vld [vmem:[%s359] sm:$0xf]
        %v384 = vld [vmem:[%s369] sm:$0xf]
        %vm385 = vcmask 523264
        %v387 = vsel %vm385, %v382, 0
        %v390 = vsel %vm385, %v383, 0
        %392 = vmatprep.subr.bf16.mxu0 0
        %393 = vmatpush1.bf16.xpose.msra.mxu0 0
        %394 = vmatprep.subr.bf16.mxu0 0
        %395 = vmatpush1.bf16.xpose.msra.mxu0 0
        %396 = vmatprep.subr.bf16.mxu0 0
        %397 = vmatpush1.bf16.xpose.msra.mxu0 0
        %398 = vmatprep.subr.bf16.mxu0 0
        %399 = vmatpush1.bf16.xpose.msra.mxu0 0
        %400 = vmatprep.subr.bf16.mxu0 0
        %401 = vmatpush1.bf16.xpose.msra.mxu0 0
        %402 = vmatprep.subr.bf16.mxu0 0
        %403 = vmatpush1.bf16.xpose.msra.mxu0 0
        %404 = vmatprep.subr.bf16.mxu0 0
        %405 = vmatpush1.bf16.xpose.msra.mxu0 0
        %406 = vmatprep.subr.bf16.mxu0 0
        %407 = vmatpush1.bf16.xpose.msra.mxu0 %v390
        %408 = vmatprep.subr.bf16.mxu0 0
        %409 = vmatpush2.bf16.xpose.msra.mxu0 0
        %410 = vmatprep.subr.bf16.mxu0 0
        %411 = vmatpush2.bf16.xpose.msra.mxu0 0
        %412 = vmatprep.subr.bf16.mxu0 0
        %413 = vmatpush2.bf16.xpose.msra.mxu0 0
        %414 = vmatprep.subr.bf16.mxu0 0
        %415 = vmatpush2.bf16.xpose.msra.mxu0 0
        %416 = vmatprep.subr.bf16.mxu0 0
        %417 = vmatpush2.bf16.xpose.msra.mxu0 0
        %418 = vmatprep.subr.bf16.mxu0 0
        %419 = vmatpush2.bf16.xpose.msra.mxu0 0
        %420 = vmatprep.subr.bf16.mxu0 0
        %421 = vmatpush2.bf16.xpose.msra.mxu0 0
        %422 = vmatprep.subr.bf16.mxu0 0
        %423 = vmatpush2.bf16.xpose.msra.mxu0 0
        %424 = vmatprep.mubr.bf16.mxu0 0
        %425 = vmatmul.mubr.bf16.gmra.mxu0 %v387
        %v426 = vpop.f32.mrf.mxu0
        %v427 = vadd.f32 0.0, %v426
        %v428 = vpop.f32.mrf.mxu0
        %v429 = vpop.f32.mrf.mxu0
        %v430 = vpop.f32.mrf.mxu0
        %431 = vdwg.mxu0
        %v432 = vmul.f32 %v427, 0.125
        %vm433 = vcmp.eq.f32.partialorder %v381, 0.0
        %v434 = vsel %vm433, 1, 0
        %v435 = vlaneseq
        %v436 = vshrl.u32 %v435, 7
        %v437 = vsub.s32 0, %v436
        %v438 = vrot.slane %v434, %v437
        %vm439 = vcmp.eq.s32.totalorder %v438, 1
        %v440 = vsel %vm439, -1e+09, %v432
        %vm441 = vcmask 64512
        %v442 = vsel %vm441, %v440, -inf
        %443 = vmax.xlane.f32.xlu0 %v442
        %v444 = vpop.xlane.xlu0 %443
        %v445 = vsub.f32 %v440, %v444
        %v446 = vmul.f32 %v445, 1.442695
        %v447 = vpow.pop %v446
        %v448 = vsel %vm441, %v447, 0.0
        %449 = vadd.xlane.f32.xlu0 %v448
        %v450 = vpop.xlane.xlu0 %449
        %v451 = vrcp.pop %v450
        %v452 = vmul.f32 %v447, %v451
        %v453 = vpack.c.bf16 %v452, %v452
        %v455 = vsel %vm441, %v453, 0
        %vm457 = vcmask 1043456
        %v459 = vsel %vm457, %v384, 0
        %461 = vmatprep.subr.bf16.mxu0 0
        %462 = vmatpush1.bf16.msra.mxu0 0
        %463 = vmatprep.subr.bf16.mxu0 0
        %464 = vmatpush1.bf16.msra.mxu0 0
        %465 = vmatprep.subr.bf16.mxu0 0
        %466 = vmatpush1.bf16.msra.mxu0 0
        %467 = vmatprep.subr.bf16.mxu0 0
        %468 = vmatpush1.bf16.msra.mxu0 0
        %469 = vmatprep.subr.bf16.mxu0 0
        %470 = vmatpush1.bf16.msra.mxu0 0
        %471 = vmatprep.subr.bf16.mxu0 0
        %472 = vmatpush1.bf16.msra.mxu0 0
        %473 = vmatprep.subr.bf16.mxu0 0
        %474 = vmatpush1.bf16.msra.mxu0 0
        %475 = vmatprep.subr.bf16.mxu0 0
        %476 = vmatpush1.bf16.msra.mxu0 %v459
        %477 = vmatprep.subr.bf16.mxu0 0
        %478 = vmatpush2.bf16.msra.mxu0 0
        %479 = vmatprep.subr.bf16.mxu0 0
        %480 = vmatpush2.bf16.msra.mxu0 0
        %481 = vmatprep.subr.bf16.mxu0 0
        %482 = vmatpush2.bf16.msra.mxu0 0
        %483 = vmatprep.subr.bf16.mxu0 0
        %484 = vmatpush2.bf16.msra.mxu0 0
        %485 = vmatprep.subr.bf16.mxu0 0
        %486 = vmatpush2.bf16.msra.mxu0 0
        %487 = vmatprep.subr.bf16.mxu0 0
        %488 = vmatpush2.bf16.msra.mxu0 0
        %489 = vmatprep.subr.bf16.mxu0 0
        %490 = vmatpush2.bf16.msra.mxu0 0
        %491 = vmatprep.subr.bf16.mxu0 0
        %492 = vmatpush2.bf16.msra.mxu0 0
        %493 = vmatprep.mubr.bf16.mxu0 0
        %494 = vmatmul.mubr.bf16.gmra.mxu0 %v455
        %v495 = vpop.f32.mrf.mxu0
        %v496 = vadd.f32 0.0, %v495
        %v497 = vpop.f32.mrf.mxu0
        %v498 = vpop.f32.mrf.mxu0
        %v499 = vpop.f32.mrf.mxu0
        %500 = vdwg.mxu0
        %v501 = vpack.c.bf16 %v496, %v496
        %vm502 = vcmask 519168
        %503 = vst.msk [vmem:[%s378] sm:$0xf] %vm502, %v501
        %504 = vst.msk [vmem:[%s342] sm:$0xff] %vm441, %v452
        %v505 = vld [vmem:[%s350] sm:$0xf]
        %v506 = vld [vmem:[%s359] sm:$0xf]
        %v507 = vld [vmem:[%s369] sm:$0xf]
        %v509 = vunpack.c.l.b16 %v505
        %v510 = vpack.c.b16 %v509, %v509
        %511 = vrot.lane.b32.xlu0 %v510, 64
        %v512 = vpop.permute.xlu0 %511
        %v514 = vunpack.c.l.b16 %v506
        %v515 = vpack.c.b16 %v514, %v514
        %516 = vrot.lane.b32.xlu0 %v515, 64
        %v517 = vpop.permute.xlu0 %516
        %v519 = vsel %vm385, %v512, 0
        %v522 = vsel %vm385, %v517, 0
        %524 = vmatprep.subr.bf16.mxu0 0
        %525 = vmatpush1.bf16.xpose.msra.mxu0 0
        %526 = vmatprep.subr.bf16.mxu0 0
        %527 = vmatpush1.bf16.xpose.msra.mxu0 0
        %528 = vmatprep.subr.bf16.mxu0 0
        %529 = vmatpush1.bf16.xpose.msra.mxu0 0
        %530 = vmatprep.subr.bf16.mxu0 0
        %531 = vmatpush1.bf16.xpose.msra.mxu0 0
        %532 = vmatprep.subr.bf16.mxu0 0
        %533 = vmatpush1.bf16.xpose.msra.mxu0 0
        %534 = vmatprep.subr.bf16.mxu0 0
        %535 = vmatpush1.bf16.xpose.msra.mxu0 0
        %536 = vmatprep.subr.bf16.mxu0 0
        %537 = vmatpush1.bf16.xpose.msra.mxu0 0
        %538 = vmatprep.subr.bf16.mxu0 0
        %539 = vmatpush1.bf16.xpose.msra.mxu0 %v522
        %540 = vmatprep.subr.bf16.mxu0 0
        %541 = vmatpush2.bf16.xpose.msra.mxu0 0
        %542 = vmatprep.subr.bf16.mxu0 0
        %543 = vmatpush2.bf16.xpose.msra.mxu0 0
        %544 = vmatprep.subr.bf16.mxu0 0
        %545 = vmatpush2.bf16.xpose.msra.mxu0 0
        %546 = vmatprep.subr.bf16.mxu0 0
        %547 = vmatpush2.bf16.xpose.msra.mxu0 0
        %548 = vmatprep.subr.bf16.mxu0 0
        %549 = vmatpush2.bf16.xpose.msra.mxu0 0
        %550 = vmatprep.subr.bf16.mxu0 0
        %551 = vmatpush2.bf16.xpose.msra.mxu0 0
        %552 = vmatprep.subr.bf16.mxu0 0
        %553 = vmatpush2.bf16.xpose.msra.mxu0 0
        %554 = vmatprep.subr.bf16.mxu0 0
        %555 = vmatpush2.bf16.xpose.msra.mxu0 0
        %556 = vmatprep.mubr.bf16.mxu0 0
        %557 = vmatmul.mubr.bf16.gmra.mxu0 %v519
        %v558 = vpop.f32.mrf.mxu0
        %v559 = vadd.f32 0.0, %v558
        %v560 = vpop.f32.mrf.mxu0
        %v561 = vpop.f32.mrf.mxu0
        %v562 = vpop.f32.mrf.mxu0
        %563 = vdwg.mxu0
        %v564 = vmul.f32 %v559, 0.125
        %v565 = vsel %vm439, -1e+09, %v564
        %v566 = vsel %vm441, %v565, -inf
        %567 = vmax.xlane.f32.xlu0 %v566
        %v568 = vpop.xlane.xlu0 %567
        %v569 = vsub.f32 %v565, %v568
        %v570 = vmul.f32 %v569, 1.442695
        %v571 = vpow.pop %v570
        %v572 = vsel %vm441, %v571, 0.0
        %573 = vadd.xlane.f32.xlu0 %v572
        %v574 = vpop.xlane.xlu0 %573
        %v575 = vrcp.pop %v574
        %v576 = vmul.f32 %v571, %v575
        %v577 = vpack.c.bf16 %v576, %v576
        %v579 = vunpack.c.l.b16 %v507
        %v580 = vpack.c.b16 %v579, %v579
        %581 = vrot.lane.b32.xlu0 %v580, 64
        %v582 = vpop.permute.xlu0 %581
        %v584 = vsel %vm441, %v577, 0
        %v587 = vsel %vm457, %v582, 0
        %589 = vmatprep.subr.bf16.mxu0 0
        %590 = vmatpush1.bf16.msra.mxu0 0
        %591 = vmatprep.subr.bf16.mxu0 0
        %592 = vmatpush1.bf16.msra.mxu0 0
        %593 = vmatprep.subr.bf16.mxu0 0
        %594 = vmatpush1.bf16.msra.mxu0 0
        %595 = vmatprep.subr.bf16.mxu0 0
        %596 = vmatpush1.bf16.msra.mxu0 0
        %597 = vmatprep.subr.bf16.mxu0 0
        %598 = vmatpush1.bf16.msra.mxu0 0
        %599 = vmatprep.subr.bf16.mxu0 0
        %600 = vmatpush1.bf16.msra.mxu0 0
        %601 = vmatprep.subr.bf16.mxu0 0
        %602 = vmatpush1.bf16.msra.mxu0 0
        %603 = vmatprep.subr.bf16.mxu0 0
        %604 = vmatpush1.bf16.msra.mxu0 %v587
        %605 = vmatprep.subr.bf16.mxu0 0
        %606 = vmatpush2.bf16.msra.mxu0 0
        %607 = vmatprep.subr.bf16.mxu0 0
        %608 = vmatpush2.bf16.msra.mxu0 0
        %609 = vmatprep.subr.bf16.mxu0 0
        %610 = vmatpush2.bf16.msra.mxu0 0
        %611 = vmatprep.subr.bf16.mxu0 0
        %612 = vmatpush2.bf16.msra.mxu0 0
        %613 = vmatprep.subr.bf16.mxu0 0
        %614 = vmatpush2.bf16.msra.mxu0 0
        %615 = vmatprep.subr.bf16.mxu0 0
        %616 = vmatpush2.bf16.msra.mxu0 0
        %617 = vmatprep.subr.bf16.mxu0 0
        %618 = vmatpush2.bf16.msra.mxu0 0
        %619 = vmatprep.subr.bf16.mxu0 0
        %620 = vmatpush2.bf16.msra.mxu0 0
        %621 = vmatprep.mubr.bf16.mxu0 0
        %622 = vmatmul.mubr.bf16.gmra.mxu0 %v584
        %v623 = vpop.f32.mrf.mxu0
        %v624 = vadd.f32 0.0, %v623
        %v625 = vpop.f32.mrf.mxu0
        %v626 = vpop.f32.mrf.mxu0
        %v627 = vpop.f32.mrf.mxu0
        %628 = vdwg.mxu0
        %v629 = vpack.c.bf16 %v624, %v624
        %v631 = vunpack.c.l.b16 %v629
        %v632 = vpack.c.b16 %v631, %v631
        %633 = vrot.lane.b32.xlu0 %v632, 64
        %v634 = vpop.permute.xlu0 %633
        %vm636 = vcmask 1043968
        %637 = vst.msk [vmem:[%s378] sm:$0xf] %vm636, %v634
        %s638 = scalar_lea.vmem %s342, 8 [#allocation5]
        %639 = vst.msk [vmem:[%s638] sm:$0xff] %vm441, %v576
        %p640 = scmp.lt.s32.totalorder %s27, 1
        %s641 = scalar_select %p640, %s27, 1
        %p642 = scmp.lt.s32.totalorder %s28, 1
        %s643 = scalar_select %p642, %s28, 1
        %s644 = smul.addr %s641, 2
        %s645 = sadd.s32 %s643, %s644
        %s646 = smul.addr %s645, 4
        %s647 = scalar_lea.vmem %s4, %s646
        %s648 = sand.u32 %s187, 1
        %s649 = scalar_lea.sflag [#allocation4], %s648
        %s650 = sand.u32 %s187, 1
        %s651 = smul.addr %s650, 16
        %s652 = scalar_lea.vmem [#allocation5], %s651
        // Predicated region
        $region41: #{_lambda_.5} parent=35 // pred_check
          %p653 = pneg %p169
        $region42: #{_lambda_.5} parent=35 // pred_check_branch
          %655 = sbr.rel (%p653) target = $region44
        $region43: #{_lambda_.5} parent=35 // pred_region
          _
        $region44: #{_lambda_.5} parent=35 // pred_fallthru
          _
        // Predicated region
        $region45: #{_lambda_.5} parent=35 // pred_check
          %p656 = pneg %p197
        $region46: #{_lambda_.5} parent=35 // pred_check_branch
          %658 = sbr.rel (%p656) target = $region48
        $region47: #{_lambda_.5} parent=35 // pred_region
          %s659 = smul.u32 2, %s28
          %s661 = ssub.s32 256, 256
          %662 = vsyncadd %s649, %s661
          %s663 = smul.addr %s27, 4
          %s664 = sadd.s32 %s659, %s663
          %s665 = smul.addr %s664, 128
          %s666 = scalar_lea.hbm %s5, %s665
          %s667 = sshll.u32 %s652, 4
          %s668 = int_to_ptr.vmem [resolvable:$true] %s667
          %673 = dma.vmem_to_hbm [thread:$0]  %s668, 256, %s666, %s649, 128, 128, 8
        $region48: #{_lambda_.5} parent=35 // pred_fallthru
          _
      $region36: #{_lambda_.5} parent=5 // pred_fallthru
        _
      %p674 = scmp.le.s32.totalorder 2, %s18
      // Predicated region
      $region49: #{_lambda_.5} parent=5 // pred_check
        %p675 = pneg %p674
      $region50: #{_lambda_.5} parent=5 // pred_check_branch
        %677 = sbr.rel (%p675) target = $region52
      $region51: #{_lambda_.5} parent=5 // pred_region
        %s678 = ssub.s32 %s18, 2
        // Predicated region
        $region53: #{_lambda_.5} parent=51 // pred_check
          %p679 = pneg %p175
        $region54: #{_lambda_.5} parent=51 // pred_check_branch
          %681 = sbr.rel (%p679) target = $region56
        $region55: #{_lambda_.5} parent=51 // pred_region
          %p682 = scmp.lt.s32.totalorder %s29, 1
          %s683 = scalar_select %p682, %s29, 1
          %p684 = scmp.lt.s32.totalorder %s30, 1
          %s685 = scalar_select %p684, %s30, 1
          %s686 = smul.addr %s683, 2
          %s687 = sadd.s32 %s685, %s686
          %s688 = smul.addr %s687, 4
          %s689 = scalar_lea.vmem %s4, %s688
        $region56: #{_lambda_.5} parent=51 // pred_fallthru
          _
        // Predicated region
        $region57: #{_lambda_.5} parent=51 // pred_check
          %p690 = pneg %p203
        $region58: #{_lambda_.5} parent=51 // pred_check_branch
          %692 = sbr.rel (%p690) target = $region60
        $region59: #{_lambda_.5} parent=51 // pred_region
          %s693 = sand.u32 %s188, 1
          %s694 = scalar_lea.sflag [#allocation4], %s693
          %s695 = sand.u32 %s188, 1
          %s696 = smul.addr %s695, 16
          %s697 = scalar_lea.vmem [#allocation5], %s696
          %698 = dma.done %s694, 256
        $region60: #{_lambda_.5} parent=51 // pred_fallthru
          _
      $region52: #{_lambda_.5} parent=5 // pred_fallthru
        _
    $region6: #{_lambda_.5} parent=1 // loop_footer
      %s22 = sadd.s32 1, %s18
    $region7: #{_lambda_.5} parent=1 // loop_footer_branch
      %17 = sbr.rel target = $region3
    $region8: #{_lambda_.5} parent=1 // loop_exit
      _
    %699 = vsyncpa [#allocation3], 1
    %s700 = scalar_lea.sflag [#allocation3], 1
    %701 = vsyncpa %s700, 1
    %702 = vsyncpa [#allocation4], 1
    %s703 = scalar_lea.sflag [#allocation4], 1
    %704 = vsyncpa %s703, 1

// kernel: _lambda_.4
$region0: #{_lambda_.4}
  #allocation0 [shape = 'u32[]', space=smem, size = 0x4, offset = 0x4, fixed_abs, tag = 'smem constant byte address 0x4 - core index']
  #allocation1 [shape = 'u32[144,128]{1,0:T(1,128)}', space=vmem, size = 0x12000, scoped, tag = 'internal scratch']
  %s0 = inlined_call_operand.hbm [shape: f32[16,256], index: 0, kind: input, shape index: {}]
  %s1 = inlined_call_operand.vmem [shape: f32[1,256], index: 1, kind: input, shape index: {}]
  %s2 = inlined_call_operand.vmem [shape: f32[1,256], index: 2, kind: input, shape index: {}]
  %s3 = inlined_call_operand.hbm [shape: bf16[256,768], index: 3, kind: input, shape index: {}]
  %s4 = inlined_call_operand.vmem [shape: f32[1,768], index: 4, kind: input, shape index: {}]
  %s5 = inlined_call_operand.vmem [shape: bf16[16,768], index: 5, kind: output, shape index: {}]
  %s6 = sld [smem:[#allocation0]]
  $region61: #{_lambda_.4} parent=0
    _
  %s8 = ssub.s32 1, %s6
  %s9 = scalar_select 0, %s8, %s6
  $region1: #{_lambda_.4} parent=0
    #allocation2 [shape = 'u8[16384]{0}', space=vmem, size = 0x4000, scoped, tag = 'input window, operand 0']
    #allocation3 [shape = 's32[2]{0}', space=sflag, size = 0x8, scoped, tag = 'scoped memory for _lambda_.4']
    #allocation4 [shape = 'u8[393216]{0}', space=vmem, size = 0x60000, scoped, tag = 'input window, operand 3, single buffered']
    #allocation5 [shape = 's32[1]{0}', space=sflag, size = 0x4, scoped, tag = 'scoped memory for _lambda_.4']
    %10 = vsyncpa [#allocation3], 0
    %s11 = scalar_lea.sflag [#allocation3], 1
    %12 = vsyncpa %s11, 0
    %13 = vsyncpa [#allocation5], 0
    loop: start=0, step=1, limit=4
    $region2: #{_lambda_.4} parent=1 // loop_pre_header
      _
    $region3: #{_lambda_.4} parent=1 // loop_header
      %s15 = sphi 0, %s19
      %p16 = scmp.ge.s32.totalorder %s15, 4
      %s25 = sphi 0, %s27
      %s28 = sphi 0, %s25
      %s29 = sphi 0, %s28
      %s45 = sphi 0, %s29
      %s49 = sphi 0, %s49
      %s51 = sphi 0, %s49
      %s52 = sphi 0, %s51
      %s66 = sphi 0, %s52
      %s70 = sphi 0, %s70
      %s72 = sphi 0, %s70
      %s73 = sphi 0, %s72
      %s87 = sphi 0, %s73
      %s91 = sphi 0, %s91
      %s93 = sphi 0, %s91
      %s94 = sphi 0, %s93
      %s108 = sphi 0, %s94
      %s112 = sphi 0, %s112
      %s114 = sphi 0, %s112
      %s115 = sphi 0, %s114
      %s129 = sphi 0, %s115
      %s135 = sphi 0, %s137
      %s138 = sphi 0, %s135
      %s139 = sphi 0, %s138
      %s155 = sphi 0, %s139
    $region4: #{_lambda_.4} parent=1 // loop_header_branch
      %18 = sbr.rel (%p16) target = $region8
    $region5: #{_lambda_.4} parent=1 // loop_body
      %s20 = ssub.s32 %s15, 1
      %s21 = ssub.s32 %s15, 2
      %s22 = sadd.s32 %s15, 1
      %s23 = ssub.s32 %s15, %s22
      %p24 = scmp.eq.s32.totalorder %s23, 0
      %s26 = sadd.s32 %s25, 1
      %s27 = scalar_select %p24, %s25, %s26
      %p30 = pneg %p24
      %p31 = scmp.eq.s32.totalorder %s15, 1
      %p32 = por %p30, %p31
      %p33 = scmp.ne.s32.totalorder %s25, %s28
      %p34 = scmp.eq.s32.totalorder %s15, 0
      %p35 = por %p33, %p34
      %p36 = scmp.ne.s32.totalorder %s25, %s28
      %p37 = scmp.eq.s32.totalorder %s20, 1
      %p38 = por %p36, %p37
      %p39 = scmp.ne.s32.totalorder %s28, %s29
      %p40 = scmp.eq.s32.totalorder %s20, 0
      %p41 = por %p39, %p40
      %p42 = scmp.ne.s32.totalorder %s28, %s29
      %p43 = scmp.eq.s32.totalorder %s21, 1
      %p44 = por %p42, %p43
      %p46 = scmp.ne.s32.totalorder %s29, %s45
      %p47 = scmp.eq.s32.totalorder %s21, 0
      %p48 = por %p46, %p47
      %s50 = sadd.s32 %s49, 1
      %p53 = scmp.eq.s32.totalorder %s15, 1
      %p54 = scmp.ne.s32.totalorder %s49, %s51
      %p55 = scmp.eq.s32.totalorder %s15, 0
      %p56 = por %p54, %p55
      %p57 = scmp.ne.s32.totalorder %s49, %s51
      %p58 = scmp.eq.s32.totalorder %s20, 1
      %p59 = por %p57, %p58
      %p60 = scmp.ne.s32.totalorder %s51, %s52
      %p61 = scmp.eq.s32.totalorder %s20, 0
      %p62 = por %p60, %p61
      %p63 = scmp.ne.s32.totalorder %s51, %s52
      %p64 = scmp.eq.s32.totalorder %s21, 1
      %p65 = por %p63, %p64
      %p67 = scmp.ne.s32.totalorder %s52, %s66
      %p68 = scmp.eq.s32.totalorder %s21, 0
      %p69 = por %p67, %p68
      %s71 = sadd.s32 %s70, 1
      %p74 = scmp.eq.s32.totalorder %s15, 1
      %p75 = scmp.ne.s32.totalorder %s70, %s72
      %p76 = scmp.eq.s32.totalorder %s15, 0
      %p77 = por %p75, %p76
      %p78 = scmp.ne.s32.totalorder %s70, %s72
      %p79 = scmp.eq.s32.totalorder %s20, 1
      %p80 = por %p78, %p79
      %p81 = scmp.ne.s32.totalorder %s72, %s73
      %p82 = scmp.eq.s32.totalorder %s20, 0
      %p83 = por %p81, %p82
      %p84 = scmp.ne.s32.totalorder %s72, %s73
      %p85 = scmp.eq.s32.totalorder %s21, 1
      %p86 = por %p84, %p85
      %p88 = scmp.ne.s32.totalorder %s73, %s87
      %p89 = scmp.eq.s32.totalorder %s21, 0
      %p90 = por %p88, %p89
      %s92 = sadd.s32 %s91, 1
      %p95 = scmp.eq.s32.totalorder %s15, 1
      %p96 = scmp.ne.s32.totalorder %s91, %s93
      %p97 = scmp.eq.s32.totalorder %s15, 0
      %p98 = por %p96, %p97
      %p99 = scmp.ne.s32.totalorder %s91, %s93
      %p100 = scmp.eq.s32.totalorder %s20, 1
      %p101 = por %p99, %p100
      %p102 = scmp.ne.s32.totalorder %s93, %s94
      %p103 = scmp.eq.s32.totalorder %s20, 0
      %p104 = por %p102, %p103
      %p105 = scmp.ne.s32.totalorder %s93, %s94
      %p106 = scmp.eq.s32.totalorder %s21, 1
      %p107 = por %p105, %p106
      %p109 = scmp.ne.s32.totalorder %s94, %s108
      %p110 = scmp.eq.s32.totalorder %s21, 0
      %p111 = por %p109, %p110
      %s113 = sadd.s32 %s112, 1
      %p116 = scmp.eq.s32.totalorder %s15, 1
      %p117 = scmp.ne.s32.totalorder %s112, %s114
      %p118 = scmp.eq.s32.totalorder %s15, 0
      %p119 = por %p117, %p118
      %p120 = scmp.ne.s32.totalorder %s112, %s114
      %p121 = scmp.eq.s32.totalorder %s20, 1
      %p122 = por %p120, %p121
      %p123 = scmp.ne.s32.totalorder %s114, %s115
      %p124 = scmp.eq.s32.totalorder %s20, 0
      %p125 = por %p123, %p124
      %p126 = scmp.ne.s32.totalorder %s114, %s115
      %p127 = scmp.eq.s32.totalorder %s21, 1
      %p128 = por %p126, %p127
      %p130 = scmp.ne.s32.totalorder %s115, %s129
      %p131 = scmp.eq.s32.totalorder %s21, 0
      %p132 = por %p130, %p131
      %s133 = ssub.s32 %s15, %s22
      %p134 = scmp.eq.s32.totalorder %s133, 0
      %s136 = sadd.s32 %s135, 1
      %s137 = scalar_select %p134, %s135, %s136
      %p140 = pneg %p134
      %p141 = scmp.eq.s32.totalorder %s15, 1
      %p142 = por %p140, %p141
      %p143 = scmp.ne.s32.totalorder %s135, %s138
      %p144 = scmp.eq.s32.totalorder %s15, 0
      %p145 = por %p143, %p144
      %p146 = scmp.ne.s32.totalorder %s135, %s138
      %p147 = scmp.eq.s32.totalorder %s20, 1
      %p148 = por %p146, %p147
      %p149 = scmp.ne.s32.totalorder %s138, %s139
      %p150 = scmp.eq.s32.totalorder %s20, 0
      %p151 = por %p149, %p150
      %p152 = scmp.ne.s32.totalorder %s138, %s139
      %p153 = scmp.eq.s32.totalorder %s21, 1
      %p154 = por %p152, %p153
      %p156 = scmp.ne.s32.totalorder %s139, %s155
      %p157 = scmp.eq.s32.totalorder %s21, 0
      %p158 = por %p156, %p157
      %p159 = scmp.le.s32.totalorder 1, %s15
      %p160 = scmp.lt.s32.totalorder %s15, 3
      %p161 = pnand %p159, %p160
      %p162 = pneg %p161
      // Predicated region
      $region9: #{_lambda_.4} parent=5 // pred_check
        _
      $region10: #{_lambda_.4} parent=5 // pred_check_branch
        %164 = sbr.rel (%p161) target = $region12
      $region11: #{_lambda_.4} parent=5 // pred_region
        %s165 = ssub.s32 %s15, 1
        // Predicated region
        $region13: #{_lambda_.4} parent=11 // pred_check
          %p166 = pneg %p62
        $region14: #{_lambda_.4} parent=11 // pred_check_branch
          %168 = sbr.rel (%p166) target = $region16
        $region15: #{_lambda_.4} parent=11 // pred_region
          _
        $region16: #{_lambda_.4} parent=11 // pred_fallthru
          _
        // Predicated region
        $region17: #{_lambda_.4} parent=11 // pred_check
          %p169 = pneg %p83
        $region18: #{_lambda_.4} parent=11 // pred_check_branch
          %171 = sbr.rel (%p169) target = $region20
        $region19: #{_lambda_.4} parent=11 // pred_region
          _
        $region20: #{_lambda_.4} parent=11 // pred_fallthru
          _
        // Predicated region
        $region21: #{_lambda_.4} parent=11 // pred_check
          %p172 = pneg %p104
        $region22: #{_lambda_.4} parent=11 // pred_check_branch
          %174 = sbr.rel (%p172) target = $region24
        $region23: #{_lambda_.4} parent=11 // pred_region
          %s176 = ssub.s32 12288, 12288
          %177 = vsyncadd [#allocation5], %s176
          %s178 = sshll.u32 [#allocation4], 4
          %s179 = int_to_ptr.vmem [resolvable:$true] %s178
          %184 = dma.hbm_to_vmem [thread:$0]  %s3, 12288, %s179, [#allocation5], 384, 384, 24
        $region24: #{_lambda_.4} parent=11 // pred_fallthru
          _
        // Predicated region
        $region25: #{_lambda_.4} parent=11 // pred_check
          %p185 = pneg %p125
        $region26: #{_lambda_.4} parent=11 // pred_check_branch
          %187 = sbr.rel (%p185) target = $region28
        $region27: #{_lambda_.4} parent=11 // pred_region
          _
        $region28: #{_lambda_.4} parent=11 // pred_fallthru
          _
      $region12: #{_lambda_.4} parent=5 // pred_fallthru
        _
      %p188 = scmp.lt.s32.totalorder %s15, 2
      // Predicated region
      $region29: #{_lambda_.4} parent=5 // pred_check
        %p189 = pneg %p188
      $region30: #{_lambda_.4} parent=5 // pred_check_branch
        %191 = sbr.rel (%p189) target = $region32
      $region31: #{_lambda_.4} parent=5 // pred_region
        // Predicated region
        $region33: #{_lambda_.4} parent=31 // pred_check
          %p192 = pneg %p35
        $region34: #{_lambda_.4} parent=31 // pred_check_branch
          %194 = sbr.rel (%p192) target = $region36
        $region35: #{_lambda_.4} parent=31 // pred_region
          %s195 = sand.u32 %s25, 1
          %s196 = scalar_lea.sflag [#allocation3], %s195
          %s197 = sand.u32 %s25, 1
          %s198 = smul.addr %s197, 16
          %s199 = scalar_lea.vmem [#allocation2], %s198
          %s201 = ssub.s32 256, 256
          %202 = vsyncadd %s196, %s201
          %s203 = smul.addr %s15, 2
          %s204 = smul.addr %s203, 128
          %s205 = scalar_lea.hbm %s0, %s204
          %s207 = sshll.u32 %s199, 4
          %s208 = int_to_ptr.vmem [resolvable:$true] %s207
          %210 = dma.hbm_to_vmem [thread:$0]  %s205, 256, %s208, %s196
        $region36: #{_lambda_.4} parent=31 // pred_fallthru
          _
      $region32: #{_lambda_.4} parent=5 // pred_fallthru
        _
      %p211 = scmp.le.s32.totalorder 1, %s15
      %p212 = scmp.lt.s32.totalorder %s15, 3
      %p213 = pnand %p211, %p212
      %p214 = pneg %p213
      // Predicated region
      $region37: #{_lambda_.4} parent=5 // pred_check
        _
      $region38: #{_lambda_.4} parent=5 // pred_check_branch
        %216 = sbr.rel (%p213) target = $region40
      $region39: #{_lambda_.4} parent=5 // pred_region
        %s217 = ssub.s32 %s15, 1
        %s218 = sand.u32 %s28, 1
        %s219 = scalar_lea.sflag [#allocation3], %s218
        %s220 = sand.u32 %s28, 1
        %s221 = smul.addr %s220, 16
        %s222 = scalar_lea.vmem [#allocation2], %s221
        // Predicated region
        $region41: #{_lambda_.4} parent=39 // pred_check
          %p223 = pneg %p41
        $region42: #{_lambda_.4} parent=39 // pred_check_branch
          %225 = sbr.rel (%p223) target = $region44
        $region43: #{_lambda_.4} parent=39 // pred_region
          %226 = dma.done %s219, 256
        $region44: #{_lambda_.4} parent=39 // pred_fallthru
          _
        // Predicated region
        $region45: #{_lambda_.4} parent=39 // pred_check
          %p227 = pneg %p104
        $region46: #{_lambda_.4} parent=39 // pred_check_branch
          %229 = sbr.rel (%p227) target = $region48
        $region47: #{_lambda_.4} parent=39 // pred_region
          %230 = dma.done [#allocation5], 12288
        $region48: #{_lambda_.4} parent=39 // pred_fallthru
          _
        %s231 = sand.u32 %s28, 1
        %s232 = scalar_lea.sflag [#allocation3], %s231
        %s233 = sand.u32 %s28, 1
        %s234 = smul.addr %s233, 16
        %s235 = scalar_lea.vmem [#allocation2], %s234
        %p236 = pneg %p41
        %p237 = pneg %p38
        %p238 = pneg %p62
        %p239 = pneg %p59
        %p240 = pneg %p83
        %p241 = pneg %p80
        %p242 = pneg %p104
        %p243 = pneg %p101
        %p244 = pneg %p125
        %p245 = pneg %p122
        %p246 = pneg %p151
        %p247 = pneg %p148
        %p248 = scmp.lt.s32.totalorder %s20, 1
        %s249 = scalar_select %p248, %s20, 1
        %s250 = smul.addr %s249, 6
        %s251 = smul.addr %s250, 4
        %s252 = scalar_lea.vmem %s5, %s251
        %p253 = scmp.lt.s32.totalorder %s20, 1
        %s254 = scalar_select %p253, %s20, 1
        %s255 = smul.addr %s254, 6
        %s256 = smul.addr %s255, 4
        %s257 = scalar_lea.vmem %s5, %s256
        %v258 = vld [vmem:[%s222] sm:$0xff]
        %v259 = vld [vmem:[%s222 + $0x8] sm:$0xff]
        %v260 = vld [vmem:[%s1] sm:$0x3]
        %v261 = vld [vmem:[%s2] sm:$0x3]
        %v262 = vadd.f32 %v258, %v259
        %263 = vadd.xlane.f32.xlu0 %v262
        %v264 = vpop.xlane.xlu0 %263
        %v265 = vrcp.pop 256.0
        %v266 = vmul.f32 %v264, %v265
        %v267 = vsub.f32 %v258, %v266
        %v268 = vsub.f32 %v259, %v266
        %v269 = vmul.f32 %v267, %v267
        %v270 = vmul.f32 %v268, %v268
        %v271 = vadd.f32 %v269, %v270
        %272 = vadd.xlane.f32.xlu0 %v271
        %v273 = vpop.xlane.xlu0 %272
        %v274 = vmul.f32 %v273, 0.003921569
        %v275 = vrsqrt.pop %v274
        %v276 = vmul.f32 %v274, %v275
        %vm277 = vcmp.eq.f32.partialorder %v274, inf
        %v278 = vsel %vm277, %v274, %v276
        %vm279 = vcmp.eq.f32.partialorder %v274, 0.0
        %v280 = vand.u32 %v274, 2147483648
        %v281 = vsel %vm279, %v280, %v278
        %v282 = vadd.f32 %v281, 1e-06
        %v283 = vrcp.pop %v282
        %v284 = vmul.f32 %v267, %v283
        %v285 = vmul.f32 %v268, %v283
        %v287 = vlaneseq
        %v288 = vshrl.u32 %v287, 7
        %v289 = vsub.s32 0, %v288
        %v290 = vrot.slane %v260, %v289
        %v291 = vlaneseq
        %v292 = vshrl.u32 %v291, 7
        %v293 = vsub.s32 1, %v292
        %v294 = vrot.slane %v260, %v293
        %v297 = vmul.f32 %v290, %v284
        %v298 = vmul.f32 %v294, %v285
        %v300 = vlaneseq
        %v301 = vshrl.u32 %v300, 7
        %v302 = vsub.s32 0, %v301
        %v303 = vrot.slane %v261, %v302
        %v304 = vlaneseq
        %v305 = vshrl.u32 %v304, 7
        %v306 = vsub.s32 1, %v305
        %v307 = vrot.slane %v261, %v306
        %v310 = vadd.f32 %v297, %v303
        %v311 = vadd.f32 %v298, %v307
        %v312 = vpack.c.bf16 %v310, %v310
        %v313 = vpack.c.bf16 %v311, %v311
        %v314 = vld [vmem:[#allocation4] sm:$0xff]
        %v315 = vld [vmem:[#allocation4 + $0x8] sm:$0xff]
        %v316 = vld [vmem:[#allocation4 + $0x10] sm:$0xff]
        %v317 = vld [vmem:[#allocation4 + $0x18] sm:$0xff]
        %v318 = vld [vmem:[#allocation4 + $0x20] sm:$0xff]
        %v319 = vld [vmem:[#allocation4 + $0x28] sm:$0xff]
        %v320 = vld [vmem:[#allocation4 + $0x30] sm:$0xff]
        %v321 = vld [vmem:[#allocation4 + $0x38] sm:$0xff]
        %v322 = vld [vmem:[#allocation4 + $0x40] sm:$0xff]
        %v323 = vld [vmem:[#allocation4 + $0x48] sm:$0xff]
        %v324 = vld [vmem:[#allocation4 + $0x50] sm:$0xff]
        %v325 = vld [vmem:[#allocation4 + $0x58] sm:$0xff]
        %v326 = vld [vmem:[#allocation4 + $0x60] sm:$0xff]
        %v327 = vld [vmem:[#allocation4 + $0x68] sm:$0xff]
        %v328 = vld [vmem:[#allocation4 + $0x70] sm:$0xff]
        %v329 = vld [vmem:[#allocation4 + $0x78] sm:$0xff]
        %v330 = vld [vmem:[#allocation4 + $0x80] sm:$0xff]
        %v331 = vld [vmem:[#allocation4 + $0x88] sm:$0xff]
        %v332 = vld [vmem:[#allocation4 + $0x90] sm:$0xff]
        %v333 = vld [vmem:[#allocation4 + $0x98] sm:$0xff]
        %v334 = vld [vmem:[#allocation4 + $0xa0] sm:$0xff]
        %v335 = vld [vmem:[#allocation4 + $0xa8] sm:$0xff]
        %v336 = vld [vmem:[#allocation4 + $0xb0] sm:$0xff]
        %v337 = vld [vmem:[#allocation4 + $0xb8] sm:$0xff]
        %v338 = vld [vmem:[#allocation4 + $0xc0] sm:$0xff]
        %v339 = vld [vmem:[#allocation4 + $0xc8] sm:$0xff]
        %v340 = vld [vmem:[#allocation4 + $0xd0] sm:$0xff]
        %v341 = vld [vmem:[#allocation4 + $0xd8] sm:$0xff]
        %v342 = vld [vmem:[#allocation4 + $0xe0] sm:$0xff]
        %v343 = vld [vmem:[#allocation4 + $0xe8] sm:$0xff]
        %v344 = vld [vmem:[#allocation4 + $0xf0] sm:$0xff]
        %v345 = vld [vmem:[#allocation4 + $0xf8] sm:$0xff]
        %v346 = vld [vmem:[#allocation4 + $0x100] sm:$0xff]
        %v347 = vld [vmem:[#allocation4 + $0x108] sm:$0xff]
        %v348 = vld [vmem:[#allocation4 + $0x110] sm:$0xff]
        %v349 = vld [vmem:[#allocation4 + $0x118] sm:$0xff]
        %v350 = vld [vmem:[#allocation4 + $0x120] sm:$0xff]
        %v351 = vld [vmem:[#allocation4 + $0x128] sm:$0xff]
        %v352 = vld [vmem:[#allocation4 + $0x130] sm:$0xff]
        %v353 = vld [vmem:[#allocation4 + $0x138] sm:$0xff]
        %v354 = vld [vmem:[#allocation4 + $0x140] sm:$0xff]
        %v355 = vld [vmem:[#allocation4 + $0x148] sm:$0xff]
        %v356 = vld [vmem:[#allocation4 + $0x150] sm:$0xff]
        %v357 = vld [vmem:[#allocation4 + $0x158] sm:$0xff]
        %v358 = vld [vmem:[#allocation4 + $0x160] sm:$0xff]
        %v359 = vld [vmem:[#allocation4 + $0x168] sm:$0xff]
        %v360 = vld [vmem:[#allocation4 + $0x170] sm:$0xff]
        %v361 = vld [vmem:[#allocation4 + $0x178] sm:$0xff]
        %v362 = vld [vmem:[#allocation4 + $0x180] sm:$0xff]
        %v363 = vld [vmem:[#allocation4 + $0x188] sm:$0xff]
        %v364 = vld [vmem:[#allocation4 + $0x190] sm:$0xff]
        %v365 = vld [vmem:[#allocation4 + $0x198] sm:$0xff]
        %v366 = vld [vmem:[#allocation4 + $0x1a0] sm:$0xff]
        %v367 = vld [vmem:[#allocation4 + $0x1a8] sm:$0xff]
        %v368 = vld [vmem:[#allocation4 + $0x1b0] sm:$0xff]
        %v369 = vld [vmem:[#allocation4 + $0x1b8] sm:$0xff]
        %v370 = vld [vmem:[#allocation4 + $0x1c0] sm:$0xff]
        %v371 = vld [vmem:[#allocation4 + $0x1c8] sm:$0xff]
        %v372 = vld [vmem:[#allocation4 + $0x1d0] sm:$0xff]
        %v373 = vld [vmem:[#allocation4 + $0x1d8] sm:$0xff]
        %v374 = vld [vmem:[#allocation4 + $0x1e0] sm:$0xff]
        %v375 = vld [vmem:[#allocation4 + $0x1e8] sm:$0xff]
        %v376 = vld [vmem:[#allocation4 + $0x1f0] sm:$0xff]
        %v377 = vld [vmem:[#allocation4 + $0x1f8] sm:$0xff]
        %v378 = vld [vmem:[#allocation4 + $0x200] sm:$0xff]
        %v379 = vld [vmem:[#allocation4 + $0x208] sm:$0xff]
        %v380 = vld [vmem:[#allocation4 + $0x210] sm:$0xff]
        %v381 = vld [vmem:[#allocation4 + $0x218] sm:$0xff]
        %v382 = vld [vmem:[#allocation4 + $0x220] sm:$0xff]
        %v383 = vld [vmem:[#allocation4 + $0x228] sm:$0xff]
        %v384 = vld [vmem:[#allocation4 + $0x230] sm:$0xff]
        %v385 = vld [vmem:[#allocation4 + $0x238] sm:$0xff]
        %v386 = vld [vmem:[#allocation4 + $0x240] sm:$0xff]
        %v387 = vld [vmem:[#allocation4 + $0x248] sm:$0xff]
        %v388 = vld [vmem:[#allocation4 + $0x250] sm:$0xff]
        %v389 = vld [vmem:[#allocation4 + $0x258] sm:$0xff]
        %v390 = vld [vmem:[#allocation4 + $0x260] sm:$0xff]
        %v391 = vld [vmem:[#allocation4 + $0x268] sm:$0xff]
        %v392 = vld [vmem:[#allocation4 + $0x270] sm:$0xff]
        %v393 = vld [vmem:[#allocation4 + $0x278] sm:$0xff]
        %v394 = vld [vmem:[#allocation4 + $0x280] sm:$0xff]
        %v395 = vld [vmem:[#allocation4 + $0x288] sm:$0xff]
        %v396 = vld [vmem:[#allocation4 + $0x290] sm:$0xff]
        %v397 = vld [vmem:[#allocation4 + $0x298] sm:$0xff]
        %v398 = vld [vmem:[#allocation4 + $0x2a0] sm:$0xff]
        %v399 = vld [vmem:[#allocation4 + $0x2a8] sm:$0xff]
        %v400 = vld [vmem:[#allocation4 + $0x2b0] sm:$0xff]
        %v401 = vld [vmem:[#allocation4 + $0x2b8] sm:$0xff]
        %v402 = vld [vmem:[#allocation4 + $0x2c0] sm:$0xff]
        %v403 = vld [vmem:[#allocation4 + $0x2c8] sm:$0xff]
        %v404 = vld [vmem:[#allocation4 + $0x2d0] sm:$0xff]
        %v405 = vld [vmem:[#allocation4 + $0x2d8] sm:$0xff]
        %v406 = vld [vmem:[#allocation4 + $0x2e0] sm:$0xff]
        %v407 = vld [vmem:[#allocation4 + $0x2e8] sm:$0xff]
        %v408 = vld [vmem:[#allocation4 + $0x2f0] sm:$0xff]
        %v409 = vld [vmem:[#allocation4 + $0x2f8] sm:$0xff]
        %v410 = vld [vmem:[%s4] sm:$0x3f]
        %v412 = vlaneseq
        %v413 = vshrl.u32 %v412, 7
        %v414 = vsub.s32 0, %v413
        %v415 = vrot.slane %v410, %v414
        %v416 = vlaneseq
        %v417 = vshrl.u32 %v416, 7
        %v418 = vsub.s32 1, %v417
        %v419 = vrot.slane %v410, %v418
        %v420 = vlaneseq
        %v421 = vshrl.u32 %v420, 7
        %v422 = vsub.s32 2, %v421
        %v423 = vrot.slane %v410, %v422
        %v424 = vlaneseq
        %v425 = vshrl.u32 %v424, 7
        %v426 = vsub.s32 3, %v425
        %v427 = vrot.slane %v410, %v426
        %v428 = vlaneseq
        %v429 = vshrl.u32 %v428, 7
        %v430 = vsub.s32 4, %v429
        %v431 = vrot.slane %v410, %v430
        %v432 = vlaneseq
        %v433 = vshrl.u32 %v432, 7
        %v434 = vsub.s32 5, %v433
        %v435 = vrot.slane %v410, %v434
        %v538 = vunpack.c.l.b16 %v314
        %v539 = vunpack.c.h.b16 %v314
        %v540 = vunpack.c.l.b16 %v315
        %v541 = vunpack.c.h.b16 %v315
        %v542 = vunpack.c.l.b16 %v316
        %v543 = vunpack.c.h.b16 %v316
        %v544 = vunpack.c.l.b16 %v317
        %v545 = vunpack.c.h.b16 %v317
        %v546 = vunpack.c.l.b16 %v318
        %v547 = vunpack.c.h.b16 %v318
        %v548 = vunpack.c.l.b16 %v319
        %v549 = vunpack.c.h.b16 %v319
        %v550 = vunpack.c.l.b16 %v320
        %v551 = vunpack.c.h.b16 %v320
        %v552 = vunpack.c.l.b16 %v321
        %v553 = vunpack.c.h.b16 %v321
        %v554 = vunpack.c.l.b16 %v322
        %v555 = vunpack.c.h.b16 %v322
        %v556 = vunpack.c.l.b16 %v323
        %v557 = vunpack.c.h.b16 %v323
        %v558 = vunpack.c.l.b16 %v324
        %v559 = vunpack.c.h.b16 %v324
        %v560 = vunpack.c.l.b16 %v325
        %v561 = vunpack.c.h.b16 %v325
        %v562 = vunpack.c.l.b16 %v326
        %v563 = vunpack.c.h.b16 %v326
        %v564 = vunpack.c.l.b16 %v327
        %v565 = vunpack.c.h.b16 %v327
        %v566 = vunpack.c.l.b16 %v328
        %v567 = vunpack.c.h.b16 %v328
        %v568 = vunpack.c.l.b16 %v329
        %v569 = vunpack.c.h.b16 %v329
        %v570 = vunpack.c.l.b16 %v330
        %v571 = vunpack.c.h.b16 %v330
        %v572 = vunpack.c.l.b16 %v331
        %v573 = vunpack.c.h.b16 %v331
        %v574 = vunpack.c.l.b16 %v332
        %v575 = vunpack.c.h.b16 %v332
        %v576 = vunpack.c.l.b16 %v333
        %v577 = vunpack.c.h.b16 %v333
        %v578 = vunpack.c.l.b16 %v334
        %v579 = vunpack.c.h.b16 %v334
        %v580 = vunpack.c.l.b16 %v335
        %v581 = vunpack.c.h.b16 %v335
        %v582 = vunpack.c.l.b16 %v336
        %v583 = vunpack.c.h.b16 %v336
        %v584 = vunpack.c.l.b16 %v337
        %v585 = vunpack.c.h.b16 %v337
        %v586 = vunpack.c.l.b16 %v338
        %v587 = vunpack.c.h.b16 %v338
        %v588 = vunpack.c.l.b16 %v339
        %v589 = vunpack.c.h.b16 %v339
        %v590 = vunpack.c.l.b16 %v340
        %v591 = vunpack.c.h.b16 %v340
        %v592 = vunpack.c.l.b16 %v341
        %v593 = vunpack.c.h.b16 %v341
        %v594 = vunpack.c.l.b16 %v342
        %v595 = vunpack.c.h.b16 %v342
        %v596 = vunpack.c.l.b16 %v343
        %v597 = vunpack.c.h.b16 %v343
        %v598 = vunpack.c.l.b16 %v344
        %v599 = vunpack.c.h.b16 %v344
        %v600 = vunpack.c.l.b16 %v345
        %v601 = vunpack.c.h.b16 %v345
        %v602 = vunpack.c.l.b16 %v346
        %v603 = vunpack.c.h.b16 %v346
        %v604 = vunpack.c.l.b16 %v347
        %v605 = vunpack.c.h.b16 %v347
        %v606 = vunpack.c.l.b16 %v348
        %v607 = vunpack.c.h.b16 %v348
        %v608 = vunpack.c.l.b16 %v349
        %v609 = vunpack.c.h.b16 %v349
        %v610 = vunpack.c.l.b16 %v350
        %v611 = vunpack.c.h.b16 %v350
        %v612 = vunpack.c.l.b16 %v351
        %v613 = vunpack.c.h.b16 %v351
        %v614 = vunpack.c.l.b16 %v352
        %v615 = vunpack.c.h.b16 %v352
        %v616 = vunpack.c.l.b16 %v353
        %v617 = vunpack.c.h.b16 %v353
        %v618 = vunpack.c.l.b16 %v354
        %v619 = vunpack.c.h.b16 %v354
        %v620 = vunpack.c.l.b16 %v355
        %v621 = vunpack.c.h.b16 %v355
        %v622 = vunpack.c.l.b16 %v356
        %v623 = vunpack.c.h.b16 %v356
        %v624 = vunpack.c.l.b16 %v357
        %v625 = vunpack.c.h.b16 %v357
        %v626 = vunpack.c.l.b16 %v358
        %v627 = vunpack.c.h.b16 %v358
        %v628 = vunpack.c.l.b16 %v359
        %v629 = vunpack.c.h.b16 %v359
        %v630 = vunpack.c.l.b16 %v360
        %v631 = vunpack.c.h.b16 %v360
        %v632 = vunpack.c.l.b16 %v361
        %v633 = vunpack.c.h.b16 %v361
        %v634 = vunpack.c.l.b16 %v362
        %v635 = vunpack.c.h.b16 %v362
        %v636 = vunpack.c.l.b16 %v363
        %v637 = vunpack.c.h.b16 %v363
        %v638 = vunpack.c.l.b16 %v364
        %v639 = vunpack.c.h.b16 %v364
        %v640 = vunpack.c.l.b16 %v365
        %v641 = vunpack.c.h.b16 %v365
        %v642 = vunpack.c.l.b16 %v366
        %v643 = vunpack.c.h.b16 %v366
        %v644 = vunpack.c.l.b16 %v367
        %v645 = vunpack.c.h.b16 %v367
        %v646 = vunpack.c.l.b16 %v368
        %v647 = vunpack.c.h.b16 %v368
        %v648 = vunpack.c.l.b16 %v369
        %v649 = vunpack.c.h.b16 %v369
        %v650 = vunpack.c.l.b16 %v370
        %v651 = vunpack.c.h.b16 %v370
        %v652 = vunpack.c.l.b16 %v371
        %v653 = vunpack.c.h.b16 %v371
        %v654 = vunpack.c.l.b16 %v372
        %v655 = vunpack.c.h.b16 %v372
        %v656 = vunpack.c.l.b16 %v373
        %v657 = vunpack.c.h.b16 %v373
        %v658 = vunpack.c.l.b16 %v374
        %v659 = vunpack.c.h.b16 %v374
        %v660 = vunpack.c.l.b16 %v375
        %v661 = vunpack.c.h.b16 %v375
        %v662 = vunpack.c.l.b16 %v376
        %v663 = vunpack.c.h.b16 %v376
        %v664 = vunpack.c.l.b16 %v377
        %v665 = vunpack.c.h.b16 %v377
        %v666 = vunpack.c.l.b16 %v378
        %v667 = vunpack.c.h.b16 %v378
        %v668 = vunpack.c.l.b16 %v379
        %v669 = vunpack.c.h.b16 %v379
        %v670 = vunpack.c.l.b16 %v380
        %v671 = vunpack.c.h.b16 %v380
        %v672 = vunpack.c.l.b16 %v381
        %v673 = vunpack.c.h.b16 %v381
        %v674 = vunpack.c.l.b16 %v382
        %v675 = vunpack.c.h.b16 %v382
        %v676 = vunpack.c.l.b16 %v383
        %v677 = vunpack.c.h.b16 %v383
        %v678 = vunpack.c.l.b16 %v384
        %v679 = vunpack.c.h.b16 %v384
        %v680 = vunpack.c.l.b16 %v385
        %v681 = vunpack.c.h.b16 %v385
        %v682 = vunpack.c.l.b16 %v386
        %v683 = vunpack.c.h.b16 %v386
        %v684 = vunpack.c.l.b16 %v387
        %v685 = vunpack.c.h.b16 %v387
        %v686 = vunpack.c.l.b16 %v388
        %v687 = vunpack.c.h.b16 %v388
        %v688 = vunpack.c.l.b16 %v389
        %v689 = vunpack.c.h.b16 %v389
        %v690 = vunpack.c.l.b16 %v390
        %v691 = vunpack.c.h.b16 %v390
        %v692 = vunpack.c.l.b16 %v391
        %v693 = vunpack.c.h.b16 %v391
        %v694 = vunpack.c.l.b16 %v392
        %v695 = vunpack.c.h.b16 %v392
        %v696 = vunpack.c.l.b16 %v393
        %v697 = vunpack.c.h.b16 %v393
        %v698 = vunpack.c.l.b16 %v394
        %v699 = vunpack.c.h.b16 %v394
        %v700 = vunpack.c.l.b16 %v395
        %v701 = vunpack.c.h.b16 %v395
        %v702 = vunpack.c.l.b16 %v396
        %v703 = vunpack.c.h.b16 %v396
        %v704 = vunpack.c.l.b16 %v397
        %v705 = vunpack.c.h.b16 %v397
        %v706 = vunpack.c.l.b16 %v398
        %v707 = vunpack.c.h.b16 %v398
        %v708 = vunpack.c.l.b16 %v399
        %v709 = vunpack.c.h.b16 %v399
        %v710 = vunpack.c.l.b16 %v400
        %v711 = vunpack.c.h.b16 %v400
        %v712 = vunpack.c.l.b16 %v401
        %v713 = vunpack.c.h.b16 %v401
        %v714 = vunpack.c.l.b16 %v402
        %v715 = vunpack.c.h.b16 %v402
        %v716 = vunpack.c.l.b16 %v403
        %v717 = vunpack.c.h.b16 %v403
        %v718 = vunpack.c.l.b16 %v404
        %v719 = vunpack.c.h.b16 %v404
        %v720 = vunpack.c.l.b16 %v405
        %v721 = vunpack.c.h.b16 %v405
        %v722 = vunpack.c.l.b16 %v406
        %v723 = vunpack.c.h.b16 %v406
        %v724 = vunpack.c.l.b16 %v407
        %v725 = vunpack.c.h.b16 %v407
        %v726 = vunpack.c.l.b16 %v408
        %v727 = vunpack.c.h.b16 %v408
        %v728 = vunpack.c.l.b16 %v409
        %v729 = vunpack.c.h.b16 %v409
        %v730 = vpack.c.b16 %v544, %v538
        %v731 = vpack.c.b16 %v545, %v539
        %v732 = vpack.c.b16 %v546, %v540
        %v733 = vpack.c.b16 %v547, %v541
        %v734 = vpack.c.b16 %v548, %v542
        %v735 = vpack.c.b16 %v549, %v543
        %v736 = vpack.c.b16 %v556, %v550
        %v737 = vpack.c.b16 %v557, %v551
        %v738 = vpack.c.b16 %v558, %v552
        %v739 = vpack.c.b16 %v559, %v553
        %v740 = vpack.c.b16 %v560, %v554
        %v741 = vpack.c.b16 %v561, %v555
        %v742 = vpack.c.b16 %v568, %v562
        %v743 = vpack.c.b16 %v569, %v563
        %v744 = vpack.c.b16 %v570, %v564
        %v745 = vpack.c.b16 %v571, %v565
        %v746 = vpack.c.b16 %v572, %v566
        %v747 = vpack.c.b16 %v573, %v567
        %v748 = vpack.c.b16 %v580, %v574
        %v749 = vpack.c.b16 %v581, %v575
        %v750 = vpack.c.b16 %v582, %v576
        %v751 = vpack.c.b16 %v583, %v577
        %v752 = vpack.c.b16 %v584, %v578
        %v753 = vpack.c.b16 %v585, %v579
        %v754 = vpack.c.b16 %v592, %v586
        %v755 = vpack.c.b16 %v593, %v587
        %v756 = vpack.c.b16 %v594, %v588
        %v757 = vpack.c.b16 %v595, %v589
        %v758 = vpack.c.b16 %v596, %v590
        %v759 = vpack.c.b16 %v597, %v591
        %v760 = vpack.c.b16 %v604, %v598
        %v761 = vpack.c.b16 %v605, %v599
        %v762 = vpack.c.b16 %v606, %v600
        %v763 = vpack.c.b16 %v607, %v601
        %v764 = vpack.c.b16 %v608, %v602
        %v765 = vpack.c.b16 %v609, %v603
        %v766 = vpack.c.b16 %v616, %v610
        %v767 = vpack.c.b16 %v617, %v611
        %v768 = vpack.c.b16 %v618, %v612
        %v769 = vpack.c.b16 %v619, %v613
        %v770 = vpack.c.b16 %v620, %v614
        %v771 = vpack.c.b16 %v621, %v615
        %v772 = vpack.c.b16 %v628, %v622
        %v773 = vpack.c.b16 %v629, %v623
        %v774 = vpack.c.b16 %v630, %v624
        %v775 = vpack.c.b16 %v631, %v625
        %v776 = vpack.c.b16 %v632, %v626
        %v777 = vpack.c.b16 %v633, %v627
        %v778 = vpack.c.b16 %v640, %v634
        %v779 = vpack.c.b16 %v641, %v635
        %v780 = vpack.c.b16 %v642, %v636
        %v781 = vpack.c.b16 %v643, %v637
        %v782 = vpack.c.b16 %v644, %v638
        %v783 = vpack.c.b16 %v645, %v639
        %v784 = vpack.c.b16 %v652, %v646
        %v785 = vpack.c.b16 %v653, %v647
        %v786 = vpack.c.b16 %v654, %v648
        %v787 = vpack.c.b16 %v655, %v649
        %v788 = vpack.c.b16 %v656, %v650
        %v789 = vpack.c.b16 %v657, %v651
        %v790 = vpack.c.b16 %v664, %v658
        %v791 = vpack.c.b16 %v665, %v659
        %v792 = vpack.c.b16 %v666, %v660
        %v793 = vpack.c.b16 %v667, %v661
        %v794 = vpack.c.b16 %v668, %v662
        %v795 = vpack.c.b16 %v669, %v663
        %v796 = vpack.c.b16 %v676, %v670
        %v797 = vpack.c.b16 %v677, %v671
        %v798 = vpack.c.b16 %v678, %v672
        %v799 = vpack.c.b16 %v679, %v673
        %v800 = vpack.c.b16 %v680, %v674
        %v801 = vpack.c.b16 %v681, %v675
        %v802 = vpack.c.b16 %v688, %v682
        %v803 = vpack.c.b16 %v689, %v683
        %v804 = vpack.c.b16 %v690, %v684
        %v805 = vpack.c.b16 %v691, %v685
        %v806 = vpack.c.b16 %v692, %v686
        %v807 = vpack.c.b16 %v693, %v687
        %v808 = vpack.c.b16 %v700, %v694
        %v809 = vpack.c.b16 %v701, %v695
        %v810 = vpack.c.b16 %v702, %v696
        %v811 = vpack.c.b16 %v703, %v697
        %v812 = vpack.c.b16 %v704, %v698
        %v813 = vpack.c.b16 %v705, %v699
        %v814 = vpack.c.b16 %v712, %v706
        %v815 = vpack.c.b16 %v713, %v707
        %v816 = vpack.c.b16 %v714, %v708
        %v817 = vpack.c.b16 %v715, %v709
        %v818 = vpack.c.b16 %v716, %v710
        %v819 = vpack.c.b16 %v717, %v711
        %v820 = vpack.c.b16 %v724, %v718
        %v821 = vpack.c.b16 %v725, %v719
        %v822 = vpack.c.b16 %v726, %v720
        %v823 = vpack.c.b16 %v727, %v721
        %v824 = vpack.c.b16 %v728, %v722
        %v825 = vpack.c.b16 %v729, %v723
        %922 = vmatprep.subr.bf16.mxu0 %v773
        %923 = vmatpush1.bf16.msra.mxu0 %v772
        %924 = vmatprep.subr.bf16.mxu0 %v767
        %925 = vmatpush1.bf16.msra.mxu0 %v766
        %926 = vmatprep.subr.bf16.mxu0 %v761
        %927 = vmatpush1.bf16.msra.mxu0 %v760
        %928 = vmatprep.subr.bf16.mxu0 %v755
        %929 = vmatpush1.bf16.msra.mxu0 %v754
        %930 = vmatprep.subr.bf16.mxu0 %v749
        %931 = vmatpush1.bf16.msra.mxu0 %v748
        %932 = vmatprep.subr.bf16.mxu0 %v743
        %933 = vmatpush1.bf16.msra.mxu0 %v742
        %934 = vmatprep.subr.bf16.mxu0 %v737
        %935 = vmatpush1.bf16.msra.mxu0 %v736
        %936 = vmatprep.subr.bf16.mxu0 %v731
        %937 = vmatpush1.bf16.msra.mxu0 %v730
        %938 = vmatprep.subr.bf16.mxu0 %v821
        %939 = vmatpush2.bf16.msra.mxu0 %v820
        %940 = vmatprep.subr.bf16.mxu0 %v815
        %941 = vmatpush2.bf16.msra.mxu0 %v814
        %942 = vmatprep.subr.bf16.mxu0 %v809
        %943 = vmatpush2.bf16.msra.mxu0 %v808
        %944 = vmatprep.subr.bf16.mxu0 %v803
        %945 = vmatpush2.bf16.msra.mxu0 %v802
        %946 = vmatprep.subr.bf16.mxu0 %v797
        %947 = vmatpush2.bf16.msra.mxu0 %v796
        %948 = vmatprep.subr.bf16.mxu0 %v791
        %949 = vmatpush2.bf16.msra.mxu0 %v790
        %950 = vmatprep.subr.bf16.mxu0 %v785
        %951 = vmatpush2.bf16.msra.mxu0 %v784
        %952 = vmatprep.subr.bf16.mxu0 %v779
        %953 = vmatpush2.bf16.msra.mxu0 %v778
        %954 = vmatprep.mubr.bf16.mxu0 %v313
        %955 = vmatmul.mubr.bf16.gmra.mxu0 %v312
        %v956 = vpop.f32.mrf.mxu0
        %v957 = vadd.f32 %v415, %v956
        %v958 = vpop.f32.mrf.mxu0
        %v959 = vadd.f32 %v419, %v958
        %v960 = vpop.f32.mrf.mxu0
        %v961 = vpop.f32.mrf.mxu0
        %962 = vdwg.mxu0
        %963 = vmatprep.subr.bf16.mxu0 %v775
        %964 = vmatpush1.bf16.msra.mxu0 %v774
        %965 = vmatprep.subr.bf16.mxu0 %v769
        %966 = vmatpush1.bf16.msra.mxu0 %v768
        %967 = vmatprep.subr.bf16.mxu0 %v763
        %968 = vmatpush1.bf16.msra.mxu0 %v762
        %969 = vmatprep.subr.bf16.mxu0 %v757
        %970 = vmatpush1.bf16.msra.mxu0 %v756
        %971 = vmatprep.subr.bf16.mxu0 %v751
        %972 = vmatpush1.bf16.msra.mxu0 %v750
        %973 = vmatprep.subr.bf16.mxu0 %v745
        %974 = vmatpush1.bf16.msra.mxu0 %v744
        %975 = vmatprep.subr.bf16.mxu0 %v739
        %976 = vmatpush1.bf16.msra.mxu0 %v738
        %977 = vmatprep.subr.bf16.mxu0 %v733
        %978 = vmatpush1.bf16.msra.mxu0 %v732
        %979 = vmatprep.subr.bf16.mxu0 %v823
        %980 = vmatpush2.bf16.msra.mxu0 %v822
        %981 = vmatprep.subr.bf16.mxu0 %v817
        %982 = vmatpush2.bf16.msra.mxu0 %v816
        %983 = vmatprep.subr.bf16.mxu0 %v811
        %984 = vmatpush2.bf16.msra.mxu0 %v810
        %985 = vmatprep.subr.bf16.mxu0 %v805
        %986 = vmatpush2.bf16.msra.mxu0 %v804
        %987 = vmatprep.subr.bf16.mxu0 %v799
        %988 = vmatpush2.bf16.msra.mxu0 %v798
        %989 = vmatprep.subr.bf16.mxu0 %v793
        %990 = vmatpush2.bf16.msra.mxu0 %v792
        %991 = vmatprep.subr.bf16.mxu0 %v787
        %992 = vmatpush2.bf16.msra.mxu0 %v786
        %993 = vmatprep.subr.bf16.mxu0 %v781
        %994 = vmatpush2.bf16.msra.mxu0 %v780
        %995 = vmatprep.mubr.bf16.mxu0 %v313
        %996 = vmatmul.mubr.bf16.gmra.mxu0 %v312
        %v997 = vpop.f32.mrf.mxu0
        %v998 = vadd.f32 %v423, %v997
        %v999 = vpop.f32.mrf.mxu0
        %v1000 = vadd.f32 %v427, %v999
        %v1001 = vpop.f32.mrf.mxu0
        %v1002 = vpop.f32.mrf.mxu0
        %1003 = vdwg.mxu0
        %1004 = vmatprep.subr.bf16.mxu0 %v777
        %1005 = vmatpush1.bf16.msra.mxu0 %v776
        %1006 = vmatprep.subr.bf16.mxu0 %v771
        %1007 = vmatpush1.bf16.msra.mxu0 %v770
        %1008 = vmatprep.subr.bf16.mxu0 %v765
        %1009 = vmatpush1.bf16.msra.mxu0 %v764
        %1010 = vmatprep.subr.bf16.mxu0 %v759
        %1011 = vmatpush1.bf16.msra.mxu0 %v758
        %1012 = vmatprep.subr.bf16.mxu0 %v753
        %1013 = vmatpush1.bf16.msra.mxu0 %v752
        %1014 = vmatprep.subr.bf16.mxu0 %v747
        %1015 = vmatpush1.bf16.msra.mxu0 %v746
        %1016 = vmatprep.subr.bf16.mxu0 %v741
        %1017 = vmatpush1.bf16.msra.mxu0 %v740
        %1018 = vmatprep.subr.bf16.mxu0 %v735
        %1019 = vmatpush1.bf16.msra.mxu0 %v734
        %1020 = vmatprep.subr.bf16.mxu0 %v825
        %1021 = vmatpush2.bf16.msra.mxu0 %v824
        %1022 = vmatprep.subr.bf16.mxu0 %v819
        %1023 = vmatpush2.bf16.msra.mxu0 %v818
        %1024 = vmatprep.subr.bf16.mxu0 %v813
        %1025 = vmatpush2.bf16.msra.mxu0 %v812
        %1026 = vmatprep.subr.bf16.mxu0 %v807
        %1027 = vmatpush2.bf16.msra.mxu0 %v806
        %1028 = vmatprep.subr.bf16.mxu0 %v801
        %1029 = vmatpush2.bf16.msra.mxu0 %v800
        %1030 = vmatprep.subr.bf16.mxu0 %v795
        %1031 = vmatpush2.bf16.msra.mxu0 %v794
        %1032 = vmatprep.subr.bf16.mxu0 %v789
        %1033 = vmatpush2.bf16.msra.mxu0 %v788
        %1034 = vmatprep.subr.bf16.mxu0 %v783
        %1035 = vmatpush2.bf16.msra.mxu0 %v782
        %1036 = vmatprep.mubr.bf16.mxu0 %v313
        %1037 = vmatmul.mubr.bf16.gmra.mxu0 %v312
        %v1038 = vpop.f32.mrf.mxu0
        %v1039 = vadd.f32 %v431, %v1038
        %v1040 = vpop.f32.mrf.mxu0
        %v1041 = vadd.f32 %v435, %v1040
        %v1042 = vpop.f32.mrf.mxu0
        %v1043 = vpop.f32.mrf.mxu0
        %1044 = vdwg.mxu0
        %v1045 = vpack.c.bf16 %v957, %v957
        %v1046 = vpack.c.bf16 %v959, %v959
        %v1047 = vpack.c.bf16 %v998, %v998
        %v1048 = vpack.c.bf16 %v1000, %v1000
        %v1049 = vpack.c.bf16 %v1039, %v1039
        %v1050 = vpack.c.bf16 %v1041, %v1041
        %v1057 = vunpack.c.l.b16 %v1045
        %v1058 = vunpack.c.l.b16 %v1046
        %v1059 = vunpack.c.l.b16 %v1047
        %v1060 = vunpack.c.l.b16 %v1048
        %v1061 = vunpack.c.l.b16 %v1049
        %v1062 = vunpack.c.l.b16 %v1050
        %v1063 = vpack.c.b16 %v1058, %v1057
        %v1064 = vpack.c.b16 %v1060, %v1059
        %v1065 = vpack.c.b16 %v1062, %v1061
        %1069 = vst [vmem:[%s257] sm:$0xff] %v1063
        %1070 = vst [vmem:[%s257 + $0x8] sm:$0xff] %v1064
        %1071 = vst [vmem:[%s257 + $0x10] sm:$0xff] %v1065
        %p1072 = scmp.lt.s32.totalorder %s20, 1
        %s1073 = scalar_select %p1072, %s20, 1
        %s1074 = smul.addr %s1073, 6
        %s1075 = smul.addr %s1074, 4
        %s1076 = scalar_lea.vmem %s5, %s1075
        // Predicated region
        $region49: #{_lambda_.4} parent=39 // pred_check
          %p1077 = pneg %p148
        $region50: #{_lambda_.4} parent=39 // pred_check_branch
          %1079 = sbr.rel (%p1077) target = $region52
        $region51: #{_lambda_.4} parent=39 // pred_region
          _
        $region52: #{_lambda_.4} parent=39 // pred_fallthru
          _
      $region40: #{_lambda_.4} parent=5 // pred_fallthru
        _
      %p1080 = scmp.le.s32.totalorder 2, %s15
      // Predicated region
      $region53: #{_lambda_.4} parent=5 // pred_check
        %p1081 = pneg %p1080
      $region54: #{_lambda_.4} parent=5 // pred_check_branch
        %1083 = sbr.rel (%p1081) target = $region56
      $region55: #{_lambda_.4} parent=5 // pred_region
        %s1084 = ssub.s32 %s15, 2
        // Predicated region
        $region57: #{_lambda_.4} parent=55 // pred_check
          %p1085 = pneg %p154
        $region58: #{_lambda_.4} parent=55 // pred_check_branch
          %1087 = sbr.rel (%p1085) target = $region60
        $region59: #{_lambda_.4} parent=55 // pred_region
          %p1088 = scmp.lt.s32.totalorder %s21, 1
          %s1089 = scalar_select %p1088, %s21, 1
          %s1090 = smul.addr %s1089, 6
          %s1091 = smul.addr %s1090, 4
          %s1092 = scalar_lea.vmem %s5, %s1091
        $region60: #{_lambda_.4} parent=55 // pred_fallthru
          _
      $region56: #{_lambda_.4} parent=5 // pred_fallthru
        _
    $region6: #{_lambda_.4} parent=1 // loop_footer
      %s19 = sadd.s32 1, %s15
    $region7: #{_lambda_.4} parent=1 // loop_footer_branch
      %14 = sbr.rel target = $region3
    $region8: #{_lambda_.4} parent=1 // loop_exit
      _
    %1093 = vsyncpa [#allocation3], 1
    %s1094 = scalar_lea.sflag [#allocation3], 1
    %1095 = vsyncpa %s1094, 1
    %1096 = vsyncpa [#allocation5], 1

// kernel: _lambda_.7
$region0: #{_lambda_.7}
  #allocation0 [shape = 'u32[]', space=smem, size = 0x4, offset = 0x4, fixed_abs, tag = 'smem constant byte address 0x4 - core index']
  #allocation1 [shape = 'u32[144,128]{1,0:T(1,128)}', space=vmem, size = 0x12000, scoped, tag = 'internal scratch']
  %s0 = inlined_call_operand.vmem [shape: f32[16,256], index: 0, kind: input, shape index: {}]
  %s1 = inlined_call_operand.vmem [shape: f32[1,256], index: 1, kind: input, shape index: {}]
  %s2 = inlined_call_operand.vmem [shape: f32[1,256], index: 2, kind: input, shape index: {}]
  %s3 = inlined_call_operand.hbm [shape: bf16[256,1024], index: 3, kind: input, shape index: {}]
  %s4 = inlined_call_operand.vmem [shape: f32[1,1024], index: 4, kind: input, shape index: {}]
  %s5 = inlined_call_operand.vmem [shape: bf16[1024,256], index: 5, kind: input, shape index: {}]
  %s6 = inlined_call_operand.vmem [shape: f32[1,256], index: 6, kind: input, shape index: {}]
  %s7 = inlined_call_operand.hbm [shape: f32[16,256], index: 7, kind: output, shape index: {}]
  %s8 = sld [smem:[#allocation0]]
  $region65: #{_lambda_.7} parent=0
    _
  %s10 = ssub.s32 1, %s8
  %s11 = scalar_select 0, %s10, %s8
  $region1: #{_lambda_.7} parent=0
    #allocation2 [shape = 'u8[524288]{0}', space=vmem, size = 0x80000, scoped, tag = 'input window, operand 3, single buffered']
    #allocation3 [shape = 's32[2]{0}', space=sflag, size = 0x8, scoped, tag = 'scoped memory for _lambda_.7']
    #allocation4 [shape = 's32[2]{0}', space=sflag, size = 0x8, scoped, tag = 'scoped memory for _lambda_.7']
    #allocation5 [shape = 'u8[16384]{0}', space=vmem, size = 0x4000, scoped, tag = 'output window, operand 0']
    %12 = vsyncpa [#allocation3], 0
    %13 = vsyncpa [#allocation4], 0
    %s14 = scalar_lea.sflag [#allocation4], 1
    %15 = vsyncpa %s14, 0
    loop: start=0, step=1, limit=4
    $region2: #{_lambda_.7} parent=1 // loop_pre_header
      _
    $region3: #{_lambda_.7} parent=1 // loop_header
      %s17 = sphi 0, %s21
      %p18 = scmp.ge.s32.totalorder %s17, 4
      %s27 = sphi 0, %s29
      %s30 = sphi 0, %s27
      %s31 = sphi 0, %s30
      %s47 = sphi 0, %s31
      %s51 = sphi 0, %s51
      %s53 = sphi 0, %s51
      %s54 = sphi 0, %s53
      %s68 = sphi 0, %s54
      %s72 = sphi 0, %s72
      %s74 = sphi 0, %s72
      %s75 = sphi 0, %s74
      %s89 = sphi 0, %s75
      %s93 = sphi 0, %s93
      %s95 = sphi 0, %s93
      %s96 = sphi 0, %s95
      %s110 = sphi 0, %s96
      %s114 = sphi 0, %s114
      %s116 = sphi 0, %s114
      %s117 = sphi 0, %s116
      %s131 = sphi 0, %s117
      %s135 = sphi 0, %s135
      %s137 = sphi 0, %s135
      %s138 = sphi 0, %s137
      %s152 = sphi 0, %s138
      %s156 = sphi 0, %s156
      %s158 = sphi 0, %s156
      %s159 = sphi 0, %s158
      %s173 = sphi 0, %s159
      %s179 = sphi 0, %s181
      %s182 = sphi 0, %s179
      %s183 = sphi 0, %s182
      %s199 = sphi 0, %s183
    $region4: #{_lambda_.7} parent=1 // loop_header_branch
      %20 = sbr.rel (%p18) target = $region8
    $region5: #{_lambda_.7} parent=1 // loop_body
      %s22 = ssub.s32 %s17, 1
      %s23 = ssub.s32 %s17, 2
      %s24 = sadd.s32 %s17, 1
      %s25 = ssub.s32 %s17, %s24
      %p26 = scmp.eq.s32.totalorder %s25, 0
      %s28 = sadd.s32 %s27, 1
      %s29 = scalar_select %p26, %s27, %s28
      %p32 = pneg %p26
      %p33 = scmp.eq.s32.totalorder %s17, 1
      %p34 = por %p32, %p33
      %p35 = scmp.ne.s32.totalorder %s27, %s30
      %p36 = scmp.eq.s32.totalorder %s17, 0
      %p37 = por %p35, %p36
      %p38 = scmp.ne.s32.totalorder %s27, %s30
      %p39 = scmp.eq.s32.totalorder %s22, 1
      %p40 = por %p38, %p39
      %p41 = scmp.ne.s32.totalorder %s30, %s31
      %p42 = scmp.eq.s32.totalorder %s22, 0
      %p43 = por %p41, %p42
      %p44 = scmp.ne.s32.totalorder %s30, %s31
      %p45 = scmp.eq.s32.totalorder %s23, 1
      %p46 = por %p44, %p45
      %p48 = scmp.ne.s32.totalorder %s31, %s47
      %p49 = scmp.eq.s32.totalorder %s23, 0
      %p50 = por %p48, %p49
      %s52 = sadd.s32 %s51, 1
      %p55 = scmp.eq.s32.totalorder %s17, 1
      %p56 = scmp.ne.s32.totalorder %s51, %s53
      %p57 = scmp.eq.s32.totalorder %s17, 0
      %p58 = por %p56, %p57
      %p59 = scmp.ne.s32.totalorder %s51, %s53
      %p60 = scmp.eq.s32.totalorder %s22, 1
      %p61 = por %p59, %p60
      %p62 = scmp.ne.s32.totalorder %s53, %s54
      %p63 = scmp.eq.s32.totalorder %s22, 0
      %p64 = por %p62, %p63
      %p65 = scmp.ne.s32.totalorder %s53, %s54
      %p66 = scmp.eq.s32.totalorder %s23, 1
      %p67 = por %p65, %p66
      %p69 = scmp.ne.s32.totalorder %s54, %s68
      %p70 = scmp.eq.s32.totalorder %s23, 0
      %p71 = por %p69, %p70
      %s73 = sadd.s32 %s72, 1
      %p76 = scmp.eq.s32.totalorder %s17, 1
      %p77 = scmp.ne.s32.totalorder %s72, %s74
      %p78 = scmp.eq.s32.totalorder %s17, 0
      %p79 = por %p77, %p78
      %p80 = scmp.ne.s32.totalorder %s72, %s74
      %p81 = scmp.eq.s32.totalorder %s22, 1
      %p82 = por %p80, %p81
      %p83 = scmp.ne.s32.totalorder %s74, %s75
      %p84 = scmp.eq.s32.totalorder %s22, 0
      %p85 = por %p83, %p84
      %p86 = scmp.ne.s32.totalorder %s74, %s75
      %p87 = scmp.eq.s32.totalorder %s23, 1
      %p88 = por %p86, %p87
      %p90 = scmp.ne.s32.totalorder %s75, %s89
      %p91 = scmp.eq.s32.totalorder %s23, 0
      %p92 = por %p90, %p91
      %s94 = sadd.s32 %s93, 1
      %p97 = scmp.eq.s32.totalorder %s17, 1
      %p98 = scmp.ne.s32.totalorder %s93, %s95
      %p99 = scmp.eq.s32.totalorder %s17, 0
      %p100 = por %p98, %p99
      %p101 = scmp.ne.s32.totalorder %s93, %s95
      %p102 = scmp.eq.s32.totalorder %s22, 1
      %p103 = por %p101, %p102
      %p104 = scmp.ne.s32.totalorder %s95, %s96
      %p105 = scmp.eq.s32.totalorder %s22, 0
      %p106 = por %p104, %p105
      %p107 = scmp.ne.s32.totalorder %s95, %s96
      %p108 = scmp.eq.s32.totalorder %s23, 1
      %p109 = por %p107, %p108
      %p111 = scmp.ne.s32.totalorder %s96, %s110
      %p112 = scmp.eq.s32.totalorder %s23, 0
      %p113 = por %p111, %p112
      %s115 = sadd.s32 %s114, 1
      %p118 = scmp.eq.s32.totalorder %s17, 1
      %p119 = scmp.ne.s32.totalorder %s114, %s116
      %p120 = scmp.eq.s32.totalorder %s17, 0
      %p121 = por %p119, %p120
      %p122 = scmp.ne.s32.totalorder %s114, %s116
      %p123 = scmp.eq.s32.totalorder %s22, 1
      %p124 = por %p122, %p123
      %p125 = scmp.ne.s32.totalorder %s116, %s117
      %p126 = scmp.eq.s32.totalorder %s22, 0
      %p127 = por %p125, %p126
      %p128 = scmp.ne.s32.totalorder %s116, %s117
      %p129 = scmp.eq.s32.totalorder %s23, 1
      %p130 = por %p128, %p129
      %p132 = scmp.ne.s32.totalorder %s117, %s131
      %p133 = scmp.eq.s32.totalorder %s23, 0
      %p134 = por %p132, %p133
      %s136 = sadd.s32 %s135, 1
      %p139 = scmp.eq.s32.totalorder %s17, 1
      %p140 = scmp.ne.s32.totalorder %s135, %s137
      %p141 = scmp.eq.s32.totalorder %s17, 0
      %p142 = por %p140, %p141
      %p143 = scmp.ne.s32.totalorder %s135, %s137
      %p144 = scmp.eq.s32.totalorder %s22, 1
      %p145 = por %p143, %p144
      %p146 = scmp.ne.s32.totalorder %s137, %s138
      %p147 = scmp.eq.s32.totalorder %s22, 0
      %p148 = por %p146, %p147
      %p149 = scmp.ne.s32.totalorder %s137, %s138
      %p150 = scmp.eq.s32.totalorder %s23, 1
      %p151 = por %p149, %p150
      %p153 = scmp.ne.s32.totalorder %s138, %s152
      %p154 = scmp.eq.s32.totalorder %s23, 0
      %p155 = por %p153, %p154
      %s157 = sadd.s32 %s156, 1
      %p160 = scmp.eq.s32.totalorder %s17, 1
      %p161 = scmp.ne.s32.totalorder %s156, %s158
      %p162 = scmp.eq.s32.totalorder %s17, 0
      %p163 = por %p161, %p162
      %p164 = scmp.ne.s32.totalorder %s156, %s158
      %p165 = scmp.eq.s32.totalorder %s22, 1
      %p166 = por %p164, %p165
      %p167 = scmp.ne.s32.totalorder %s158, %s159
      %p168 = scmp.eq.s32.totalorder %s22, 0
      %p169 = por %p167, %p168
      %p170 = scmp.ne.s32.totalorder %s158, %s159
      %p171 = scmp.eq.s32.totalorder %s23, 1
      %p172 = por %p170, %p171
      %p174 = scmp.ne.s32.totalorder %s159, %s173
      %p175 = scmp.eq.s32.totalorder %s23, 0
      %p176 = por %p174, %p175
      %s177 = ssub.s32 %s17, %s24
      %p178 = scmp.eq.s32.totalorder %s177, 0
      %s180 = sadd.s32 %s179, 1
      %s181 = scalar_select %p178, %s179, %s180
      %p184 = pneg %p178
      %p185 = scmp.eq.s32.totalorder %s17, 1
      %p186 = por %p184, %p185
      %p187 = scmp.ne.s32.totalorder %s179, %s182
      %p188 = scmp.eq.s32.totalorder %s17, 0
      %p189 = por %p187, %p188
      %p190 = scmp.ne.s32.totalorder %s179, %s182
      %p191 = scmp.eq.s32.totalorder %s22, 1
      %p192 = por %p190, %p191
      %p193 = scmp.ne.s32.totalorder %s182, %s183
      %p194 = scmp.eq.s32.totalorder %s22, 0
      %p195 = por %p193, %p194
      %p196 = scmp.ne.s32.totalorder %s182, %s183
      %p197 = scmp.eq.s32.totalorder %s23, 1
      %p198 = por %p196, %p197
      %p200 = scmp.ne.s32.totalorder %s183, %s199
      %p201 = scmp.eq.s32.totalorder %s23, 0
      %p202 = por %p200, %p201
      %p203 = scmp.le.s32.totalorder 1, %s17
      %p204 = scmp.lt.s32.totalorder %s17, 3
      %p205 = pnand %p203, %p204
      %p206 = pneg %p205
      // Predicated region
      $region9: #{_lambda_.7} parent=5 // pred_check
        _
      $region10: #{_lambda_.7} parent=5 // pred_check_branch
        %208 = sbr.rel (%p205) target = $region12
      $region11: #{_lambda_.7} parent=5 // pred_region
        %s209 = ssub.s32 %s17, 1
        // Predicated region
        $region13: #{_lambda_.7} parent=11 // pred_check
          %p210 = pneg %p64
        $region14: #{_lambda_.7} parent=11 // pred_check_branch
          %212 = sbr.rel (%p210) target = $region16
        $region15: #{_lambda_.7} parent=11 // pred_region
          _
        $region16: #{_lambda_.7} parent=11 // pred_fallthru
          _
        // Predicated region
        $region17: #{_lambda_.7} parent=11 // pred_check
          %p213 = pneg %p85
        $region18: #{_lambda_.7} parent=11 // pred_check_branch
          %215 = sbr.rel (%p213) target = $region20
        $region19: #{_lambda_.7} parent=11 // pred_region
          _
        $region20: #{_lambda_.7} parent=11 // pred_fallthru
          _
        // Predicated region
        $region21: #{_lambda_.7} parent=11 // pred_check
          %p216 = pneg %p106
        $region22: #{_lambda_.7} parent=11 // pred_check_branch
          %218 = sbr.rel (%p216) target = $region24
        $region23: #{_lambda_.7} parent=11 // pred_region
          %s220 = ssub.s32 16384, 16384
          %221 = vsyncadd [#allocation3], %s220
          %s222 = sshll.u32 [#allocation2], 4
          %s223 = int_to_ptr.vmem [resolvable:$true] %s222
          %228 = dma.hbm_to_vmem [thread:$0]  %s3, 16384, %s223, [#allocation3], 512, 512, 32
        $region24: #{_lambda_.7} parent=11 // pred_fallthru
          _
        // Predicated region
        $region25: #{_lambda_.7} parent=11 // pred_check
          %p229 = pneg %p127
        $region26: #{_lambda_.7} parent=11 // pred_check_branch
          %231 = sbr.rel (%p229) target = $region28
        $region27: #{_lambda_.7} parent=11 // pred_region
          _
        $region28: #{_lambda_.7} parent=11 // pred_fallthru
          _
        // Predicated region
        $region29: #{_lambda_.7} parent=11 // pred_check
          %p232 = pneg %p148
        $region30: #{_lambda_.7} parent=11 // pred_check_branch
          %234 = sbr.rel (%p232) target = $region32
        $region31: #{_lambda_.7} parent=11 // pred_region
          _
        $region32: #{_lambda_.7} parent=11 // pred_fallthru
          _
        // Predicated region
        $region33: #{_lambda_.7} parent=11 // pred_check
          %p235 = pneg %p169
        $region34: #{_lambda_.7} parent=11 // pred_check_branch
          %237 = sbr.rel (%p235) target = $region36
        $region35: #{_lambda_.7} parent=11 // pred_region
          _
        $region36: #{_lambda_.7} parent=11 // pred_fallthru
          _
      $region12: #{_lambda_.7} parent=5 // pred_fallthru
        _
      %p238 = scmp.lt.s32.totalorder %s17, 2
      // Predicated region
      $region37: #{_lambda_.7} parent=5 // pred_check
        %p239 = pneg %p238
      $region38: #{_lambda_.7} parent=5 // pred_check_branch
        %241 = sbr.rel (%p239) target = $region40
      $region39: #{_lambda_.7} parent=5 // pred_region
        // Predicated region
        $region41: #{_lambda_.7} parent=39 // pred_check
          %p242 = pneg %p37
        $region42: #{_lambda_.7} parent=39 // pred_check_branch
          %244 = sbr.rel (%p242) target = $region44
        $region43: #{_lambda_.7} parent=39 // pred_region
          %p245 = scmp.lt.s32.totalorder %s17, 1
          %s246 = scalar_select %p245, %s17, 1
          %s247 = smul.addr %s246, 2
          %s248 = smul.addr %s247, 8
          %s249 = scalar_lea.vmem %s0, %s248
        $region44: #{_lambda_.7} parent=39 // pred_fallthru
          _
      $region40: #{_lambda_.7} parent=5 // pred_fallthru
        _
      %p250 = scmp.le.s32.totalorder 1, %s17
      %p251 = scmp.lt.s32.totalorder %s17, 3
      %p252 = pnand %p250, %p251
      %p253 = pneg %p252
      // Predicated region
      $region45: #{_lambda_.7} parent=5 // pred_check
        _
      $region46: #{_lambda_.7} parent=5 // pred_check_branch
        %255 = sbr.rel (%p252) target = $region48
      $region47: #{_lambda_.7} parent=5 // pred_region
        %s256 = ssub.s32 %s17, 1
        // Predicated region
        $region49: #{_lambda_.7} parent=47 // pred_check
          %p257 = pneg %p106
        $region50: #{_lambda_.7} parent=47 // pred_check_branch
          %259 = sbr.rel (%p257) target = $region52
        $region51: #{_lambda_.7} parent=47 // pred_region
          %260 = dma.done [#allocation3], 16384
        $region52: #{_lambda_.7} parent=47 // pred_fallthru
          _
        %p261 = scmp.lt.s32.totalorder %s22, 1
        %s262 = scalar_select %p261, %s22, 1
        %s263 = smul.addr %s262, 2
        %s264 = smul.addr %s263, 8
        %s265 = scalar_lea.vmem %s0, %s264
        %p266 = pneg %p43
        %p267 = pneg %p40
        %p268 = pneg %p64
        %p269 = pneg %p61
        %p270 = pneg %p85
        %p271 = pneg %p82
        %p272 = pneg %p106
        %p273 = pneg %p103
        %p274 = pneg %p127
        %p275 = pneg %p124
        %p276 = pneg %p148
        %p277 = pneg %p145
        %p278 = pneg %p169
        %p279 = pneg %p166
        %p280 = pneg %p195
        %p281 = pneg %p192
        %s282 = sand.u32 %s182, 1
        %s283 = scalar_lea.sflag [#allocation4], %s282
        %s284 = sand.u32 %s182, 1
        %s285 = smul.addr %s284, 16
        %s286 = scalar_lea.vmem [#allocation5], %s285
        %p287 = scmp.lt.s32.totalorder %s22, 1
        %s288 = scalar_select %p287, %s22, 1
        %s289 = smul.addr %s288, 2
        %s290 = smul.addr %s289, 8
        %s291 = scalar_lea.vmem %s0, %s290
        %v292 = vld [vmem:[%s291] sm:$0xff]
        %v293 = vld [vmem:[%s291 + $0x8] sm:$0xff]
        %v294 = vld [vmem:[%s1] sm:$0x3]
        %v295 = vld [vmem:[%s2] sm:$0x3]
        %v296 = vadd.f32 %v292, %v293
        %297 = vadd.xlane.f32.xlu0 %v296
        %v298 = vpop.xlane.xlu0 %297
        %v299 = vrcp.pop 256.0
        %v300 = vmul.f32 %v298, %v299
        %v301 = vsub.f32 %v292, %v300
        %v302 = vsub.f32 %v293, %v300
        %v303 = vmul.f32 %v301, %v301
        %v304 = vmul.f32 %v302, %v302
        %v305 = vadd.f32 %v303, %v304
        %306 = vadd.xlane.f32.xlu0 %v305
        %v307 = vpop.xlane.xlu0 %306
        %v308 = vmul.f32 %v307, 0.003921569
        %v309 = vrsqrt.pop %v308
        %v310 = vmul.f32 %v308, %v309
        %vm311 = vcmp.eq.f32.partialorder %v308, inf
        %v312 = vsel %vm311, %v308, %v310
        %vm313 = vcmp.eq.f32.partialorder %v308, 0.0
        %v314 = vand.u32 %v308, 2147483648
        %v315 = vsel %vm313, %v314, %v312
        %v316 = vadd.f32 %v315, 1e-06
        %v317 = vrcp.pop %v316
        %v318 = vmul.f32 %v301, %v317
        %v319 = vmul.f32 %v302, %v317
        %v321 = vlaneseq
        %v322 = vshrl.u32 %v321, 7
        %v323 = vsub.s32 0, %v322
        %v324 = vrot.slane %v294, %v323
        %v325 = vlaneseq
        %v326 = vshrl.u32 %v325, 7
        %v327 = vsub.s32 1, %v326
        %v328 = vrot.slane %v294, %v327
        %v331 = vmul.f32 %v324, %v318
        %v332 = vmul.f32 %v328, %v319
        %v334 = vlaneseq
        %v335 = vshrl.u32 %v334, 7
        %v336 = vsub.s32 0, %v335
        %v337 = vrot.slane %v295, %v336
        %v338 = vlaneseq
        %v339 = vshrl.u32 %v338, 7
        %v340 = vsub.s32 1, %v339
        %v341 = vrot.slane %v295, %v340
        %v344 = vadd.f32 %v331, %v337
        %v345 = vadd.f32 %v332, %v341
        %v346 = vpack.c.bf16 %v344, %v344
        %v347 = vpack.c.bf16 %v345, %v345
        %v348 = vld [vmem:[#allocation2] sm:$0xff]
        %v349 = vld [vmem:[#allocation2 + $0x8] sm:$0xff]
        %v350 = vld [vmem:[#allocation2 + $0x10] sm:$0xff]
        %v351 = vld [vmem:[#allocation2 + $0x18] sm:$0xff]
        %v352 = vld [vmem:[#allocation2 + $0x20] sm:$0xff]
        %v353 = vld [vmem:[#allocation2 + $0x28] sm:$0xff]
        %v354 = vld [vmem:[#allocation2 + $0x30] sm:$0xff]
        %v355 = vld [vmem:[#allocation2 + $0x38] sm:$0xff]
        %v356 = vld [vmem:[#allocation2 + $0x40] sm:$0xff]
        %v357 = vld [vmem:[#allocation2 + $0x48] sm:$0xff]
        %v358 = vld [vmem:[#allocation2 + $0x50] sm:$0xff]
        %v359 = vld [vmem:[#allocation2 + $0x58] sm:$0xff]
        %v360 = vld [vmem:[#allocation2 + $0x60] sm:$0xff]
        %v361 = vld [vmem:[#allocation2 + $0x68] sm:$0xff]
        %v362 = vld [vmem:[#allocation2 + $0x70] sm:$0xff]
        %v363 = vld [vmem:[#allocation2 + $0x78] sm:$0xff]
        %v364 = vld [vmem:[#allocation2 + $0x80] sm:$0xff]
        %v365 = vld [vmem:[#allocation2 + $0x88] sm:$0xff]
        %v366 = vld [vmem:[#allocation2 + $0x90] sm:$0xff]
        %v367 = vld [vmem:[#allocation2 + $0x98] sm:$0xff]
        %v368 = vld [vmem:[#allocation2 + $0xa0] sm:$0xff]
        %v369 = vld [vmem:[#allocation2 + $0xa8] sm:$0xff]
        %v370 = vld [vmem:[#allocation2 + $0xb0] sm:$0xff]
        %v371 = vld [vmem:[#allocation2 + $0xb8] sm:$0xff]
        %v372 = vld [vmem:[#allocation2 + $0xc0] sm:$0xff]
        %v373 = vld [vmem:[#allocation2 + $0xc8] sm:$0xff]
        %v374 = vld [vmem:[#allocation2 + $0xd0] sm:$0xff]
        %v375 = vld [vmem:[#allocation2 + $0xd8] sm:$0xff]
        %v376 = vld [vmem:[#allocation2 + $0xe0] sm:$0xff]
        %v377 = vld [vmem:[#allocation2 + $0xe8] sm:$0xff]
        %v378 = vld [vmem:[#allocation2 + $0xf0] sm:$0xff]
        %v379 = vld [vmem:[#allocation2 + $0xf8] sm:$0xff]
        %v380 = vld [vmem:[#allocation2 + $0x100] sm:$0xff]
        %v381 = vld [vmem:[#allocation2 + $0x108] sm:$0xff]
        %v382 = vld [vmem:[#allocation2 + $0x110] sm:$0xff]
        %v383 = vld [vmem:[#allocation2 + $0x118] sm:$0xff]
        %v384 = vld [vmem:[#allocation2 + $0x120] sm:$0xff]
        %v385 = vld [vmem:[#allocation2 + $0x128] sm:$0xff]
        %v386 = vld [vmem:[#allocation2 + $0x130] sm:$0xff]
        %v387 = vld [vmem:[#allocation2 + $0x138] sm:$0xff]
        %v388 = vld [vmem:[#allocation2 + $0x140] sm:$0xff]
        %v389 = vld [vmem:[#allocation2 + $0x148] sm:$0xff]
        %v390 = vld [vmem:[#allocation2 + $0x150] sm:$0xff]
        %v391 = vld [vmem:[#allocation2 + $0x158] sm:$0xff]
        %v392 = vld [vmem:[#allocation2 + $0x160] sm:$0xff]
        %v393 = vld [vmem:[#allocation2 + $0x168] sm:$0xff]
        %v394 = vld [vmem:[#allocation2 + $0x170] sm:$0xff]
        %v395 = vld [vmem:[#allocation2 + $0x178] sm:$0xff]
        %v396 = vld [vmem:[#allocation2 + $0x180] sm:$0xff]
        %v397 = vld [vmem:[#allocation2 + $0x188] sm:$0xff]
        %v398 = vld [vmem:[#allocation2 + $0x190] sm:$0xff]
        %v399 = vld [vmem:[#allocation2 + $0x198] sm:$0xff]
        %v400 = vld [vmem:[#allocation2 + $0x1a0] sm:$0xff]
        %v401 = vld [vmem:[#allocation2 + $0x1a8] sm:$0xff]
        %v402 = vld [vmem:[#allocation2 + $0x1b0] sm:$0xff]
        %v403 = vld [vmem:[#allocation2 + $0x1b8] sm:$0xff]
        %v404 = vld [vmem:[#allocation2 + $0x1c0] sm:$0xff]
        %v405 = vld [vmem:[#allocation2 + $0x1c8] sm:$0xff]
        %v406 = vld [vmem:[#allocation2 + $0x1d0] sm:$0xff]
        %v407 = vld [vmem:[#allocation2 + $0x1d8] sm:$0xff]
        %v408 = vld [vmem:[#allocation2 + $0x1e0] sm:$0xff]
        %v409 = vld [vmem:[#allocation2 + $0x1e8] sm:$0xff]
        %v410 = vld [vmem:[#allocation2 + $0x1f0] sm:$0xff]
        %v411 = vld [vmem:[#allocation2 + $0x1f8] sm:$0xff]
        %v412 = vld [vmem:[#allocation2 + $0x200] sm:$0xff]
        %v413 = vld [vmem:[#allocation2 + $0x208] sm:$0xff]
        %v414 = vld [vmem:[#allocation2 + $0x210] sm:$0xff]
        %v415 = vld [vmem:[#allocation2 + $0x218] sm:$0xff]
        %v416 = vld [vmem:[#allocation2 + $0x220] sm:$0xff]
        %v417 = vld [vmem:[#allocation2 + $0x228] sm:$0xff]
        %v418 = vld [vmem:[#allocation2 + $0x230] sm:$0xff]
        %v419 = vld [vmem:[#allocation2 + $0x238] sm:$0xff]
        %v420 = vld [vmem:[#allocation2 + $0x240] sm:$0xff]
        %v421 = vld [vmem:[#allocation2 + $0x248] sm:$0xff]
        %v422 = vld [vmem:[#allocation2 + $0x250] sm:$0xff]
        %v423 = vld [vmem:[#allocation2 + $0x258] sm:$0xff]
        %v424 = vld [vmem:[#allocation2 + $0x260] sm:$0xff]
        %v425 = vld [vmem:[#allocation2 + $0x268] sm:$0xff]
        %v426 = vld [vmem:[#allocation2 + $0x270] sm:$0xff]
        %v427 = vld [vmem:[#allocation2 + $0x278] sm:$0xff]
        %v428 = vld [vmem:[#allocation2 + $0x280] sm:$0xff]
        %v429 = vld [vmem:[#allocation2 + $0x288] sm:$0xff]
        %v430 = vld [vmem:[#allocation2 + $0x290] sm:$0xff]
        %v431 = vld [vmem:[#allocation2 + $0x298] sm:$0xff]
        %v432 = vld [vmem:[#allocation2 + $0x2a0] sm:$0xff]
        %v433 = vld [vmem:[#allocation2 + $0x2a8] sm:$0xff]
        %v434 = vld [vmem:[#allocation2 + $0x2b0] sm:$0xff]
        %v435 = vld [vmem:[#allocation2 + $0x2b8] sm:$0xff]
        %v436 = vld [vmem:[#allocation2 + $0x2c0] sm:$0xff]
        %v437 = vld [vmem:[#allocation2 + $0x2c8] sm:$0xff]
        %v438 = vld [vmem:[#allocation2 + $0x2d0] sm:$0xff]
        %v439 = vld [vmem:[#allocation2 + $0x2d8] sm:$0xff]
        %v440 = vld [vmem:[#allocation2 + $0x2e0] sm:$0xff]
        %v441 = vld [vmem:[#allocation2 + $0x2e8] sm:$0xff]
        %v442 = vld [vmem:[#allocation2 + $0x2f0] sm:$0xff]
        %v443 = vld [vmem:[#allocation2 + $0x2f8] sm:$0xff]
        %v444 = vld [vmem:[#allocation2 + $0x300] sm:$0xff]
        %v445 = vld [vmem:[#allocation2 + $0x308] sm:$0xff]
        %v446 = vld [vmem:[#allocation2 + $0x310] sm:$0xff]
        %v447 = vld [vmem:[#allocation2 + $0x318] sm:$0xff]
        %v448 = vld [vmem:[#allocation2 + $0x320] sm:$0xff]
        %v449 = vld [vmem:[#allocation2 + $0x328] sm:$0xff]
        %v450 = vld [vmem:[#allocation2 + $0x330] sm:$0xff]
        %v451 = vld [vmem:[#allocation2 + $0x338] sm:$0xff]
        %v452 = vld [vmem:[#allocation2 + $0x340] sm:$0xff]
        %v453 = vld [vmem:[#allocation2 + $0x348] sm:$0xff]
        %v454 = vld [vmem:[#allocation2 + $0x350] sm:$0xff]
        %v455 = vld [vmem:[#allocation2 + $0x358] sm:$0xff]
        %v456 = vld [vmem:[#allocation2 + $0x360] sm:$0xff]
        %v457 = vld [vmem:[#allocation2 + $0x368] sm:$0xff]
        %v458 = vld [vmem:[#allocation2 + $0x370] sm:$0xff]
        %v459 = vld [vmem:[#allocation2 + $0x378] sm:$0xff]
        %v460 = vld [vmem:[#allocation2 + $0x380] sm:$0xff]
        %v461 = vld [vmem:[#allocation2 + $0x388] sm:$0xff]
        %v462 = vld [vmem:[#allocation2 + $0x390] sm:$0xff]
        %v463 = vld [vmem:[#allocation2 + $0x398] sm:$0xff]
        %v464 = vld [vmem:[#allocation2 + $0x3a0] sm:$0xff]
        %v465 = vld [vmem:[#allocation2 + $0x3a8] sm:$0xff]
        %v466 = vld [vmem:[#allocation2 + $0x3b0] sm:$0xff]
        %v467 = vld [vmem:[#allocation2 + $0x3b8] sm:$0xff]
        %v468 = vld [vmem:[#allocation2 + $0x3c0] sm:$0xff]
        %v469 = vld [vmem:[#allocation2 + $0x3c8] sm:$0xff]
        %v470 = vld [vmem:[#allocation2 + $0x3d0] sm:$0xff]
        %v471 = vld [vmem:[#allocation2 + $0x3d8] sm:$0xff]
        %v472 = vld [vmem:[#allocation2 + $0x3e0] sm:$0xff]
        %v473 = vld [vmem:[#allocation2 + $0x3e8] sm:$0xff]
        %v474 = vld [vmem:[#allocation2 + $0x3f0] sm:$0xff]
        %v475 = vld [vmem:[#allocation2 + $0x3f8] sm:$0xff]
        %v476 = vld [vmem:[%s4] sm:$0xff]
        %v478 = vlaneseq
        %v479 = vshrl.u32 %v478, 7
        %v480 = vsub.s32 0, %v479
        %v481 = vrot.slane %v476, %v480
        %v482 = vlaneseq
        %v483 = vshrl.u32 %v482, 7
        %v484 = vsub.s32 1, %v483
        %v485 = vrot.slane %v476, %v484
        %v486 = vlaneseq
        %v487 = vshrl.u32 %v486, 7
        %v488 = vsub.s32 2, %v487
        %v489 = vrot.slane %v476, %v488
        %v490 = vlaneseq
        %v491 = vshrl.u32 %v490, 7
        %v492 = vsub.s32 3, %v491
        %v493 = vrot.slane %v476, %v492
        %v494 = vlaneseq
        %v495 = vshrl.u32 %v494, 7
        %v496 = vsub.s32 4, %v495
        %v497 = vrot.slane %v476, %v496
        %v498 = vlaneseq
        %v499 = vshrl.u32 %v498, 7
        %v500 = vsub.s32 5, %v499
        %v501 = vrot.slane %v476, %v500
        %v502 = vlaneseq
        %v503 = vshrl.u32 %v502, 7
        %v504 = vsub.s32 6, %v503
        %v505 = vrot.slane %v476, %v504
        %v506 = vlaneseq
        %v507 = vshrl.u32 %v506, 7
        %v508 = vsub.s32 7, %v507
        %v509 = vrot.slane %v476, %v508
        %v646 = vunpack.c.l.b16 %v348
        %v647 = vunpack.c.h.b16 %v348
        %v648 = vunpack.c.l.b16 %v349
        %v649 = vunpack.c.h.b16 %v349
        %v650 = vunpack.c.l.b16 %v350
        %v651 = vunpack.c.h.b16 %v350
        %v652 = vunpack.c.l.b16 %v351
        %v653 = vunpack.c.h.b16 %v351
        %v654 = vunpack.c.l.b16 %v352
        %v655 = vunpack.c.h.b16 %v352
        %v656 = vunpack.c.l.b16 %v353
        %v657 = vunpack.c.h.b16 %v353
        %v658 = vunpack.c.l.b16 %v354
        %v659 = vunpack.c.h.b16 %v354
        %v660 = vunpack.c.l.b16 %v355
        %v661 = vunpack.c.h.b16 %v355
        %v662 = vunpack.c.l.b16 %v356
        %v663 = vunpack.c.h.b16 %v356
        %v664 = vunpack.c.l.b16 %v357
        %v665 = vunpack.c.h.b16 %v357
        %v666 = vunpack.c.l.b16 %v358
        %v667 = vunpack.c.h.b16 %v358
        %v668 = vunpack.c.l.b16 %v359
        %v669 = vunpack.c.h.b16 %v359
        %v670 = vunpack.c.l.b16 %v360
        %v671 = vunpack.c.h.b16 %v360
        %v672 = vunpack.c.l.b16 %v361
        %v673 = vunpack.c.h.b16 %v361
        %v674 = vunpack.c.l.b16 %v362
        %v675 = vunpack.c.h.b16 %v362
        %v676 = vunpack.c.l.b16 %v363
        %v677 = vunpack.c.h.b16 %v363
        %v678 = vunpack.c.l.b16 %v364
        %v679 = vunpack.c.h.b16 %v364
        %v680 = vunpack.c.l.b16 %v365
        %v681 = vunpack.c.h.b16 %v365
        %v682 = vunpack.c.l.b16 %v366
        %v683 = vunpack.c.h.b16 %v366
        %v684 = vunpack.c.l.b16 %v367
        %v685 = vunpack.c.h.b16 %v367
        %v686 = vunpack.c.l.b16 %v368
        %v687 = vunpack.c.h.b16 %v368
        %v688 = vunpack.c.l.b16 %v369
        %v689 = vunpack.c.h.b16 %v369
        %v690 = vunpack.c.l.b16 %v370
        %v691 = vunpack.c.h.b16 %v370
        %v692 = vunpack.c.l.b16 %v371
        %v693 = vunpack.c.h.b16 %v371
        %v694 = vunpack.c.l.b16 %v372
        %v695 = vunpack.c.h.b16 %v372
        %v696 = vunpack.c.l.b16 %v373
        %v697 = vunpack.c.h.b16 %v373
        %v698 = vunpack.c.l.b16 %v374
        %v699 = vunpack.c.h.b16 %v374
        %v700 = vunpack.c.l.b16 %v375
        %v701 = vunpack.c.h.b16 %v375
        %v702 = vunpack.c.l.b16 %v376
        %v703 = vunpack.c.h.b16 %v376
        %v704 = vunpack.c.l.b16 %v377
        %v705 = vunpack.c.h.b16 %v377
        %v706 = vunpack.c.l.b16 %v378
        %v707 = vunpack.c.h.b16 %v378
        %v708 = vunpack.c.l.b16 %v379
        %v709 = vunpack.c.h.b16 %v379
        %v710 = vunpack.c.l.b16 %v380
        %v711 = vunpack.c.h.b16 %v380
        %v712 = vunpack.c.l.b16 %v381
        %v713 = vunpack.c.h.b16 %v381
        %v714 = vunpack.c.l.b16 %v382
        %v715 = vunpack.c.h.b16 %v382
        %v716 = vunpack.c.l.b16 %v383
        %v717 = vunpack.c.h.b16 %v383
        %v718 = vunpack.c.l.b16 %v384
        %v719 = vunpack.c.h.b16 %v384
        %v720 = vunpack.c.l.b16 %v385
        %v721 = vunpack.c.h.b16 %v385
        %v722 = vunpack.c.l.b16 %v386
        %v723 = vunpack.c.h.b16 %v386
        %v724 = vunpack.c.l.b16 %v387
        %v725 = vunpack.c.h.b16 %v387
        %v726 = vunpack.c.l.b16 %v388
        %v727 = vunpack.c.h.b16 %v388
        %v728 = vunpack.c.l.b16 %v389
        %v729 = vunpack.c.h.b16 %v389
        %v730 = vunpack.c.l.b16 %v390
        %v731 = vunpack.c.h.b16 %v390
        %v732 = vunpack.c.l.b16 %v391
        %v733 = vunpack.c.h.b16 %v391
        %v734 = vunpack.c.l.b16 %v392
        %v735 = vunpack.c.h.b16 %v392
        %v736 = vunpack.c.l.b16 %v393
        %v737 = vunpack.c.h.b16 %v393
        %v738 = vunpack.c.l.b16 %v394
        %v739 = vunpack.c.h.b16 %v394
        %v740 = vunpack.c.l.b16 %v395
        %v741 = vunpack.c.h.b16 %v395
        %v742 = vunpack.c.l.b16 %v396
        %v743 = vunpack.c.h.b16 %v396
        %v744 = vunpack.c.l.b16 %v397
        %v745 = vunpack.c.h.b16 %v397
        %v746 = vunpack.c.l.b16 %v398
        %v747 = vunpack.c.h.b16 %v398
        %v748 = vunpack.c.l.b16 %v399
        %v749 = vunpack.c.h.b16 %v399
        %v750 = vunpack.c.l.b16 %v400
        %v751 = vunpack.c.h.b16 %v400
        %v752 = vunpack.c.l.b16 %v401
        %v753 = vunpack.c.h.b16 %v401
        %v754 = vunpack.c.l.b16 %v402
        %v755 = vunpack.c.h.b16 %v402
        %v756 = vunpack.c.l.b16 %v403
        %v757 = vunpack.c.h.b16 %v403
        %v758 = vunpack.c.l.b16 %v404
        %v759 = vunpack.c.h.b16 %v404
        %v760 = vunpack.c.l.b16 %v405
        %v761 = vunpack.c.h.b16 %v405
        %v762 = vunpack.c.l.b16 %v406
        %v763 = vunpack.c.h.b16 %v406
        %v764 = vunpack.c.l.b16 %v407
        %v765 = vunpack.c.h.b16 %v407
        %v766 = vunpack.c.l.b16 %v408
        %v767 = vunpack.c.h.b16 %v408
        %v768 = vunpack.c.l.b16 %v409
        %v769 = vunpack.c.h.b16 %v409
        %v770 = vunpack.c.l.b16 %v410
        %v771 = vunpack.c.h.b16 %v410
        %v772 = vunpack.c.l.b16 %v411
        %v773 = vunpack.c.h.b16 %v411
        %v774 = vunpack.c.l.b16 %v412
        %v775 = vunpack.c.h.b16 %v412
        %v776 = vunpack.c.l.b16 %v413
        %v777 = vunpack.c.h.b16 %v413
        %v778 = vunpack.c.l.b16 %v414
        %v779 = vunpack.c.h.b16 %v414
        %v780 = vunpack.c.l.b16 %v415
        %v781 = vunpack.c.h.b16 %v415
        %v782 = vunpack.c.l.b16 %v416
        %v783 = vunpack.c.h.b16 %v416
        %v784 = vunpack.c.l.b16 %v417
        %v785 = vunpack.c.h.b16 %v417
        %v786 = vunpack.c.l.b16 %v418
        %v787 = vunpack.c.h.b16 %v418
        %v788 = vunpack.c.l.b16 %v419
        %v789 = vunpack.c.h.b16 %v419
        %v790 = vunpack.c.l.b16 %v420
        %v791 = vunpack.c.h.b16 %v420
        %v792 = vunpack.c.l.b16 %v421
        %v793 = vunpack.c.h.b16 %v421
        %v794 = vunpack.c.l.b16 %v422
        %v795 = vunpack.c.h.b16 %v422
        %v796 = vunpack.c.l.b16 %v423
        %v797 = vunpack.c.h.b16 %v423
        %v798 = vunpack.c.l.b16 %v424
        %v799 = vunpack.c.h.b16 %v424
        %v800 = vunpack.c.l.b16 %v425
        %v801 = vunpack.c.h.b16 %v425
        %v802 = vunpack.c.l.b16 %v426
        %v803 = vunpack.c.h.b16 %v426
        %v804 = vunpack.c.l.b16 %v427
        %v805 = vunpack.c.h.b16 %v427
        %v806 = vunpack.c.l.b16 %v428
        %v807 = vunpack.c.h.b16 %v428
        %v808 = vunpack.c.l.b16 %v429
        %v809 = vunpack.c.h.b16 %v429
        %v810 = vunpack.c.l.b16 %v430
        %v811 = vunpack.c.h.b16 %v430
        %v812 = vunpack.c.l.b16 %v431
        %v813 = vunpack.c.h.b16 %v431
        %v814 = vunpack.c.l.b16 %v432
        %v815 = vunpack.c.h.b16 %v432
        %v816 = vunpack.c.l.b16 %v433
        %v817 = vunpack.c.h.b16 %v433
        %v818 = vunpack.c.l.b16 %v434
        %v819 = vunpack.c.h.b16 %v434
        %v820 = vunpack.c.l.b16 %v435
        %v821 = vunpack.c.h.b16 %v435
        %v822 = vunpack.c.l.b16 %v436
        %v823 = vunpack.c.h.b16 %v436
        %v824 = vunpack.c.l.b16 %v437
        %v825 = vunpack.c.h.b16 %v437
        %v826 = vunpack.c.l.b16 %v438
        %v827 = vunpack.c.h.b16 %v438
        %v828 = vunpack.c.l.b16 %v439
        %v829 = vunpack.c.h.b16 %v439
        %v830 = vunpack.c.l.b16 %v440
        %v831 = vunpack.c.h.b16 %v440
        %v832 = vunpack.c.l.b16 %v441
        %v833 = vunpack.c.h.b16 %v441
        %v834 = vunpack.c.l.b16 %v442
        %v835 = vunpack.c.h.b16 %v442
        %v836 = vunpack.c.l.b16 %v443
        %v837 = vunpack.c.h.b16 %v443
        %v838 = vunpack.c.l.b16 %v444
        %v839 = vunpack.c.h.b16 %v444
        %v840 = vunpack.c.l.b16 %v445
        %v841 = vunpack.c.h.b16 %v445
        %v842 = vunpack.c.l.b16 %v446
        %v843 = vunpack.c.h.b16 %v446
        %v844 = vunpack.c.l.b16 %v447
        %v845 = vunpack.c.h.b16 %v447
        %v846 = vunpack.c.l.b16 %v448
        %v847 = vunpack.c.h.b16 %v448
        %v848 = vunpack.c.l.b16 %v449
        %v849 = vunpack.c.h.b16 %v449
        %v850 = vunpack.c.l.b16 %v450
        %v851 = vunpack.c.h.b16 %v450
        %v852 = vunpack.c.l.b16 %v451
        %v853 = vunpack.c.h.b16 %v451
        %v854 = vunpack.c.l.b16 %v452
        %v855 = vunpack.c.h.b16 %v452
        %v856 = vunpack.c.l.b16 %v453
        %v857 = vunpack.c.h.b16 %v453
        %v858 = vunpack.c.l.b16 %v454
        %v859 = vunpack.c.h.b16 %v454
        %v860 = vunpack.c.l.b16 %v455
        %v861 = vunpack.c.h.b16 %v455
        %v862 = vunpack.c.l.b16 %v456
        %v863 = vunpack.c.h.b16 %v456
        %v864 = vunpack.c.l.b16 %v457
        %v865 = vunpack.c.h.b16 %v457
        %v866 = vunpack.c.l.b16 %v458
        %v867 = vunpack.c.h.b16 %v458
        %v868 = vunpack.c.l.b16 %v459
        %v869 = vunpack.c.h.b16 %v459
        %v870 = vunpack.c.l.b16 %v460
        %v871 = vunpack.c.h.b16 %v460
        %v872 = vunpack.c.l.b16 %v461
        %v873 = vunpack.c.h.b16 %v461
        %v874 = vunpack.c.l.b16 %v462
        %v875 = vunpack.c.h.b16 %v462
        %v876 = vunpack.c.l.b16 %v463
        %v877 = vunpack.c.h.b16 %v463
        %v878 = vunpack.c.l.b16 %v464
        %v879 = vunpack.c.h.b16 %v464
        %v880 = vunpack.c.l.b16 %v465
        %v881 = vunpack.c.h.b16 %v465
        %v882 = vunpack.c.l.b16 %v466
        %v883 = vunpack.c.h.b16 %v466
        %v884 = vunpack.c.l.b16 %v467
        %v885 = vunpack.c.h.b16 %v467
        %v886 = vunpack.c.l.b16 %v468
        %v887 = vunpack.c.h.b16 %v468
        %v888 = vunpack.c.l.b16 %v469
        %v889 = vunpack.c.h.b16 %v469
        %v890 = vunpack.c.l.b16 %v470
        %v891 = vunpack.c.h.b16 %v470
        %v892 = vunpack.c.l.b16 %v471
        %v893 = vunpack.c.h.b16 %v471
        %v894 = vunpack.c.l.b16 %v472
        %v895 = vunpack.c.h.b16 %v472
        %v896 = vunpack.c.l.b16 %v473
        %v897 = vunpack.c.h.b16 %v473
        %v898 = vunpack.c.l.b16 %v474
        %v899 = vunpack.c.h.b16 %v474
        %v900 = vunpack.c.l.b16 %v475
        %v901 = vunpack.c.h.b16 %v475
        %v902 = vpack.c.b16 %v654, %v646
        %v903 = vpack.c.b16 %v655, %v647
        %v904 = vpack.c.b16 %v656, %v648
        %v905 = vpack.c.b16 %v657, %v649
        %v906 = vpack.c.b16 %v658, %v650
        %v907 = vpack.c.b16 %v659, %v651
        %v908 = vpack.c.b16 %v660, %v652
        %v909 = vpack.c.b16 %v661, %v653
        %v910 = vpack.c.b16 %v670, %v662
        %v911 = vpack.c.b16 %v671, %v663
        %v912 = vpack.c.b16 %v672, %v664
        %v913 = vpack.c.b16 %v673, %v665
        %v914 = vpack.c.b16 %v674, %v666
        %v915 = vpack.c.b16 %v675, %v667
        %v916 = vpack.c.b16 %v676, %v668
        %v917 = vpack.c.b16 %v677, %v669
        %v918 = vpack.c.b16 %v686, %v678
        %v919 = vpack.c.b16 %v687, %v679
        %v920 = vpack.c.b16 %v688, %v680
        %v921 = vpack.c.b16 %v689, %v681
        %v922 = vpack.c.b16 %v690, %v682
        %v923 = vpack.c.b16 %v691, %v683
        %v924 = vpack.c.b16 %v692, %v684
        %v925 = vpack.c.b16 %v693, %v685
        %v926 = vpack.c.b16 %v702, %v694
        %v927 = vpack.c.b16 %v703, %v695
        %v928 = vpack.c.b16 %v704, %v696
        %v929 = vpack.c.b16 %v705, %v697
        %v930 = vpack.c.b16 %v706, %v698
        %v931 = vpack.c.b16 %v707, %v699
        %v932 = vpack.c.b16 %v708, %v700
        %v933 = vpack.c.b16 %v709, %v701
        %v934 = vpack.c.b16 %v718, %v710
        %v935 = vpack.c.b16 %v719, %v711
        %v936 = vpack.c.b16 %v720, %v712
        %v937 = vpack.c.b16 %v721, %v713
        %v938 = vpack.c.b16 %v722, %v714
        %v939 = vpack.c.b16 %v723, %v715
        %v940 = vpack.c.b16 %v724, %v716
        %v941 = vpack.c.b16 %v725, %v717
        %v942 = vpack.c.b16 %v734, %v726
        %v943 = vpack.c.b16 %v735, %v727
        %v944 = vpack.c.b16 %v736, %v728
        %v945 = vpack.c.b16 %v737, %v729
        %v946 = vpack.c.b16 %v738, %v730
        %v947 = vpack.c.b16 %v739, %v731
        %v948 = vpack.c.b16 %v740, %v732
        %v949 = vpack.c.b16 %v741, %v733
        %v950 = vpack.c.b16 %v750, %v742
        %v951 = vpack.c.b16 %v751, %v743
        %v952 = vpack.c.b16 %v752, %v744
        %v953 = vpack.c.b16 %v753, %v745
        %v954 = vpack.c.b16 %v754, %v746
        %v955 = vpack.c.b16 %v755, %v747
        %v956 = vpack.c.b16 %v756, %v748
        %v957 = vpack.c.b16 %v757, %v749
        %v958 = vpack.c.b16 %v766, %v758
        %v959 = vpack.c.b16 %v767, %v759
        %v960 = vpack.c.b16 %v768, %v760
        %v961 = vpack.c.b16 %v769, %v761
        %v962 = vpack.c.b16 %v770, %v762
        %v963 = vpack.c.b16 %v771, %v763
        %v964 = vpack.c.b16 %v772, %v764
        %v965 = vpack.c.b16 %v773, %v765
        %v966 = vpack.c.b16 %v782, %v774
        %v967 = vpack.c.b16 %v783, %v775
        %v968 = vpack.c.b16 %v784, %v776
        %v969 = vpack.c.b16 %v785, %v777
        %v970 = vpack.c.b16 %v786, %v778
        %v971 = vpack.c.b16 %v787, %v779
        %v972 = vpack.c.b16 %v788, %v780
        %v973 = vpack.c.b16 %v789, %v781
        %v974 = vpack.c.b16 %v798, %v790
        %v975 = vpack.c.b16 %v799, %v791
        %v976 = vpack.c.b16 %v800, %v792
        %v977 = vpack.c.b16 %v801, %v793
        %v978 = vpack.c.b16 %v802, %v794
        %v979 = vpack.c.b16 %v803, %v795
        %v980 = vpack.c.b16 %v804, %v796
        %v981 = vpack.c.b16 %v805, %v797
        %v982 = vpack.c.b16 %v814, %v806
        %v983 = vpack.c.b16 %v815, %v807
        %v984 = vpack.c.b16 %v816, %v808
        %v985 = vpack.c.b16 %v817, %v809
        %v986 = vpack.c.b16 %v818, %v810
        %v987 = vpack.c.b16 %v819, %v811
        %v988 = vpack.c.b16 %v820, %v812
        %v989 = vpack.c.b16 %v821, %v813
        %v990 = vpack.c.b16 %v830, %v822
        %v991 = vpack.c.b16 %v831, %v823
        %v992 = vpack.c.b16 %v832, %v824
        %v993 = vpack.c.b16 %v833, %v825
        %v994 = vpack.c.b16 %v834, %v826
        %v995 = vpack.c.b16 %v835, %v827
        %v996 = vpack.c.b16 %v836, %v828
        %v997 = vpack.c.b16 %v837, %v829
        %v998 = vpack.c.b16 %v846, %v838
        %v999 = vpack.c.b16 %v847, %v839
        %v1000 = vpack.c.b16 %v848, %v840
        %v1001 = vpack.c.b16 %v849, %v841
        %v1002 = vpack.c.b16 %v850, %v842
        %v1003 = vpack.c.b16 %v851, %v843
        %v1004 = vpack.c.b16 %v852, %v844
        %v1005 = vpack.c.b16 %v853, %v845
        %v1006 = vpack.c.b16 %v862, %v854
        %v1007 = vpack.c.b16 %v863, %v855
        %v1008 = vpack.c.b16 %v864, %v856
        %v1009 = vpack.c.b16 %v865, %v857
        %v1010 = vpack.c.b16 %v866, %v858
        %v1011 = vpack.c.b16 %v867, %v859
        %v1012 = vpack.c.b16 %v868, %v860
        %v1013 = vpack.c.b16 %v869, %v861
        %v1014 = vpack.c.b16 %v878, %v870
        %v1015 = vpack.c.b16 %v879, %v871
        %v1016 = vpack.c.b16 %v880, %v872
        %v1017 = vpack.c.b16 %v881, %v873
        %v1018 = vpack.c.b16 %v882, %v874
        %v1019 = vpack.c.b16 %v883, %v875
        %v1020 = vpack.c.b16 %v884, %v876
        %v1021 = vpack.c.b16 %v885, %v877
        %v1022 = vpack.c.b16 %v894, %v886
        %v1023 = vpack.c.b16 %v895, %v887
        %v1024 = vpack.c.b16 %v896, %v888
        %v1025 = vpack.c.b16 %v897, %v889
        %v1026 = vpack.c.b16 %v898, %v890
        %v1027 = vpack.c.b16 %v899, %v891
        %v1028 = vpack.c.b16 %v900, %v892
        %v1029 = vpack.c.b16 %v901, %v893
        %1158 = vmatprep.subr.bf16.mxu0 %v959
        %1159 = vmatpush1.bf16.msra.mxu0 %v958
        %1160 = vmatprep.subr.bf16.mxu0 %v951
        %1161 = vmatpush1.bf16.msra.mxu0 %v950
        %1162 = vmatprep.subr.bf16.mxu0 %v943
        %1163 = vmatpush1.bf16.msra.mxu0 %v942
        %1164 = vmatprep.subr.bf16.mxu0 %v935
        %1165 = vmatpush1.bf16.msra.mxu0 %v934
        %1166 = vmatprep.subr.bf16.mxu0 %v927
        %1167 = vmatpush1.bf16.msra.mxu0 %v926
        %1168 = vmatprep.subr.bf16.mxu0 %v919
        %1169 = vmatpush1.bf16.msra.mxu0 %v918
        %1170 = vmatprep.subr.bf16.mxu0 %v911
        %1171 = vmatpush1.bf16.msra.mxu0 %v910
        %1172 = vmatprep.subr.bf16.mxu0 %v903
        %1173 = vmatpush1.bf16.msra.mxu0 %v902
        %1174 = vmatprep.subr.bf16.mxu0 %v1023
        %1175 = vmatpush2.bf16.msra.mxu0 %v1022
        %1176 = vmatprep.subr.bf16.mxu0 %v1015
        %1177 = vmatpush2.bf16.msra.mxu0 %v1014
        %1178 = vmatprep.subr.bf16.mxu0 %v1007
        %1179 = vmatpush2.bf16.msra.mxu0 %v1006
        %1180 = vmatprep.subr.bf16.mxu0 %v999
        %1181 = vmatpush2.bf16.msra.mxu0 %v998
        %1182 = vmatprep.subr.bf16.mxu0 %v991
        %1183 = vmatpush2.bf16.msra.mxu0 %v990
        %1184 = vmatprep.subr.bf16.mxu0 %v983
        %1185 = vmatpush2.bf16.msra.mxu0 %v982
        %1186 = vmatprep.subr.bf16.mxu0 %v975
        %1187 = vmatpush2.bf16.msra.mxu0 %v974
        %1188 = vmatprep.subr.bf16.mxu0 %v967
        %1189 = vmatpush2.bf16.msra.mxu0 %v966
        %1190 = vmatprep.mubr.bf16.mxu0 %v347
        %1191 = vmatmul.mubr.bf16.gmra.mxu0 %v346
        %v1192 = vpop.f32.mrf.mxu0
        %v1193 = vadd.f32 %v481, %v1192
        %v1194 = vpop.f32.mrf.mxu0
        %v1195 = vadd.f32 %v485, %v1194
        %v1196 = vpop.f32.mrf.mxu0
        %v1197 = vpop.f32.mrf.mxu0
        %1198 = vdwg.mxu0
        %1199 = vmatprep.subr.bf16.mxu0 %v961
        %1200 = vmatpush1.bf16.msra.mxu0 %v960
        %1201 = vmatprep.subr.bf16.mxu0 %v953
        %1202 = vmatpush1.bf16.msra.mxu0 %v952
        %1203 = vmatprep.subr.bf16.mxu0 %v945
        %1204 = vmatpush1.bf16.msra.mxu0 %v944
        %1205 = vmatprep.subr.bf16.mxu0 %v937
        %1206 = vmatpush1.bf16.msra.mxu0 %v936
        %1207 = vmatprep.subr.bf16.mxu0 %v929
        %1208 = vmatpush1.bf16.msra.mxu0 %v928
        %1209 = vmatprep.subr.bf16.mxu0 %v921
        %1210 = vmatpush1.bf16.msra.mxu0 %v920
        %1211 = vmatprep.subr.bf16.mxu0 %v913
        %1212 = vmatpush1.bf16.msra.mxu0 %v912
        %1213 = vmatprep.subr.bf16.mxu0 %v905
        %1214 = vmatpush1.bf16.msra.mxu0 %v904
        %1215 = vmatprep.subr.bf16.mxu0 %v1025
        %1216 = vmatpush2.bf16.msra.mxu0 %v1024
        %1217 = vmatprep.subr.bf16.mxu0 %v1017
        %1218 = vmatpush2.bf16.msra.mxu0 %v1016
        %1219 = vmatprep.subr.bf16.mxu0 %v1009
        %1220 = vmatpush2.bf16.msra.mxu0 %v1008
        %1221 = vmatprep.subr.bf16.mxu0 %v1001
        %1222 = vmatpush2.bf16.msra.mxu0 %v1000
        %1223 = vmatprep.subr.bf16.mxu0 %v993
        %1224 = vmatpush2.bf16.msra.mxu0 %v992
        %1225 = vmatprep.subr.bf16.mxu0 %v985
        %1226 = vmatpush2.bf16.msra.mxu0 %v984
        %1227 = vmatprep.subr.bf16.mxu0 %v977
        %1228 = vmatpush2.bf16.msra.mxu0 %v976
        %1229 = vmatprep.subr.bf16.mxu0 %v969
        %1230 = vmatpush2.bf16.msra.mxu0 %v968
        %1231 = vmatprep.mubr.bf16.mxu0 %v347
        %1232 = vmatmul.mubr.bf16.gmra.mxu0 %v346
        %v1233 = vpop.f32.mrf.mxu0
        %v1234 = vadd.f32 %v489, %v1233
        %v1235 = vpop.f32.mrf.mxu0
        %v1236 = vadd.f32 %v493, %v1235
        %v1237 = vpop.f32.mrf.mxu0
        %v1238 = vpop.f32.mrf.mxu0
        %1239 = vdwg.mxu0
        %1240 = vmatprep.subr.bf16.mxu0 %v963
        %1241 = vmatpush1.bf16.msra.mxu0 %v962
        %1242 = vmatprep.subr.bf16.mxu0 %v955
        %1243 = vmatpush1.bf16.msra.mxu0 %v954
        %1244 = vmatprep.subr.bf16.mxu0 %v947
        %1245 = vmatpush1.bf16.msra.mxu0 %v946
        %1246 = vmatprep.subr.bf16.mxu0 %v939
        %1247 = vmatpush1.bf16.msra.mxu0 %v938
        %1248 = vmatprep.subr.bf16.mxu0 %v931
        %1249 = vmatpush1.bf16.msra.mxu0 %v930
        %1250 = vmatprep.subr.bf16.mxu0 %v923
        %1251 = vmatpush1.bf16.msra.mxu0 %v922
        %1252 = vmatprep.subr.bf16.mxu0 %v915
        %1253 = vmatpush1.bf16.msra.mxu0 %v914
        %1254 = vmatprep.subr.bf16.mxu0 %v907
        %1255 = vmatpush1.bf16.msra.mxu0 %v906
        %1256 = vmatprep.subr.bf16.mxu0 %v1027
        %1257 = vmatpush2.bf16.msra.mxu0 %v1026
        %1258 = vmatprep.subr.bf16.mxu0 %v1019
        %1259 = vmatpush2.bf16.msra.mxu0 %v1018
        %1260 = vmatprep.subr.bf16.mxu0 %v1011
        %1261 = vmatpush2.bf16.msra.mxu0 %v1010
        %1262 = vmatprep.subr.bf16.mxu0 %v1003
        %1263 = vmatpush2.bf16.msra.mxu0 %v1002
        %1264 = vmatprep.subr.bf16.mxu0 %v995
        %1265 = vmatpush2.bf16.msra.mxu0 %v994
        %1266 = vmatprep.subr.bf16.mxu0 %v987
        %1267 = vmatpush2.bf16.msra.mxu0 %v986
        %1268 = vmatprep.subr.bf16.mxu0 %v979
        %1269 = vmatpush2.bf16.msra.mxu0 %v978
        %1270 = vmatprep.subr.bf16.mxu0 %v971
        %1271 = vmatpush2.bf16.msra.mxu0 %v970
        %1272 = vmatprep.mubr.bf16.mxu0 %v347
        %1273 = vmatmul.mubr.bf16.gmra.mxu0 %v346
        %v1274 = vpop.f32.mrf.mxu0
        %v1275 = vadd.f32 %v497, %v1274
        %v1276 = vpop.f32.mrf.mxu0
        %v1277 = vadd.f32 %v501, %v1276
        %v1278 = vpop.f32.mrf.mxu0
        %v1279 = vpop.f32.mrf.mxu0
        %1280 = vdwg.mxu0
        %1281 = vmatprep.subr.bf16.mxu0 %v965
        %1282 = vmatpush1.bf16.msra.mxu0 %v964
        %1283 = vmatprep.subr.bf16.mxu0 %v957
        %1284 = vmatpush1.bf16.msra.mxu0 %v956
        %1285 = vmatprep.subr.bf16.mxu0 %v949
        %1286 = vmatpush1.bf16.msra.mxu0 %v948
        %1287 = vmatprep.subr.bf16.mxu0 %v941
        %1288 = vmatpush1.bf16.msra.mxu0 %v940
        %1289 = vmatprep.subr.bf16.mxu0 %v933
        %1290 = vmatpush1.bf16.msra.mxu0 %v932
        %1291 = vmatprep.subr.bf16.mxu0 %v925
        %1292 = vmatpush1.bf16.msra.mxu0 %v924
        %1293 = vmatprep.subr.bf16.mxu0 %v917
        %1294 = vmatpush1.bf16.msra.mxu0 %v916
        %1295 = vmatprep.subr.bf16.mxu0 %v909
        %1296 = vmatpush1.bf16.msra.mxu0 %v908
        %1297 = vmatprep.subr.bf16.mxu0 %v1029
        %1298 = vmatpush2.bf16.msra.mxu0 %v1028
        %1299 = vmatprep.subr.bf16.mxu0 %v1021
        %1300 = vmatpush2.bf16.msra.mxu0 %v1020
        %1301 = vmatprep.subr.bf16.mxu0 %v1013
        %1302 = vmatpush2.bf16.msra.mxu0 %v1012
        %1303 = vmatprep.subr.bf16.mxu0 %v1005
        %1304 = vmatpush2.bf16.msra.mxu0 %v1004
        %1305 = vmatprep.subr.bf16.mxu0 %v997
        %1306 = vmatpush2.bf16.msra.mxu0 %v996
        %1307 = vmatprep.subr.bf16.mxu0 %v989
        %1308 = vmatpush2.bf16.msra.mxu0 %v988
        %1309 = vmatprep.subr.bf16.mxu0 %v981
        %1310 = vmatpush2.bf16.msra.mxu0 %v980
        %1311 = vmatprep.subr.bf16.mxu0 %v973
        %1312 = vmatpush2.bf16.msra.mxu0 %v972
        %1313 = vmatprep.mubr.bf16.mxu0 %v347
        %1314 = vmatmul.mubr.bf16.gmra.mxu0 %v346
        %v1315 = vpop.f32.mrf.mxu0
        %v1316 = vadd.f32 %v505, %v1315
        %v1317 = vpop.f32.mrf.mxu0
        %v1318 = vadd.f32 %v509, %v1317
        %v1319 = vpop.f32.mrf.mxu0
        %v1320 = vpop.f32.mrf.mxu0
        %1321 = vdwg.mxu0
        %v1322 = vmax.f32 %v1193, 0.0
        %v1323 = vmax.f32 %v1195, 0.0
        %v1324 = vmax.f32 %v1234, 0.0
        %v1325 = vmax.f32 %v1236, 0.0
        %v1326 = vmax.f32 %v1275, 0.0
        %v1327 = vmax.f32 %v1277, 0.0
        %v1328 = vmax.f32 %v1316, 0.0
        %v1329 = vmax.f32 %v1318, 0.0
        %v1330 = vpack.c.bf16 %v1322, %v1322
        %v1331 = vpack.c.bf16 %v1323, %v1323
        %v1332 = vpack.c.bf16 %v1324, %v1324
        %v1333 = vpack.c.bf16 %v1325, %v1325
        %v1334 = vpack.c.bf16 %v1326, %v1326
        %v1335 = vpack.c.bf16 %v1327, %v1327
        %v1336 = vpack.c.bf16 %v1328, %v1328
        %v1337 = vpack.c.bf16 %v1329, %v1329
        %v1338 = vld [vmem:[%s5] sm:$0xff]
        %v1339 = vld [vmem:[%s5 + $0x8] sm:$0xff]
        %v1340 = vld [vmem:[%s5 + $0x10] sm:$0xff]
        %v1341 = vld [vmem:[%s5 + $0x18] sm:$0xff]
        %v1342 = vld [vmem:[%s5 + $0x20] sm:$0xff]
        %v1343 = vld [vmem:[%s5 + $0x28] sm:$0xff]
        %v1344 = vld [vmem:[%s5 + $0x30] sm:$0xff]
        %v1345 = vld [vmem:[%s5 + $0x38] sm:$0xff]
        %v1346 = vld [vmem:[%s5 + $0x40] sm:$0xff]
        %v1347 = vld [vmem:[%s5 + $0x48] sm:$0xff]
        %v1348 = vld [vmem:[%s5 + $0x50] sm:$0xff]
        %v1349 = vld [vmem:[%s5 + $0x58] sm:$0xff]
        %v1350 = vld [vmem:[%s5 + $0x60] sm:$0xff]
        %v1351 = vld [vmem:[%s5 + $0x68] sm:$0xff]
        %v1352 = vld [vmem:[%s5 + $0x70] sm:$0xff]
        %v1353 = vld [vmem:[%s5 + $0x78] sm:$0xff]
        %v1354 = vld [vmem:[%s5 + $0x80] sm:$0xff]
        %v1355 = vld [vmem:[%s5 + $0x88] sm:$0xff]
        %v1356 = vld [vmem:[%s5 + $0x90] sm:$0xff]
        %v1357 = vld [vmem:[%s5 + $0x98] sm:$0xff]
        %v1358 = vld [vmem:[%s5 + $0xa0] sm:$0xff]
        %v1359 = vld [vmem:[%s5 + $0xa8] sm:$0xff]
        %v1360 = vld [vmem:[%s5 + $0xb0] sm:$0xff]
        %v1361 = vld [vmem:[%s5 + $0xb8] sm:$0xff]
        %v1362 = vld [vmem:[%s5 + $0xc0] sm:$0xff]
        %v1363 = vld [vmem:[%s5 + $0xc8] sm:$0xff]
        %v1364 = vld [vmem:[%s5 + $0xd0] sm:$0xff]
        %v1365 = vld [vmem:[%s5 + $0xd8] sm:$0xff]
        %v1366 = vld [vmem:[%s5 + $0xe0] sm:$0xff]
        %v1367 = vld [vmem:[%s5 + $0xe8] sm:$0xff]
        %v1368 = vld [vmem:[%s5 + $0xf0] sm:$0xff]
        %v1369 = vld [vmem:[%s5 + $0xf8] sm:$0xff]
        %v1370 = vld [vmem:[%s5 + $0x100] sm:$0xff]
        %v1371 = vld [vmem:[%s5 + $0x108] sm:$0xff]
        %v1372 = vld [vmem:[%s5 + $0x110] sm:$0xff]
        %v1373 = vld [vmem:[%s5 + $0x118] sm:$0xff]
        %v1374 = vld [vmem:[%s5 + $0x120] sm:$0xff]
        %v1375 = vld [vmem:[%s5 + $0x128] sm:$0xff]
        %v1376 = vld [vmem:[%s5 + $0x130] sm:$0xff]
        %v1377 = vld [vmem:[%s5 + $0x138] sm:$0xff]
        %v1378 = vld [vmem:[%s5 + $0x140] sm:$0xff]
        %v1379 = vld [vmem:[%s5 + $0x148] sm:$0xff]
        %v1380 = vld [vmem:[%s5 + $0x150] sm:$0xff]
        %v1381 = vld [vmem:[%s5 + $0x158] sm:$0xff]
        %v1382 = vld [vmem:[%s5 + $0x160] sm:$0xff]
        %v1383 = vld [vmem:[%s5 + $0x168] sm:$0xff]
        %v1384 = vld [vmem:[%s5 + $0x170] sm:$0xff]
        %v1385 = vld [vmem:[%s5 + $0x178] sm:$0xff]
        %v1386 = vld [vmem:[%s5 + $0x180] sm:$0xff]
        %v1387 = vld [vmem:[%s5 + $0x188] sm:$0xff]
        %v1388 = vld [vmem:[%s5 + $0x190] sm:$0xff]
        %v1389 = vld [vmem:[%s5 + $0x198] sm:$0xff]
        %v1390 = vld [vmem:[%s5 + $0x1a0] sm:$0xff]
        %v1391 = vld [vmem:[%s5 + $0x1a8] sm:$0xff]
        %v1392 = vld [vmem:[%s5 + $0x1b0] sm:$0xff]
        %v1393 = vld [vmem:[%s5 + $0x1b8] sm:$0xff]
        %v1394 = vld [vmem:[%s5 + $0x1c0] sm:$0xff]
        %v1395 = vld [vmem:[%s5 + $0x1c8] sm:$0xff]
        %v1396 = vld [vmem:[%s5 + $0x1d0] sm:$0xff]
        %v1397 = vld [vmem:[%s5 + $0x1d8] sm:$0xff]
        %v1398 = vld [vmem:[%s5 + $0x1e0] sm:$0xff]
        %v1399 = vld [vmem:[%s5 + $0x1e8] sm:$0xff]
        %v1400 = vld [vmem:[%s5 + $0x1f0] sm:$0xff]
        %v1401 = vld [vmem:[%s5 + $0x1f8] sm:$0xff]
        %v1402 = vld [vmem:[%s5 + $0x200] sm:$0xff]
        %v1403 = vld [vmem:[%s5 + $0x208] sm:$0xff]
        %v1404 = vld [vmem:[%s5 + $0x210] sm:$0xff]
        %v1405 = vld [vmem:[%s5 + $0x218] sm:$0xff]
        %v1406 = vld [vmem:[%s5 + $0x220] sm:$0xff]
        %v1407 = vld [vmem:[%s5 + $0x228] sm:$0xff]
        %v1408 = vld [vmem:[%s5 + $0x230] sm:$0xff]
        %v1409 = vld [vmem:[%s5 + $0x238] sm:$0xff]
        %v1410 = vld [vmem:[%s5 + $0x240] sm:$0xff]
        %v1411 = vld [vmem:[%s5 + $0x248] sm:$0xff]
        %v1412 = vld [vmem:[%s5 + $0x250] sm:$0xff]
        %v1413 = vld [vmem:[%s5 + $0x258] sm:$0xff]
        %v1414 = vld [vmem:[%s5 + $0x260] sm:$0xff]
        %v1415 = vld [vmem:[%s5 + $0x268] sm:$0xff]
        %v1416 = vld [vmem:[%s5 + $0x270] sm:$0xff]
        %v1417 = vld [vmem:[%s5 + $0x278] sm:$0xff]
        %v1418 = vld [vmem:[%s5 + $0x280] sm:$0xff]
        %v1419 = vld [vmem:[%s5 + $0x288] sm:$0xff]
        %v1420 = vld [vmem:[%s5 + $0x290] sm:$0xff]
        %v1421 = vld [vmem:[%s5 + $0x298] sm:$0xff]
        %v1422 = vld [vmem:[%s5 + $0x2a0] sm:$0xff]
        %v1423 = vld [vmem:[%s5 + $0x2a8] sm:$0xff]
        %v1424 = vld [vmem:[%s5 + $0x2b0] sm:$0xff]
        %v1425 = vld [vmem:[%s5 + $0x2b8] sm:$0xff]
        %v1426 = vld [vmem:[%s5 + $0x2c0] sm:$0xff]
        %v1427 = vld [vmem:[%s5 + $0x2c8] sm:$0xff]
        %v1428 = vld [vmem:[%s5 + $0x2d0] sm:$0xff]
        %v1429 = vld [vmem:[%s5 + $0x2d8] sm:$0xff]
        %v1430 = vld [vmem:[%s5 + $0x2e0] sm:$0xff]
        %v1431 = vld [vmem:[%s5 + $0x2e8] sm:$0xff]
        %v1432 = vld [vmem:[%s5 + $0x2f0] sm:$0xff]
        %v1433 = vld [vmem:[%s5 + $0x2f8] sm:$0xff]
        %v1434 = vld [vmem:[%s5 + $0x300] sm:$0xff]
        %v1435 = vld [vmem:[%s5 + $0x308] sm:$0xff]
        %v1436 = vld [vmem:[%s5 + $0x310] sm:$0xff]
        %v1437 = vld [vmem:[%s5 + $0x318] sm:$0xff]
        %v1438 = vld [vmem:[%s5 + $0x320] sm:$0xff]
        %v1439 = vld [vmem:[%s5 + $0x328] sm:$0xff]
        %v1440 = vld [vmem:[%s5 + $0x330] sm:$0xff]
        %v1441 = vld [vmem:[%s5 + $0x338] sm:$0xff]
        %v1442 = vld [vmem:[%s5 + $0x340] sm:$0xff]
        %v1443 = vld [vmem:[%s5 + $0x348] sm:$0xff]
        %v1444 = vld [vmem:[%s5 + $0x350] sm:$0xff]
        %v1445 = vld [vmem:[%s5 + $0x358] sm:$0xff]
        %v1446 = vld [vmem:[%s5 + $0x360] sm:$0xff]
        %v1447 = vld [vmem:[%s5 + $0x368] sm:$0xff]
        %v1448 = vld [vmem:[%s5 + $0x370] sm:$0xff]
        %v1449 = vld [vmem:[%s5 + $0x378] sm:$0xff]
        %v1450 = vld [vmem:[%s5 + $0x380] sm:$0xff]
        %v1451 = vld [vmem:[%s5 + $0x388] sm:$0xff]
        %v1452 = vld [vmem:[%s5 + $0x390] sm:$0xff]
        %v1453 = vld [vmem:[%s5 + $0x398] sm:$0xff]
        %v1454 = vld [vmem:[%s5 + $0x3a0] sm:$0xff]
        %v1455 = vld [vmem:[%s5 + $0x3a8] sm:$0xff]
        %v1456 = vld [vmem:[%s5 + $0x3b0] sm:$0xff]
        %v1457 = vld [vmem:[%s5 + $0x3b8] sm:$0xff]
        %v1458 = vld [vmem:[%s5 + $0x3c0] sm:$0xff]
        %v1459 = vld [vmem:[%s5 + $0x3c8] sm:$0xff]
        %v1460 = vld [vmem:[%s5 + $0x3d0] sm:$0xff]
        %v1461 = vld [vmem:[%s5 + $0x3d8] sm:$0xff]
        %v1462 = vld [vmem:[%s5 + $0x3e0] sm:$0xff]
        %v1463 = vld [vmem:[%s5 + $0x3e8] sm:$0xff]
        %v1464 = vld [vmem:[%s5 + $0x3f0] sm:$0xff]
        %v1465 = vld [vmem:[%s5 + $0x3f8] sm:$0xff]
        %v1466 = vld [vmem:[%s6] sm:$0x3]
        %v1468 = vlaneseq
        %v1469 = vshrl.u32 %v1468, 7
        %v1470 = vsub.s32 0, %v1469
        %v1471 = vrot.slane %v1466, %v1470
        %v1472 = vlaneseq
        %v1473 = vshrl.u32 %v1472, 7
        %v1474 = vsub.s32 1, %v1473
        %v1475 = vrot.slane %v1466, %v1474
        %v1606 = vunpack.c.l.b16 %v1338
        %v1607 = vunpack.c.h.b16 %v1338
        %v1608 = vunpack.c.l.b16 %v1339
        %v1609 = vunpack.c.h.b16 %v1339
        %v1610 = vunpack.c.l.b16 %v1340
        %v1611 = vunpack.c.h.b16 %v1340
        %v1612 = vunpack.c.l.b16 %v1341
        %v1613 = vunpack.c.h.b16 %v1341
        %v1614 = vunpack.c.l.b16 %v1342
        %v1615 = vunpack.c.h.b16 %v1342
        %v1616 = vunpack.c.l.b16 %v1343
        %v1617 = vunpack.c.h.b16 %v1343
        %v1618 = vunpack.c.l.b16 %v1344
        %v1619 = vunpack.c.h.b16 %v1344
        %v1620 = vunpack.c.l.b16 %v1345
        %v1621 = vunpack.c.h.b16 %v1345
        %v1622 = vunpack.c.l.b16 %v1346
        %v1623 = vunpack.c.h.b16 %v1346
        %v1624 = vunpack.c.l.b16 %v1347
        %v1625 = vunpack.c.h.b16 %v1347
        %v1626 = vunpack.c.l.b16 %v1348
        %v1627 = vunpack.c.h.b16 %v1348
        %v1628 = vunpack.c.l.b16 %v1349
        %v1629 = vunpack.c.h.b16 %v1349
        %v1630 = vunpack.c.l.b16 %v1350
        %v1631 = vunpack.c.h.b16 %v1350
        %v1632 = vunpack.c.l.b16 %v1351
        %v1633 = vunpack.c.h.b16 %v1351
        %v1634 = vunpack.c.l.b16 %v1352
        %v1635 = vunpack.c.h.b16 %v1352
        %v1636 = vunpack.c.l.b16 %v1353
        %v1637 = vunpack.c.h.b16 %v1353
        %v1638 = vunpack.c.l.b16 %v1354
        %v1639 = vunpack.c.h.b16 %v1354
        %v1640 = vunpack.c.l.b16 %v1355
        %v1641 = vunpack.c.h.b16 %v1355
        %v1642 = vunpack.c.l.b16 %v1356
        %v1643 = vunpack.c.h.b16 %v1356
        %v1644 = vunpack.c.l.b16 %v1357
        %v1645 = vunpack.c.h.b16 %v1357
        %v1646 = vunpack.c.l.b16 %v1358
        %v1647 = vunpack.c.h.b16 %v1358
        %v1648 = vunpack.c.l.b16 %v1359
        %v1649 = vunpack.c.h.b16 %v1359
        %v1650 = vunpack.c.l.b16 %v1360
        %v1651 = vunpack.c.h.b16 %v1360
        %v1652 = vunpack.c.l.b16 %v1361
        %v1653 = vunpack.c.h.b16 %v1361
        %v1654 = vunpack.c.l.b16 %v1362
        %v1655 = vunpack.c.h.b16 %v1362
        %v1656 = vunpack.c.l.b16 %v1363
        %v1657 = vunpack.c.h.b16 %v1363
        %v1658 = vunpack.c.l.b16 %v1364
        %v1659 = vunpack.c.h.b16 %v1364
        %v1660 = vunpack.c.l.b16 %v1365
        %v1661 = vunpack.c.h.b16 %v1365
        %v1662 = vunpack.c.l.b16 %v1366
        %v1663 = vunpack.c.h.b16 %v1366
        %v1664 = vunpack.c.l.b16 %v1367
        %v1665 = vunpack.c.h.b16 %v1367
        %v1666 = vunpack.c.l.b16 %v1368
        %v1667 = vunpack.c.h.b16 %v1368
        %v1668 = vunpack.c.l.b16 %v1369
        %v1669 = vunpack.c.h.b16 %v1369
        %v1670 = vunpack.c.l.b16 %v1370
        %v1671 = vunpack.c.h.b16 %v1370
        %v1672 = vunpack.c.l.b16 %v1371
        %v1673 = vunpack.c.h.b16 %v1371
        %v1674 = vunpack.c.l.b16 %v1372
        %v1675 = vunpack.c.h.b16 %v1372
        %v1676 = vunpack.c.l.b16 %v1373
        %v1677 = vunpack.c.h.b16 %v1373
        %v1678 = vunpack.c.l.b16 %v1374
        %v1679 = vunpack.c.h.b16 %v1374
        %v1680 = vunpack.c.l.b16 %v1375
        %v1681 = vunpack.c.h.b16 %v1375
        %v1682 = vunpack.c.l.b16 %v1376
        %v1683 = vunpack.c.h.b16 %v1376
        %v1684 = vunpack.c.l.b16 %v1377
        %v1685 = vunpack.c.h.b16 %v1377
        %v1686 = vunpack.c.l.b16 %v1378
        %v1687 = vunpack.c.h.b16 %v1378
        %v1688 = vunpack.c.l.b16 %v1379
        %v1689 = vunpack.c.h.b16 %v1379
        %v1690 = vunpack.c.l.b16 %v1380
        %v1691 = vunpack.c.h.b16 %v1380
        %v1692 = vunpack.c.l.b16 %v1381
        %v1693 = vunpack.c.h.b16 %v1381
        %v1694 = vunpack.c.l.b16 %v1382
        %v1695 = vunpack.c.h.b16 %v1382
        %v1696 = vunpack.c.l.b16 %v1383
        %v1697 = vunpack.c.h.b16 %v1383
        %v1698 = vunpack.c.l.b16 %v1384
        %v1699 = vunpack.c.h.b16 %v1384
        %v1700 = vunpack.c.l.b16 %v1385
        %v1701 = vunpack.c.h.b16 %v1385
        %v1702 = vunpack.c.l.b16 %v1386
        %v1703 = vunpack.c.h.b16 %v1386
        %v1704 = vunpack.c.l.b16 %v1387
        %v1705 = vunpack.c.h.b16 %v1387
        %v1706 = vunpack.c.l.b16 %v1388
        %v1707 = vunpack.c.h.b16 %v1388
        %v1708 = vunpack.c.l.b16 %v1389
        %v1709 = vunpack.c.h.b16 %v1389
        %v1710 = vunpack.c.l.b16 %v1390
        %v1711 = vunpack.c.h.b16 %v1390
        %v1712 = vunpack.c.l.b16 %v1391
        %v1713 = vunpack.c.h.b16 %v1391
        %v1714 = vunpack.c.l.b16 %v1392
        %v1715 = vunpack.c.h.b16 %v1392
        %v1716 = vunpack.c.l.b16 %v1393
        %v1717 = vunpack.c.h.b16 %v1393
        %v1718 = vunpack.c.l.b16 %v1394
        %v1719 = vunpack.c.h.b16 %v1394
        %v1720 = vunpack.c.l.b16 %v1395
        %v1721 = vunpack.c.h.b16 %v1395
        %v1722 = vunpack.c.l.b16 %v1396
        %v1723 = vunpack.c.h.b16 %v1396
        %v1724 = vunpack.c.l.b16 %v1397
        %v1725 = vunpack.c.h.b16 %v1397
        %v1726 = vunpack.c.l.b16 %v1398
        %v1727 = vunpack.c.h.b16 %v1398
        %v1728 = vunpack.c.l.b16 %v1399
        %v1729 = vunpack.c.h.b16 %v1399
        %v1730 = vunpack.c.l.b16 %v1400
        %v1731 = vunpack.c.h.b16 %v1400
        %v1732 = vunpack.c.l.b16 %v1401
        %v1733 = vunpack.c.h.b16 %v1401
        %v1734 = vunpack.c.l.b16 %v1402
        %v1735 = vunpack.c.h.b16 %v1402
        %v1736 = vunpack.c.l.b16 %v1403
        %v1737 = vunpack.c.h.b16 %v1403
        %v1738 = vunpack.c.l.b16 %v1404
        %v1739 = vunpack.c.h.b16 %v1404
        %v1740 = vunpack.c.l.b16 %v1405
        %v1741 = vunpack.c.h.b16 %v1405
        %v1742 = vunpack.c.l.b16 %v1406
        %v1743 = vunpack.c.h.b16 %v1406
        %v1744 = vunpack.c.l.b16 %v1407
        %v1745 = vunpack.c.h.b16 %v1407
        %v1746 = vunpack.c.l.b16 %v1408
        %v1747 = vunpack.c.h.b16 %v1408
        %v1748 = vunpack.c.l.b16 %v1409
        %v1749 = vunpack.c.h.b16 %v1409
        %v1750 = vunpack.c.l.b16 %v1410
        %v1751 = vunpack.c.h.b16 %v1410
        %v1752 = vunpack.c.l.b16 %v1411
        %v1753 = vunpack.c.h.b16 %v1411
        %v1754 = vunpack.c.l.b16 %v1412
        %v1755 = vunpack.c.h.b16 %v1412
        %v1756 = vunpack.c.l.b16 %v1413
        %v1757 = vunpack.c.h.b16 %v1413
        %v1758 = vunpack.c.l.b16 %v1414
        %v1759 = vunpack.c.h.b16 %v1414
        %v1760 = vunpack.c.l.b16 %v1415
        %v1761 = vunpack.c.h.b16 %v1415
        %v1762 = vunpack.c.l.b16 %v1416
        %v1763 = vunpack.c.h.b16 %v1416
        %v1764 = vunpack.c.l.b16 %v1417
        %v1765 = vunpack.c.h.b16 %v1417
        %v1766 = vunpack.c.l.b16 %v1418
        %v1767 = vunpack.c.h.b16 %v1418
        %v1768 = vunpack.c.l.b16 %v1419
        %v1769 = vunpack.c.h.b16 %v1419
        %v1770 = vunpack.c.l.b16 %v1420
        %v1771 = vunpack.c.h.b16 %v1420
        %v1772 = vunpack.c.l.b16 %v1421
        %v1773 = vunpack.c.h.b16 %v1421
        %v1774 = vunpack.c.l.b16 %v1422
        %v1775 = vunpack.c.h.b16 %v1422
        %v1776 = vunpack.c.l.b16 %v1423
        %v1777 = vunpack.c.h.b16 %v1423
        %v1778 = vunpack.c.l.b16 %v1424
        %v1779 = vunpack.c.h.b16 %v1424
        %v1780 = vunpack.c.l.b16 %v1425
        %v1781 = vunpack.c.h.b16 %v1425
        %v1782 = vunpack.c.l.b16 %v1426
        %v1783 = vunpack.c.h.b16 %v1426
        %v1784 = vunpack.c.l.b16 %v1427
        %v1785 = vunpack.c.h.b16 %v1427
        %v1786 = vunpack.c.l.b16 %v1428
        %v1787 = vunpack.c.h.b16 %v1428
        %v1788 = vunpack.c.l.b16 %v1429
        %v1789 = vunpack.c.h.b16 %v1429
        %v1790 = vunpack.c.l.b16 %v1430
        %v1791 = vunpack.c.h.b16 %v1430
        %v1792 = vunpack.c.l.b16 %v1431
        %v1793 = vunpack.c.h.b16 %v1431
        %v1794 = vunpack.c.l.b16 %v1432
        %v1795 = vunpack.c.h.b16 %v1432
        %v1796 = vunpack.c.l.b16 %v1433
        %v1797 = vunpack.c.h.b16 %v1433
        %v1798 = vunpack.c.l.b16 %v1434
        %v1799 = vunpack.c.h.b16 %v1434
        %v1800 = vunpack.c.l.b16 %v1435
        %v1801 = vunpack.c.h.b16 %v1435
        %v1802 = vunpack.c.l.b16 %v1436
        %v1803 = vunpack.c.h.b16 %v1436
        %v1804 = vunpack.c.l.b16 %v1437
        %v1805 = vunpack.c.h.b16 %v1437
        %v1806 = vunpack.c.l.b16 %v1438
        %v1807 = vunpack.c.h.b16 %v1438
        %v1808 = vunpack.c.l.b16 %v1439
        %v1809 = vunpack.c.h.b16 %v1439
        %v1810 = vunpack.c.l.b16 %v1440
        %v1811 = vunpack.c.h.b16 %v1440
        %v1812 = vunpack.c.l.b16 %v1441
        %v1813 = vunpack.c.h.b16 %v1441
        %v1814 = vunpack.c.l.b16 %v1442
        %v1815 = vunpack.c.h.b16 %v1442
        %v1816 = vunpack.c.l.b16 %v1443
        %v1817 = vunpack.c.h.b16 %v1443
        %v1818 = vunpack.c.l.b16 %v1444
        %v1819 = vunpack.c.h.b16 %v1444
        %v1820 = vunpack.c.l.b16 %v1445
        %v1821 = vunpack.c.h.b16 %v1445
        %v1822 = vunpack.c.l.b16 %v1446
        %v1823 = vunpack.c.h.b16 %v1446
        %v1824 = vunpack.c.l.b16 %v1447
        %v1825 = vunpack.c.h.b16 %v1447
        %v1826 = vunpack.c.l.b16 %v1448
        %v1827 = vunpack.c.h.b16 %v1448
        %v1828 = vunpack.c.l.b16 %v1449
        %v1829 = vunpack.c.h.b16 %v1449
        %v1830 = vunpack.c.l.b16 %v1450
        %v1831 = vunpack.c.h.b16 %v1450
        %v1832 = vunpack.c.l.b16 %v1451
        %v1833 = vunpack.c.h.b16 %v1451
        %v1834 = vunpack.c.l.b16 %v1452
        %v1835 = vunpack.c.h.b16 %v1452
        %v1836 = vunpack.c.l.b16 %v1453
        %v1837 = vunpack.c.h.b16 %v1453
        %v1838 = vunpack.c.l.b16 %v1454
        %v1839 = vunpack.c.h.b16 %v1454
        %v1840 = vunpack.c.l.b16 %v1455
        %v1841 = vunpack.c.h.b16 %v1455
        %v1842 = vunpack.c.l.b16 %v1456
        %v1843 = vunpack.c.h.b16 %v1456
        %v1844 = vunpack.c.l.b16 %v1457
        %v1845 = vunpack.c.h.b16 %v1457
        %v1846 = vunpack.c.l.b16 %v1458
        %v1847 = vunpack.c.h.b16 %v1458
        %v1848 = vunpack.c.l.b16 %v1459
        %v1849 = vunpack.c.h.b16 %v1459
        %v1850 = vunpack.c.l.b16 %v1460
        %v1851 = vunpack.c.h.b16 %v1460
        %v1852 = vunpack.c.l.b16 %v1461
        %v1853 = vunpack.c.h.b16 %v1461
        %v1854 = vunpack.c.l.b16 %v1462
        %v1855 = vunpack.c.h.b16 %v1462
        %v1856 = vunpack.c.l.b16 %v1463
        %v1857 = vunpack.c.h.b16 %v1463
        %v1858 = vunpack.c.l.b16 %v1464
        %v1859 = vunpack.c.h.b16 %v1464
        %v1860 = vunpack.c.l.b16 %v1465
        %v1861 = vunpack.c.h.b16 %v1465
        %v1862 = vpack.c.b16 %v1608, %v1606
        %v1863 = vpack.c.b16 %v1609, %v1607
        %v1864 = vpack.c.b16 %v1612, %v1610
        %v1865 = vpack.c.b16 %v1613, %v1611
        %v1866 = vpack.c.b16 %v1616, %v1614
        %v1867 = vpack.c.b16 %v1617, %v1615
        %v1868 = vpack.c.b16 %v1620, %v1618
        %v1869 = vpack.c.b16 %v1621, %v1619
        %v1870 = vpack.c.b16 %v1624, %v1622
        %v1871 = vpack.c.b16 %v1625, %v1623
        %v1872 = vpack.c.b16 %v1628, %v1626
        %v1873 = vpack.c.b16 %v1629, %v1627
        %v1874 = vpack.c.b16 %v1632, %v1630
        %v1875 = vpack.c.b16 %v1633, %v1631
        %v1876 = vpack.c.b16 %v1636, %v1634
        %v1877 = vpack.c.b16 %v1637, %v1635
        %v1878 = vpack.c.b16 %v1640, %v1638
        %v1879 = vpack.c.b16 %v1641, %v1639
        %v1880 = vpack.c.b16 %v1644, %v1642
        %v1881 = vpack.c.b16 %v1645, %v1643
        %v1882 = vpack.c.b16 %v1648, %v1646
        %v1883 = vpack.c.b16 %v1649, %v1647
        %v1884 = vpack.c.b16 %v1652, %v1650
        %v1885 = vpack.c.b16 %v1653, %v1651
        %v1886 = vpack.c.b16 %v1656, %v1654
        %v1887 = vpack.c.b16 %v1657, %v1655
        %v1888 = vpack.c.b16 %v1660, %v1658
        %v1889 = vpack.c.b16 %v1661, %v1659
        %v1890 = vpack.c.b16 %v1664, %v1662
        %v1891 = vpack.c.b16 %v1665, %v1663
        %v1892 = vpack.c.b16 %v1668, %v1666
        %v1893 = vpack.c.b16 %v1669, %v1667
        %v1894 = vpack.c.b16 %v1672, %v1670
        %v1895 = vpack.c.b16 %v1673, %v1671
        %v1896 = vpack.c.b16 %v1676, %v1674
        %v1897 = vpack.c.b16 %v1677, %v1675
        %v1898 = vpack.c.b16 %v1680, %v1678
        %v1899 = vpack.c.b16 %v1681, %v1679
        %v1900 = vpack.c.b16 %v1684, %v1682
        %v1901 = vpack.c.b16 %v1685, %v1683
        %v1902 = vpack.c.b16 %v1688, %v1686
        %v1903 = vpack.c.b16 %v1689, %v1687
        %v1904 = vpack.c.b16 %v1692, %v1690
        %v1905 = vpack.c.b16 %v1693, %v1691
        %v1906 = vpack.c.b16 %v1696, %v1694
        %v1907 = vpack.c.b16 %v1697, %v1695
        %v1908 = vpack.c.b16 %v1700, %v1698
        %v1909 = vpack.c.b16 %v1701, %v1699
        %v1910 = vpack.c.b16 %v1704, %v1702
        %v1911 = vpack.c.b16 %v1705, %v1703
        %v1912 = vpack.c.b16 %v1708, %v1706
        %v1913 = vpack.c.b16 %v1709, %v1707
        %v1914 = vpack.c.b16 %v1712, %v1710
        %v1915 = vpack.c.b16 %v1713, %v1711
        %v1916 = vpack.c.b16 %v1716, %v1714
        %v1917 = vpack.c.b16 %v1717, %v1715
        %v1918 = vpack.c.b16 %v1720, %v1718
        %v1919 = vpack.c.b16 %v1721, %v1719
        %v1920 = vpack.c.b16 %v1724, %v1722
        %v1921 = vpack.c.b16 %v1725, %v1723
        %v1922 = vpack.c.b16 %v1728, %v1726
        %v1923 = vpack.c.b16 %v1729, %v1727
        %v1924 = vpack.c.b16 %v1732, %v1730
        %v1925 = vpack.c.b16 %v1733, %v1731
        %v1926 = vpack.c.b16 %v1736, %v1734
        %v1927 = vpack.c.b16 %v1737, %v1735
        %v1928 = vpack.c.b16 %v1740, %v1738
        %v1929 = vpack.c.b16 %v1741, %v1739
        %v1930 = vpack.c.b16 %v1744, %v1742
        %v1931 = vpack.c.b16 %v1745, %v1743
        %v1932 = vpack.c.b16 %v1748, %v1746
        %v1933 = vpack.c.b16 %v1749, %v1747
        %v1934 = vpack.c.b16 %v1752, %v1750
        %v1935 = vpack.c.b16 %v1753, %v1751
        %v1936 = vpack.c.b16 %v1756, %v1754
        %v1937 = vpack.c.b16 %v1757, %v1755
        %v1938 = vpack.c.b16 %v1760, %v1758
        %v1939 = vpack.c.b16 %v1761, %v1759
        %v1940 = vpack.c.b16 %v1764, %v1762
        %v1941 = vpack.c.b16 %v1765, %v1763
        %v1942 = vpack.c.b16 %v1768, %v1766
        %v1943 = vpack.c.b16 %v1769, %v1767
        %v1944 = vpack.c.b16 %v1772, %v1770
        %v1945 = vpack.c.b16 %v1773, %v1771
        %v1946 = vpack.c.b16 %v1776, %v1774
        %v1947 = vpack.c.b16 %v1777, %v1775
        %v1948 = vpack.c.b16 %v1780, %v1778
        %v1949 = vpack.c.b16 %v1781, %v1779
        %v1950 = vpack.c.b16 %v1784, %v1782
        %v1951 = vpack.c.b16 %v1785, %v1783
        %v1952 = vpack.c.b16 %v1788, %v1786
        %v1953 = vpack.c.b16 %v1789, %v1787
        %v1954 = vpack.c.b16 %v1792, %v1790
        %v1955 = vpack.c.b16 %v1793, %v1791
        %v1956 = vpack.c.b16 %v1796, %v1794
        %v1957 = vpack.c.b16 %v1797, %v1795
        %v1958 = vpack.c.b16 %v1800, %v1798
        %v1959 = vpack.c.b16 %v1801, %v1799
        %v1960 = vpack.c.b16 %v1804, %v1802
        %v1961 = vpack.c.b16 %v1805, %v1803
        %v1962 = vpack.c.b16 %v1808, %v1806
        %v1963 = vpack.c.b16 %v1809, %v1807
        %v1964 = vpack.c.b16 %v1812, %v1810
        %v1965 = vpack.c.b16 %v1813, %v1811
        %v1966 = vpack.c.b16 %v1816, %v1814
        %v1967 = vpack.c.b16 %v1817, %v1815
        %v1968 = vpack.c.b16 %v1820, %v1818
        %v1969 = vpack.c.b16 %v1821, %v1819
        %v1970 = vpack.c.b16 %v1824, %v1822
        %v1971 = vpack.c.b16 %v1825, %v1823
        %v1972 = vpack.c.b16 %v1828, %v1826
        %v1973 = vpack.c.b16 %v1829, %v1827
        %v1974 = vpack.c.b16 %v1832, %v1830
        %v1975 = vpack.c.b16 %v1833, %v1831
        %v1976 = vpack.c.b16 %v1836, %v1834
        %v1977 = vpack.c.b16 %v1837, %v1835
        %v1978 = vpack.c.b16 %v1840, %v1838
        %v1979 = vpack.c.b16 %v1841, %v1839
        %v1980 = vpack.c.b16 %v1844, %v1842
        %v1981 = vpack.c.b16 %v1845, %v1843
        %v1982 = vpack.c.b16 %v1848, %v1846
        %v1983 = vpack.c.b16 %v1849, %v1847
        %v1984 = vpack.c.b16 %v1852, %v1850
        %v1985 = vpack.c.b16 %v1853, %v1851
        %v1986 = vpack.c.b16 %v1856, %v1854
        %v1987 = vpack.c.b16 %v1857, %v1855
        %v1988 = vpack.c.b16 %v1860, %v1858
        %v1989 = vpack.c.b16 %v1861, %v1859
        %2118 = vmatprep.subr.bf16.mxu0 %v1877
        %2119 = vmatpush1.bf16.msra.mxu0 %v1876
        %2120 = vmatprep.subr.bf16.mxu0 %v1875
        %2121 = vmatpush1.bf16.msra.mxu0 %v1874
        %2122 = vmatprep.subr.bf16.mxu0 %v1873
        %2123 = vmatpush1.bf16.msra.mxu0 %v1872
        %2124 = vmatprep.subr.bf16.mxu0 %v1871
        %2125 = vmatpush1.bf16.msra.mxu0 %v1870
        %2126 = vmatprep.subr.bf16.mxu0 %v1869
        %2127 = vmatpush1.bf16.msra.mxu0 %v1868
        %2128 = vmatprep.subr.bf16.mxu0 %v1867
        %2129 = vmatpush1.bf16.msra.mxu0 %v1866
        %2130 = vmatprep.subr.bf16.mxu0 %v1865
        %2131 = vmatpush1.bf16.msra.mxu0 %v1864
        %2132 = vmatprep.subr.bf16.mxu0 %v1863
        %2133 = vmatpush1.bf16.msra.mxu0 %v1862
        %2134 = vmatprep.subr.bf16.mxu0 %v1893
        %2135 = vmatpush2.bf16.msra.mxu0 %v1892
        %2136 = vmatprep.subr.bf16.mxu0 %v1891
        %2137 = vmatpush2.bf16.msra.mxu0 %v1890
        %2138 = vmatprep.subr.bf16.mxu0 %v1889
        %2139 = vmatpush2.bf16.msra.mxu0 %v1888
        %2140 = vmatprep.subr.bf16.mxu0 %v1887
        %2141 = vmatpush2.bf16.msra.mxu0 %v1886
        %2142 = vmatprep.subr.bf16.mxu0 %v1885
        %2143 = vmatpush2.bf16.msra.mxu0 %v1884
        %2144 = vmatprep.subr.bf16.mxu0 %v1883
        %2145 = vmatpush2.bf16.msra.mxu0 %v1882
        %2146 = vmatprep.subr.bf16.mxu0 %v1881
        %2147 = vmatpush2.bf16.msra.mxu0 %v1880
        %2148 = vmatprep.subr.bf16.mxu0 %v1879
        %2149 = vmatpush2.bf16.msra.mxu0 %v1878
        %2150 = vmatprep.mubr.bf16.mxu0 %v1331
        %2151 = vmatmul.mubr.bf16.gmra.mxu0 %v1330
        %v2152 = vpop.f32.mrf.mxu0
        %v2153 = vadd.f32 %v1471, %v2152
        %v2154 = vpop.f32.mrf.mxu0
        %v2155 = vadd.f32 %v1475, %v2154
        %v2156 = vpop.f32.mrf.mxu0
        %v2157 = vpop.f32.mrf.mxu0
        %2158 = vdwg.mxu0
        %2159 = vmatprep.subr.bf16.mxu0 %v1909
        %2160 = vmatpush1.bf16.msra.mxu0 %v1908
        %2161 = vmatprep.subr.bf16.mxu0 %v1907
        %2162 = vmatpush1.bf16.msra.mxu0 %v1906
        %2163 = vmatprep.subr.bf16.mxu0 %v1905
        %2164 = vmatpush1.bf16.msra.mxu0 %v1904
        %2165 = vmatprep.subr.bf16.mxu0 %v1903
        %2166 = vmatpush1.bf16.msra.mxu0 %v1902
        %2167 = vmatprep.subr.bf16.mxu0 %v1901
        %2168 = vmatpush1.bf16.msra.mxu0 %v1900
        %2169 = vmatprep.subr.bf16.mxu0 %v1899
        %2170 = vmatpush1.bf16.msra.mxu0 %v1898
        %2171 = vmatprep.subr.bf16.mxu0 %v1897
        %2172 = vmatpush1.bf16.msra.mxu0 %v1896
        %2173 = vmatprep.subr.bf16.mxu0 %v1895
        %2174 = vmatpush1.bf16.msra.mxu0 %v1894
        %2175 = vmatprep.subr.bf16.mxu0 %v1925
        %2176 = vmatpush2.bf16.msra.mxu0 %v1924
        %2177 = vmatprep.subr.bf16.mxu0 %v1923
        %2178 = vmatpush2.bf16.msra.mxu0 %v1922
        %2179 = vmatprep.subr.bf16.mxu0 %v1921
        %2180 = vmatpush2.bf16.msra.mxu0 %v1920
        %2181 = vmatprep.subr.bf16.mxu0 %v1919
        %2182 = vmatpush2.bf16.msra.mxu0 %v1918
        %2183 = vmatprep.subr.bf16.mxu0 %v1917
        %2184 = vmatpush2.bf16.msra.mxu0 %v1916
        %2185 = vmatprep.subr.bf16.mxu0 %v1915
        %2186 = vmatpush2.bf16.msra.mxu0 %v1914
        %2187 = vmatprep.subr.bf16.mxu0 %v1913
        %2188 = vmatpush2.bf16.msra.mxu0 %v1912
        %2189 = vmatprep.subr.bf16.mxu0 %v1911
        %2190 = vmatpush2.bf16.msra.mxu0 %v1910
        %2191 = vmatprep.mubr.bf16.mxu0 %v1333
        %2192 = vmatmul.mubr.bf16.gmra.mxu0 %v1332
        %v2193 = vpop.f32.mrf.mxu0
        %v2194 = vadd.f32 %v2153, %v2193
        %v2195 = vpop.f32.mrf.mxu0
        %v2196 = vadd.f32 %v2155, %v2195
        %v2197 = vpop.f32.mrf.mxu0
        %v2198 = vpop.f32.mrf.mxu0
        %2199 = vdwg.mxu0
        %2200 = vmatprep.subr.bf16.mxu0 %v1941
        %2201 = vmatpush1.bf16.msra.mxu0 %v1940
        %2202 = vmatprep.subr.bf16.mxu0 %v1939
        %2203 = vmatpush1.bf16.msra.mxu0 %v1938
        %2204 = vmatprep.subr.bf16.mxu0 %v1937
        %2205 = vmatpush1.bf16.msra.mxu0 %v1936
        %2206 = vmatprep.subr.bf16.mxu0 %v1935
        %2207 = vmatpush1.bf16.msra.mxu0 %v1934
        %2208 = vmatprep.subr.bf16.mxu0 %v1933
        %2209 = vmatpush1.bf16.msra.mxu0 %v1932
        %2210 = vmatprep.subr.bf16.mxu0 %v1931
        %2211 = vmatpush1.bf16.msra.mxu0 %v1930
        %2212 = vmatprep.subr.bf16.mxu0 %v1929
        %2213 = vmatpush1.bf16.msra.mxu0 %v1928
        %2214 = vmatprep.subr.bf16.mxu0 %v1927
        %2215 = vmatpush1.bf16.msra.mxu0 %v1926
        %2216 = vmatprep.subr.bf16.mxu0 %v1957
        %2217 = vmatpush2.bf16.msra.mxu0 %v1956
        %2218 = vmatprep.subr.bf16.mxu0 %v1955
        %2219 = vmatpush2.bf16.msra.mxu0 %v1954
        %2220 = vmatprep.subr.bf16.mxu0 %v1953
        %2221 = vmatpush2.bf16.msra.mxu0 %v1952
        %2222 = vmatprep.subr.bf16.mxu0 %v1951
        %2223 = vmatpush2.bf16.msra.mxu0 %v1950
        %2224 = vmatprep.subr.bf16.mxu0 %v1949
        %2225 = vmatpush2.bf16.msra.mxu0 %v1948
        %2226 = vmatprep.subr.bf16.mxu0 %v1947
        %2227 = vmatpush2.bf16.msra.mxu0 %v1946
        %2228 = vmatprep.subr.bf16.mxu0 %v1945
        %2229 = vmatpush2.bf16.msra.mxu0 %v1944
        %2230 = vmatprep.subr.bf16.mxu0 %v1943
        %2231 = vmatpush2.bf16.msra.mxu0 %v1942
        %2232 = vmatprep.mubr.bf16.mxu0 %v1335
        %2233 = vmatmul.mubr.bf16.gmra.mxu0 %v1334
        %v2234 = vpop.f32.mrf.mxu0
        %v2235 = vadd.f32 %v2194, %v2234
        %v2236 = vpop.f32.mrf.mxu0
        %v2237 = vadd.f32 %v2196, %v2236
        %v2238 = vpop.f32.mrf.mxu0
        %v2239 = vpop.f32.mrf.mxu0
        %2240 = vdwg.mxu0
        %2241 = vmatprep.subr.bf16.mxu0 %v1973
        %2242 = vmatpush1.bf16.msra.mxu0 %v1972
        %2243 = vmatprep.subr.bf16.mxu0 %v1971
        %2244 = vmatpush1.bf16.msra.mxu0 %v1970
        %2245 = vmatprep.subr.bf16.mxu0 %v1969
        %2246 = vmatpush1.bf16.msra.mxu0 %v1968
        %2247 = vmatprep.subr.bf16.mxu0 %v1967
        %2248 = vmatpush1.bf16.msra.mxu0 %v1966
        %2249 = vmatprep.subr.bf16.mxu0 %v1965
        %2250 = vmatpush1.bf16.msra.mxu0 %v1964
        %2251 = vmatprep.subr.bf16.mxu0 %v1963
        %2252 = vmatpush1.bf16.msra.mxu0 %v1962
        %2253 = vmatprep.subr.bf16.mxu0 %v1961
        %2254 = vmatpush1.bf16.msra.mxu0 %v1960
        %2255 = vmatprep.subr.bf16.mxu0 %v1959
        %2256 = vmatpush1.bf16.msra.mxu0 %v1958
        %2257 = vmatprep.subr.bf16.mxu0 %v1989
        %2258 = vmatpush2.bf16.msra.mxu0 %v1988
        %2259 = vmatprep.subr.bf16.mxu0 %v1987
        %2260 = vmatpush2.bf16.msra.mxu0 %v1986
        %2261 = vmatprep.subr.bf16.mxu0 %v1985
        %2262 = vmatpush2.bf16.msra.mxu0 %v1984
        %2263 = vmatprep.subr.bf16.mxu0 %v1983
        %2264 = vmatpush2.bf16.msra.mxu0 %v1982
        %2265 = vmatprep.subr.bf16.mxu0 %v1981
        %2266 = vmatpush2.bf16.msra.mxu0 %v1980
        %2267 = vmatprep.subr.bf16.mxu0 %v1979
        %2268 = vmatpush2.bf16.msra.mxu0 %v1978
        %2269 = vmatprep.subr.bf16.mxu0 %v1977
        %2270 = vmatpush2.bf16.msra.mxu0 %v1976
        %2271 = vmatprep.subr.bf16.mxu0 %v1975
        %2272 = vmatpush2.bf16.msra.mxu0 %v1974
        %2273 = vmatprep.mubr.bf16.mxu0 %v1337
        %2274 = vmatmul.mubr.bf16.gmra.mxu0 %v1336
        %v2275 = vpop.f32.mrf.mxu0
        %v2276 = vadd.f32 %v2235, %v2275
        %v2277 = vpop.f32.mrf.mxu0
        %v2278 = vadd.f32 %v2237, %v2277
        %v2279 = vpop.f32.mrf.mxu0
        %v2280 = vpop.f32.mrf.mxu0
        %2281 = vdwg.mxu0
        %v2282 = vadd.f32 %v2276, %v292
        %v2283 = vadd.f32 %v2278, %v293
        %2284 = vst [vmem:[%s286] sm:$0xff] %v2282
        %2285 = vst [vmem:[%s286 + $0x8] sm:$0xff] %v2283
        %s2286 = sand.u32 %s182, 1
        %s2287 = scalar_lea.sflag [#allocation4], %s2286
        %s2288 = sand.u32 %s182, 1
        %s2289 = smul.addr %s2288, 16
        %s2290 = scalar_lea.vmem [#allocation5], %s2289
        // Predicated region
        $region53: #{_lambda_.7} parent=47 // pred_check
          %p2291 = pneg %p192
        $region54: #{_lambda_.7} parent=47 // pred_check_branch
          %2293 = sbr.rel (%p2291) target = $region56
        $region55: #{_lambda_.7} parent=47 // pred_region
          %s2295 = ssub.s32 256, 256
          %2296 = vsyncadd %s2287, %s2295
          %s2297 = smul.addr %s22, 2
          %s2298 = smul.addr %s2297, 128
          %s2299 = scalar_lea.hbm %s7, %s2298
          %s2301 = sshll.u32 %s2290, 4
          %s2302 = int_to_ptr.vmem [resolvable:$true] %s2301
          %2304 = dma.vmem_to_hbm [thread:$0]  %s2302, 256, %s2299, %s2287
        $region56: #{_lambda_.7} parent=47 // pred_fallthru
          _
      $region48: #{_lambda_.7} parent=5 // pred_fallthru
        _
      %p2305 = scmp.le.s32.totalorder 2, %s17
      // Predicated region
      $region57: #{_lambda_.7} parent=5 // pred_check
        %p2306 = pneg %p2305
      $region58: #{_lambda_.7} parent=5 // pred_check_branch
        %2308 = sbr.rel (%p2306) target = $region60
      $region59: #{_lambda_.7} parent=5 // pred_region
        %s2309 = ssub.s32 %s17, 2
        // Predicated region
        $region61: #{_lambda_.7} parent=59 // pred_check
          %p2310 = pneg %p198
        $region62: #{_lambda_.7} parent=59 // pred_check_branch
          %2312 = sbr.rel (%p2310) target = $region64
        $region63: #{_lambda_.7} parent=59 // pred_region
          %s2313 = sand.u32 %s183, 1
          %s2314 = scalar_lea.sflag [#allocation4], %s2313
          %s2315 = sand.u32 %s183, 1
          %s2316 = smul.addr %s2315, 16
          %s2317 = scalar_lea.vmem [#allocation5], %s2316
          %2318 = dma.done %s2314, 256
        $region64: #{_lambda_.7} parent=59 // pred_fallthru
          _
      $region60: #{_lambda_.7} parent=5 // pred_fallthru
        _
    $region6: #{_lambda_.7} parent=1 // loop_footer
      %s21 = sadd.s32 1, %s17
    $region7: #{_lambda_.7} parent=1 // loop_footer_branch
      %16 = sbr.rel target = $region3
    $region8: #{_lambda_.7} parent=1 // loop_exit
      _
    %2319 = vsyncpa [#allocation3], 1
    %s2320 = scalar_lea.sflag [#allocation3], 1
    %2321 = vsyncpa %s2320, 1
    %2322 = vsyncpa [#allocation4], 1
    %s2323 = scalar_lea.sflag [#allocation4], 1
    %2324 = vsyncpa %s2323, 1

</llo_original>
